<compile_context>
chip_gen: v7x
topology: tpu7x:2x2x1
jax: 0.10.0
libtpu: 0.0.40
codegen_flags: <defaults>
</compile_context>

<pallas_src>
import numpy as np

import jax
import jax.numpy as jnp
from jax.experimental import pallas as pl
from jax.experimental.pallas import tpu as pltpu

PAD = 8  # zero-halo rows in the VMEM scratch (>= 7 needed for the 15-tap convs)


# --------------------------- in-kernel helpers -----------------------------

def _fill_halo(xpad, img, H, WC):
    zero = jnp.zeros((PAD, WC), jnp.float32)
    xpad[0:PAD, :] = zero
    xpad[PAD + H:2 * PAD + H, :] = zero
    xpad[PAD:PAD + H, :] = img


# ------------------------------ kernel bodies ------------------------------

def _make_offsets_kernel(H, W, C):
    WC = W * C

    def kernel(x_ref, r1, b1, c2, b2, r3, b3, roff, boff, off_ref, xpad):
        x = x_ref[0]                                            # (H, W*C)
        _fill_halo(xpad, x, H, WC)

        # offset1: (1,15) depthwise conv -> one banded MXU matmul (no halo).
        d1 = jnp.dot(x, r1[...], preferred_element_type=jnp.float32)
        o1 = jax.nn.sigmoid(d1 + b1[...]) * x

        # offset2: (15,1) depthwise conv -> 15 row-shifted FMAs, 2 accumulators,
        # pre-tiled coefficient slabs (no broadcast / no lane rolls needed).
        acc_e = jnp.zeros((H, WC), jnp.float32)
        acc_o = jnp.zeros((H, WC), jnp.float32)
        for kh in range(15):
            r0 = PAD - 7 + kh
            term = xpad[r0:r0 + H, :] * c2[kh]
            if kh % 2 == 0:
                acc_e = acc_e + term
            else:
                acc_o = acc_o + term
        o2 = jax.nn.sigmoid(acc_e + acc_o + b2[...]) * x

        # offset3: 3x3 depthwise conv -> 3 accumulating banded matmuls.
        d3 = jnp.zeros((H, WC), jnp.float32)
        for kh in range(3):
            r0 = PAD - 1 + kh
            d3 = d3 + jnp.dot(xpad[r0:r0 + H, :], r3[kh],
                              preferred_element_type=jnp.float32)
        o3 = jax.nn.sigmoid(d3 + b3[...]) * x

        # balance: 1x1 conv C -> 18 (padded to 24 lanes per pixel), BN folded,
        # all three output lane-groups produced by a single (128 x 384) matmul.
        off_sum = o1 + o2 + o3
        off_ref[0] = jnp.dot(off_sum, roff[...],
                             preferred_element_type=jnp.float32) + boff[...]

    return kernel


def _make_tail_kernel(H, W, C):
    WC = W * C

    def kernel(x_ref, s_ref, rdef, bdcb, rctx, bctx, rap, rns, bns,
               rfd, rfn, bfin, out_ref, xpad):
        x = x_ref[0]                                            # (H, W*C)
        s = s_ref[0]                                            # (H, W*9*C)

        # DADCB tail: deform depthwise tap-reduce + 1x1 balance fused into one
        # (H, 9*W*C) @ (9*W*C, W*C) MXU matmul, then gate with x.
        x_dcb = (jnp.dot(s, rdef[...], preferred_element_type=jnp.float32)
                 + bdcb[...]) * x

        # NSB: 15x15 context conv as 15 accumulating banded matmuls.
        _fill_halo(xpad, x, H, WC)
        acc_a = jnp.zeros((H, WC), jnp.float32)
        acc_b = jnp.zeros((H, WC), jnp.float32)
        for kh in range(15):
            r0 = PAD - 7 + kh
            term = jnp.dot(xpad[r0:r0 + H, :], rctx[kh],
                           preferred_element_type=jnp.float32)
            if kh % 2 == 0:
                acc_a = acc_a + term
            else:
                acc_b = acc_b + term
        x_con = acc_a + acc_b + bctx[...]

        # AvgPool2d(3,1,1) (count_include_pad=True) on x_con via the same
        # banded-matmul trick; halo rows of the scratch are still zero.
        xpad[PAD:PAD + H, :] = x_con
        x_ap = jnp.zeros((H, WC), jnp.float32)
        for kh in range(3):
            r0 = PAD - 1 + kh
            x_ap = x_ap + jnp.dot(xpad[r0:r0 + H, :], rap[kh],
                                  preferred_element_type=jnp.float32)

        wgt = jax.nn.sigmoid(jnp.dot(x_con - x_ap, rns[...],
                                     preferred_element_type=jnp.float32)
                             + bns[...])
        x_ns = wgt * x

        # final balance over concat([x_dcb, x_ns]) folded into two C->C mixes.
        out_ref[0] = (jnp.dot(x_dcb, rfd[...], preferred_element_type=jnp.float32)
                      + jnp.dot(x_ns, rfn[...], preferred_element_type=jnp.float32)
                      + bfin[...])

    return kernel


# ----------------------------- pallas wrappers -----------------------------

def _param_spec(arr):
    zeros = (0,) * arr.ndim
    return pl.BlockSpec(arr.shape, lambda n, z=zeros: z)


def _direction_offsets(x_lane, p, H, W, C, G):
    N = x_lane.shape[0]
    WC = W * C
    args = (p["r1"], p["b1"], p["c2"], p["b2"], p["r3"], p["b3"],
            p["roff"], p["boff"])
    return pl.pallas_call(
        _make_offsets_kernel(H, W, C),
        out_shape=jax.ShapeDtypeStruct((N, H, W * G), jnp.float32),
        grid=(N,),
        in_specs=[pl.BlockSpec((1, H, WC), lambda n: (n, 0, 0))]
        + [_param_spec(a) for a in args],
        out_specs=pl.BlockSpec((1, H, W * G), lambda n: (n, 0, 0)),
        scratch_shapes=[pltpu.VMEM((H + 2 * PAD, WC), jnp.float32)],
        compiler_params=pltpu.CompilerParams(
            dimension_semantics=("parallel",),
            vmem_limit_bytes=32 * 1024 * 1024),
    )(x_lane, *args)


def _fused_tail(x_lane, samp_lane, p, H, W, C, K=9):
    N = x_lane.shape[0]
    WC = W * C
    args = (p["rdef"], p["bdcb"], p["rctx"], p["bctx"], p["rap"],
            p["rns"], p["bns"], p["rfd"], p["rfn"], p["bfin"])
    return pl.pallas_call(
        _make_tail_kernel(H, W, C),
        out_shape=jax.ShapeDtypeStruct((N, H, WC), jnp.float32),
        grid=(N,),
        in_specs=[pl.BlockSpec((1, H, WC), lambda n: (n, 0, 0)),
                  pl.BlockSpec((1, H, W * K * C), lambda n: (n, 0, 0))]
        + [_param_spec(a) for a in args],
        out_specs=pl.BlockSpec((1, H, WC), lambda n: (n, 0, 0)),
        scratch_shapes=[pltpu.VMEM((H + 2 * PAD, WC), jnp.float32)],
        compiler_params=pltpu.CompilerParams(
            dimension_semantics=("parallel",),
            vmem_limit_bytes=32 * 1024 * 1024),
    )(x_lane, samp_lane, *args)


# ------------- deformable conv bilinear sampling (gather-free) -------------

def _deform_bilinear_matmul(x_nhwc, dy, dx, KH=3, KW=3, pad=1, dil=1):
    """x: (N,H,W,C); dy, dx: (N,H,W,K).  Returns samples (N, H, W*K*C).

    The bilinear kernel is separable: weight(h') = relu(1 - |py - h'|), likewise
    for w'; zero outside the image reproduces torchvision's zero padding AND its
    out-of-range ((py<=-1)|(py>=H)) behaviour exactly.  The sample is then a
    single batched (N, H*W*K, H*W) x (N, H*W, C) MXU matmul -- no gather."""
    N, H, W, C = x_nhwc.shape
    K = KH * KW
    kh = (jnp.arange(K) // KW).astype(jnp.float32)
    kw = (jnp.arange(K) % KW).astype(jnp.float32)
    hs = jnp.arange(H, dtype=jnp.float32)
    ws = jnp.arange(W, dtype=jnp.float32)
    py = hs[None, :, None, None] - pad + kh * dil + dy          # (N,H,W,K)
    px = ws[None, None, :, None] - pad + kw * dil + dx
    wy = jnp.maximum(0.0, 1.0 - jnp.abs(py[..., None] - hs))    # (N,H,W,K,H)
    wx = jnp.maximum(0.0, 1.0 - jnp.abs(px[..., None] - ws))    # (N,H,W,K,W)
    m = (wy[..., :, None] * wx[..., None, :]).reshape(N, H * W * K, H * W)
    samp = jnp.einsum('npq,nqc->npc', m, x_nhwc.reshape(N, H * W, C),
                      preferred_element_type=jnp.float32)       # (N, H*W*K, C)
    return samp.reshape(N, H, W * K * C)                        # k-within-w lanes


# -------------------- parameter init & matrix packing ----------------------

def _init_conv_bn(key, cout, cin_per_group, kh, kw, eps=1e-5):
    """Synthetic Conv2d(+bias) + BatchNorm2d (eval), folded to scale/bias."""
    ks = jax.random.split(key, 6)
    w = jax.random.normal(ks[0], (cout, cin_per_group, kh, kw), jnp.float32) * 0.1
    b = jax.random.normal(ks[1], (cout,), jnp.float32) * 0.1
    gamma = jax.random.uniform(ks[2], (cout,), jnp.float32, minval=0.8, maxval=1.2)
    beta = jax.random.normal(ks[3], (cout,), jnp.float32) * 0.1
    mean = jax.random.normal(ks[4], (cout,), jnp.float32) * 0.1
    var = jax.random.uniform(ks[5], (cout,), jnp.float32, minval=0.5, maxval=1.5)
    scale = gamma / jnp.sqrt(var + eps)
    bias = beta + (b - mean) * scale
    return w, scale, bias


def _dw_band_mats(wt, scale, W, C):
    """Depthwise weights (C,KH,KW) -> (KH, W*C, W*C) banded matrices; BN scale
    and the W zero-padding mask are baked in (H handled by the zero halo)."""
    wt = np.asarray(wt, np.float32) * np.asarray(scale, np.float32)[:, None, None]
    _, KH, KW = wt.shape
    pw = (KW - 1) // 2
    mats = np.zeros((KH, W * C, W * C), np.float32)
    for kh in range(KH):
        for kw in range(KW):
            dwv = kw - pw
            for wo in range(W):
                wi = wo + dwv
                if 0 <= wi < W:
                    for c in range(C):
                        mats[kh, wi * C + c, wo * C + c] = wt[c, kh, kw]
    return jnp.asarray(mats)


def _dw_row_coefs(wt, scale, H, W, C):
    """(C,KH,1) depthwise weights -> pre-tiled (KH, H, W*C) coefficient slabs."""
    wt = np.asarray(wt, np.float32)[:, :, 0] * np.asarray(scale, np.float32)[:, None]
    KH = wt.shape[1]
    row = np.tile(wt.T, (1, W))                                  # (KH, W*C)
    return jnp.asarray(np.broadcast_to(row[:, None, :], (KH, H, W * C)).copy())


def _mix_block_mat(wmat, scale, W, C_in, G_out, col_of_j=None):
    """1x1 conv (C_in -> C_out) as a (W*C_in, W*G_out) block-diagonal matrix."""
    wmat = np.asarray(wmat, np.float32) * np.asarray(scale, np.float32)[None, :]
    C_out = wmat.shape[1]
    if col_of_j is None:
        col_of_j = list(range(C_out))
    R = np.zeros((W * C_in, W * G_out), np.float32)
    for w in range(W):
        for ci in range(C_in):
            for j in range(C_out):
                R[w * C_in + ci, w * G_out + col_of_j[j]] = wmat[ci, j]
    return jnp.asarray(R)


def _deform_balance_mat(w_def, w_bal, scale_bal, W, C, K=9):
    """Fuse deform depthwise tap weights (C,K) with the 1x1 DCB balance
    (C_in x C_out, BN scale folded) into one (W*K*C, W*C) matrix."""
    wb = np.asarray(w_bal, np.float32) * np.asarray(scale_bal, np.float32)[None, :]
    wd = np.asarray(w_def, np.float32)
    R = np.zeros((W * K * C, W * C), np.float32)
    for w in range(W):
        for k in range(K):
            for ci in range(C):
                for co in range(C):
                    R[w * K * C + k * C + ci, w * C + co] = wd[ci, k] * wb[ci, co]
    return jnp.asarray(R)


def _bias_rows(bias, H, W, G, col_of_j=None):
    """Per-channel bias -> pre-tiled (H, W*G) bias slab (no in-kernel broadcast)."""
    bias = np.asarray(bias, np.float32)
    b = np.zeros((G,), np.float32)
    if col_of_j is None:
        col_of_j = list(range(bias.shape[0]))
    for j, col in enumerate(col_of_j):
        b[col] = bias[j]
    row = np.tile(b, W)[None, :]
    return jnp.asarray(np.broadcast_to(row, (H, W * G)).copy())


def init_params(key, H, W, C, G=24):
    keys = jax.random.split(key, 9)
    p = {}
    # ---- DirectionOffsets ----
    w, s, b = _init_conv_bn(keys[0], C, 1, 1, 15)                # (1,15) depthwise
    p["r1"] = _dw_band_mats(w[:, 0], s, W, C)[0]
    p["b1"] = _bias_rows(b, H, W, C)
    w, s, b = _init_conv_bn(keys[1], C, 1, 15, 1)                # (15,1) depthwise
    p["c2"] = _dw_row_coefs(w[:, 0], s, H, W, C)
    p["b2"] = _bias_rows(b, H, W, C)
    w, s, b = _init_conv_bn(keys[2], C, 1, 3, 3)                 # 3x3 depthwise
    p["r3"] = _dw_band_mats(w[:, 0], s, W, C)
    p["b3"] = _bias_rows(b, H, W, C)
    w, s, b = _init_conv_bn(keys[3], 18, C, 1, 1)                # 1x1 -> 18 offsets
    col = [0] * 18
    for k in range(9):
        col[2 * k] = k            # dy_k at lane-group column k
        col[2 * k + 1] = 12 + k   # dx_k at lane-group column 12+k
    p["roff"] = _mix_block_mat(np.asarray(w)[:, :, 0, 0].T, s, W, C, G, col)
    p["boff"] = _bias_rows(b, H, W, G, col)
    # ---- DADCB: deform depthwise (bias=False) + 1x1 balance, fused ----
    w_def = jax.random.normal(keys[4], (C, 1, 3, 3), jnp.float32) * 0.1
    w, s, b = _init_conv_bn(keys[5], C, C, 1, 1)
    p["rdef"] = _deform_balance_mat(np.asarray(w_def)[:, 0].reshape(C, 9),
                                    np.asarray(w)[:, :, 0, 0].T, s, W, C)
    p["bdcb"] = _bias_rows(b, H, W, C)
    # ---- NSB ----
    w, s, b = _init_conv_bn(keys[6], C, 1, 15, 15)               # 15x15 depthwise
    p["rctx"] = _dw_band_mats(w[:, 0], s, W, C)
    p["bctx"] = _bias_rows(b, H, W, C)
    p["rap"] = _dw_band_mats(np.full((C, 3, 3), 1.0 / 9.0, np.float32),
                             np.ones((C,), np.float32), W, C)    # AvgPool(3,1,1)
    w, s, b = _init_conv_bn(keys[7], C, C, 1, 1)
    p["rns"] = _mix_block_mat(np.asarray(w)[:, :, 0, 0].T, s, W, C, C)
    p["bns"] = _bias_rows(b, H, W, C)
    # ---- EdgeEnhancement final balance (2C -> C), split over the concat ----
    w, s, b = _init_conv_bn(keys[8], C, 2 * C, 1, 1)
    wmat = np.asarray(w)[:, :, 0, 0].T                           # (2C, C)
    p["rfd"] = _mix_block_mat(wmat[:C], s, W, C, C)
    p["rfn"] = _mix_block_mat(wmat[C:], s, W, C, C)
    p["bfin"] = _bias_rows(b, H, W, C)
    return p


# ------------------------------- forward -----------------------------------

def edge_enhancement_forward(x_nchw, p):
    N, C, H, W = x_nchw.shape
    WC = W * C
    G, K = 24, 9
    assert WC % 128 == 0 and PAD >= 7, "lane-dense packing requires W*C % 128 == 0"
    x_nhwc = jnp.transpose(x_nchw, (0, 2, 3, 1)).astype(jnp.float32)   # NHWC
    x_lane = x_nhwc.reshape(N, H, WC)                                  # lane-dense

    # kernel 1: DirectionOffsets (x read once; dy/dx in contiguous lane groups)
    off = _direction_offsets(x_lane, p, H, W, C, G).reshape(N, H, W, G)
    dy = off[..., 0:K]
    dx = off[..., 12:12 + K]

    # TODO(synk): the deformable conv's data-dependent bilinear sampling has no
    # clean Pallas-TPU equivalent at this size; it is expressed gather-free as a
    # dense separable bilinear-weight matrix contracted on the MXU in plain JAX.
    samp_lane = _deform_bilinear_matmul(x_nhwc, dy, dx)                # (N,H,W*9*C)

    # kernel 2: deform reduce + DCB balance + NSB + final balance
    out_lane = _fused_tail(x_lane, samp_lane, p, H, W, C, K)           # (N,H,W*C)
    return jnp.transpose(out_lane.reshape(N, H, W, C), (0, 3, 1, 2))   # NCHW


# --------------------------------- main -------------------------------------

if __name__ == "__main__":
    key = jax.random.PRNGKey(0)
    k_x, k_p = jax.random.split(key)
    N, C, H, W = 2, 8, 16, 16        # W*C = 128 -> one full lane row per image row
    x = jax.random.normal(k_x, (N, C, H, W), jnp.float32)
    params = init_params(k_p, H, W, C)
    fwd = jax.jit(edge_enhancement_forward)
    out = jax.block_until_ready(fwd(x, params))
    assert out.shape == (N, C, H, W), out.shape
    assert bool(jnp.all(jnp.isfinite(out)))
    print("KERNEL_OK")
</pallas_src>

<mosaic_0001>
module attributes {stable_mosaic.version = 11 : i64} {
  func.func @kernel(%arg0: i32, %arg1: memref<1x16x128xf32, #tpu.memory_space<vmem>>, %arg2: memref<128x128xf32, #tpu.memory_space<vmem>>, %arg3: memref<16x128xf32, #tpu.memory_space<vmem>>, %arg4: memref<15x16x128xf32, #tpu.memory_space<vmem>>, %arg5: memref<16x128xf32, #tpu.memory_space<vmem>>, %arg6: memref<3x128x128xf32, #tpu.memory_space<vmem>>, %arg7: memref<16x128xf32, #tpu.memory_space<vmem>>, %arg8: memref<128x384xf32, #tpu.memory_space<vmem>>, %arg9: memref<16x384xf32, #tpu.memory_space<vmem>>, %arg10: memref<1x16x384xf32, #tpu.memory_space<vmem>>, %arg11: memref<32x128xf32, #tpu.memory_space<vmem>>) attributes {dimension_semantics = [#tpu.dimension_semantics<parallel>], iteration_bounds = array<i64: 2>, scalar_prefetch = 0 : i64, scratch_operands = 1 : i64, tpu.core_type = #tpu.core_type<tc>, window_params = [{transform_indices = @transform_0, window_bounds = array<i64: 1, 16, 128>}, {pipeline_mode = #tpu.pipeline_mode<synchronous>, transform_indices = @transform_1, window_bounds = array<i64: 128, 128>}, {pipeline_mode = #tpu.pipeline_mode<synchronous>, transform_indices = @transform_2, window_bounds = array<i64: 16, 128>}, {pipeline_mode = #tpu.pipeline_mode<synchronous>, transform_indices = @transform_3, window_bounds = array<i64: 15, 16, 128>}, {pipeline_mode = #tpu.pipeline_mode<synchronous>, transform_indices = @transform_4, window_bounds = array<i64: 16, 128>}, {pipeline_mode = #tpu.pipeline_mode<synchronous>, transform_indices = @transform_5, window_bounds = array<i64: 3, 128, 128>}, {pipeline_mode = #tpu.pipeline_mode<synchronous>, transform_indices = @transform_6, window_bounds = array<i64: 16, 128>}, {pipeline_mode = #tpu.pipeline_mode<synchronous>, transform_indices = @transform_7, window_bounds = array<i64: 128, 384>}, {pipeline_mode = #tpu.pipeline_mode<synchronous>, transform_indices = @transform_8, window_bounds = array<i64: 16, 384>}, {transform_indices = @transform_9, window_bounds = array<i64: 1, 16, 384>}]} {
    %c0 = arith.constant 0 : index
    %c0_0 = arith.constant 0 : index
    %c0_1 = arith.constant 0 : index
    %0 = vector.load %arg1[%c0, %c0_0, %c0_1] : memref<1x16x128xf32, #tpu.memory_space<vmem>>, vector<1x16x128xf32>
    %1 = vector.shape_cast %0 : vector<1x16x128xf32> to vector<16x128xf32>
    %cst = arith.constant 0.000000e+00 : f32
    %2 = vector.broadcast %cst : f32 to vector<8x128xf32>
    %c0_2 = arith.constant 0 : index
    %c0_3 = arith.constant 0 : index
    %3 = vector.load %arg11[%c0_2, %c0_3] : memref<32x128xf32, #tpu.memory_space<vmem>>, vector<8x128xf32>
    tpu.vector_store %arg11[%c0_2, %c0_3], %2 {strides = array<i32>} : memref<32x128xf32, #tpu.memory_space<vmem>>, vector<8x128xf32>,
    %c24 = arith.constant 24 : index
    %c0_4 = arith.constant 0 : index
    %4 = vector.load %arg11[%c24, %c0_4] : memref<32x128xf32, #tpu.memory_space<vmem>>, vector<8x128xf32>
    tpu.vector_store %arg11[%c24, %c0_4], %2 {strides = array<i32>} : memref<32x128xf32, #tpu.memory_space<vmem>>, vector<8x128xf32>,
    %c8 = arith.constant 8 : index
    %c0_5 = arith.constant 0 : index
    %5 = vector.load %arg11[%c8, %c0_5] : memref<32x128xf32, #tpu.memory_space<vmem>>, vector<16x128xf32>
    tpu.vector_store %arg11[%c8, %c0_5], %1 {strides = array<i32>} : memref<32x128xf32, #tpu.memory_space<vmem>>, vector<16x128xf32>,
    %c0_6 = arith.constant 0 : index
    %c0_7 = arith.constant 0 : index
    %6 = vector.load %arg2[%c0_6, %c0_7] : memref<128x128xf32, #tpu.memory_space<vmem>>, vector<128x128xf32>
    %cst_8 = arith.constant dense<0.000000e+00> : vector<16x128xf32>
    %7 = tpu.matmul %1, %6, %cst_8 {dimension_numbers = #tpu.dot_dimension_numbers<[1], [0], [0], [1], [0, 0, 1, 1], [], []>} : vector<16x128xf32>, vector<128x128xf32>, vector<16x128xf32> -> vector<16x128xf32>
    %c0_9 = arith.constant 0 : index
    %c0_10 = arith.constant 0 : index
    %8 = vector.load %arg3[%c0_9, %c0_10] : memref<16x128xf32, #tpu.memory_space<vmem>>, vector<16x128xf32>
    %9 = arith.addf %7, %8 : vector<16x128xf32>
    %10 = arith.negf %9 : vector<16x128xf32>
    %11 = math.exp %10 : vector<16x128xf32>
    %cst_11 = arith.constant 1.000000e+00 : f32
    %12 = vector.broadcast %cst_11 : f32 to vector<16x128xf32>
    %13 = arith.addf %12, %11 : vector<16x128xf32>
    %14 = arith.divf %12, %13 : vector<16x128xf32>
    %15 = arith.mulf %14, %1 : vector<16x128xf32>
    %cst_12 = arith.constant 0.000000e+00 : f32
    %16 = vector.broadcast %cst_12 : f32 to vector<16x128xf32>
    %cst_13 = arith.constant 0.000000e+00 : f32
    %17 = vector.broadcast %cst_13 : f32 to vector<16x128xf32>
    %c1 = arith.constant 1 : index
    %c0_14 = arith.constant 0 : index
    %18 = vector.load %arg11[%c1, %c0_14] : memref<32x128xf32, #tpu.memory_space<vmem>>, vector<16x128xf32>
    %c0_15 = arith.constant 0 : index
    %c0_16 = arith.constant 0 : index
    %c0_17 = arith.constant 0 : index
    %19 = vector.load %arg4[%c0_15, %c0_16, %c0_17] : memref<15x16x128xf32, #tpu.memory_space<vmem>>, vector<1x16x128xf32>
    %20 = vector.shape_cast %19 : vector<1x16x128xf32> to vector<16x128xf32>
    %21 = arith.mulf %18, %20 : vector<16x128xf32>
    %22 = arith.addf %16, %21 : vector<16x128xf32>
    %c2 = arith.constant 2 : index
    %c0_18 = arith.constant 0 : index
    %23 = vector.load %arg11[%c2, %c0_18] : memref<32x128xf32, #tpu.memory_space<vmem>>, vector<16x128xf32>
    %c1_19 = arith.constant 1 : index
    %c0_20 = arith.constant 0 : index
    %c0_21 = arith.constant 0 : index
    %24 = vector.load %arg4[%c1_19, %c0_20, %c0_21] : memref<15x16x128xf32, #tpu.memory_space<vmem>>, vector<1x16x128xf32>
    %25 = vector.shape_cast %24 : vector<1x16x128xf32> to vector<16x128xf32>
    %26 = arith.mulf %23, %25 : vector<16x128xf32>
    %27 = arith.addf %17, %26 : vector<16x128xf32>
    %c3 = arith.constant 3 : index
    %c0_22 = arith.constant 0 : index
    %28 = vector.load %arg11[%c3, %c0_22] : memref<32x128xf32, #tpu.memory_space<vmem>>, vector<16x128xf32>
    %c2_23 = arith.constant 2 : index
    %c0_24 = arith.constant 0 : index
    %c0_25 = arith.constant 0 : index
    %29 = vector.load %arg4[%c2_23, %c0_24, %c0_25] : memref<15x16x128xf32, #tpu.memory_space<vmem>>, vector<1x16x128xf32>
    %30 = vector.shape_cast %29 : vector<1x16x128xf32> to vector<16x128xf32>
    %31 = arith.mulf %28, %30 : vector<16x128xf32>
    %32 = arith.addf %22, %31 : vector<16x128xf32>
    %c4 = arith.constant 4 : index
    %c0_26 = arith.constant 0 : index
    %33 = vector.load %arg11[%c4, %c0_26] : memref<32x128xf32, #tpu.memory_space<vmem>>, vector<16x128xf32>
    %c3_27 = arith.constant 3 : index
    %c0_28 = arith.constant 0 : index
    %c0_29 = arith.constant 0 : index
    %34 = vector.load %arg4[%c3_27, %c0_28, %c0_29] : memref<15x16x128xf32, #tpu.memory_space<vmem>>, vector<1x16x128xf32>
    %35 = vector.shape_cast %34 : vector<1x16x128xf32> to vector<16x128xf32>
    %36 = arith.mulf %33, %35 : vector<16x128xf32>
    %37 = arith.addf %27, %36 : vector<16x128xf32>
    %c5 = arith.constant 5 : index
    %c0_30 = arith.constant 0 : index
    %38 = vector.load %arg11[%c5, %c0_30] : memref<32x128xf32, #tpu.memory_space<vmem>>, vector<16x128xf32>
    %c4_31 = arith.constant 4 : index
    %c0_32 = arith.constant 0 : index
    %c0_33 = arith.constant 0 : index
    %39 = vector.load %arg4[%c4_31, %c0_32, %c0_33] : memref<15x16x128xf32, #tpu.memory_space<vmem>>, vector<1x16x128xf32>
    %40 = vector.shape_cast %39 : vector<1x16x128xf32> to vector<16x128xf32>
    %41 = arith.mulf %38, %40 : vector<16x128xf32>
    %42 = arith.addf %32, %41 : vector<16x128xf32>
    %c6 = arith.constant 6 : index
    %c0_34 = arith.constant 0 : index
    %43 = vector.load %arg11[%c6, %c0_34] : memref<32x128xf32, #tpu.memory_space<vmem>>, vector<16x128xf32>
    %c5_35 = arith.constant 5 : index
    %c0_36 = arith.constant 0 : index
    %c0_37 = arith.constant 0 : index
    %44 = vector.load %arg4[%c5_35, %c0_36, %c0_37] : memref<15x16x128xf32, #tpu.memory_space<vmem>>, vector<1x16x128xf32>
    %45 = vector.shape_cast %44 : vector<1x16x128xf32> to vector<16x128xf32>
    %46 = arith.mulf %43, %45 : vector<16x128xf32>
    %47 = arith.addf %37, %46 : vector<16x128xf32>
    %c7 = arith.constant 7 : index
    %c0_38 = arith.constant 0 : index
    %48 = vector.load %arg11[%c7, %c0_38] : memref<32x128xf32, #tpu.memory_space<vmem>>, vector<16x128xf32>
    %c6_39 = arith.constant 6 : index
    %c0_40 = arith.constant 0 : index
    %c0_41 = arith.constant 0 : index
    %49 = vector.load %arg4[%c6_39, %c0_40, %c0_41] : memref<15x16x128xf32, #tpu.memory_space<vmem>>, vector<1x16x128xf32>
    %50 = vector.shape_cast %49 : vector<1x16x128xf32> to vector<16x128xf32>
    %51 = arith.mulf %48, %50 : vector<16x128xf32>
    %52 = arith.addf %42, %51 : vector<16x128xf32>
    %c8_42 = arith.constant 8 : index
    %c0_43 = arith.constant 0 : index
    %53 = vector.load %arg11[%c8_42, %c0_43] : memref<32x128xf32, #tpu.memory_space<vmem>>, vector<16x128xf32>
    %c7_44 = arith.constant 7 : index
    %c0_45 = arith.constant 0 : index
    %c0_46 = arith.constant 0 : index
    %54 = vector.load %arg4[%c7_44, %c0_45, %c0_46] : memref<15x16x128xf32, #tpu.memory_space<vmem>>, vector<1x16x128xf32>
    %55 = vector.shape_cast %54 : vector<1x16x128xf32> to vector<16x128xf32>
    %56 = arith.mulf %53, %55 : vector<16x128xf32>
    %57 = arith.addf %47, %56 : vector<16x128xf32>
    %c9 = arith.constant 9 : index
    %c0_47 = arith.constant 0 : index
    %58 = vector.load %arg11[%c9, %c0_47] : memref<32x128xf32, #tpu.memory_space<vmem>>, vector<16x128xf32>
    %c8_48 = arith.constant 8 : index
    %c0_49 = arith.constant 0 : index
    %c0_50 = arith.constant 0 : index
    %59 = vector.load %arg4[%c8_48, %c0_49, %c0_50] : memref<15x16x128xf32, #tpu.memory_space<vmem>>, vector<1x16x128xf32>
    %60 = vector.shape_cast %59 : vector<1x16x128xf32> to vector<16x128xf32>
    %61 = arith.mulf %58, %60 : vector<16x128xf32>
    %62 = arith.addf %52, %61 : vector<16x128xf32>
    %c10 = arith.constant 10 : index
    %c0_51 = arith.constant 0 : index
    %63 = vector.load %arg11[%c10, %c0_51] : memref<32x128xf32, #tpu.memory_space<vmem>>, vector<16x128xf32>
    %c9_52 = arith.constant 9 : index
    %c0_53 = arith.constant 0 : index
    %c0_54 = arith.constant 0 : index
    %64 = vector.load %arg4[%c9_52, %c0_53, %c0_54] : memref<15x16x128xf32, #tpu.memory_space<vmem>>, vector<1x16x128xf32>
    %65 = vector.shape_cast %64 : vector<1x16x128xf32> to vector<16x128xf32>
    %66 = arith.mulf %63, %65 : vector<16x128xf32>
    %67 = arith.addf %57, %66 : vector<16x128xf32>
    %c11 = arith.constant 11 : index
    %c0_55 = arith.constant 0 : index
    %68 = vector.load %arg11[%c11, %c0_55] : memref<32x128xf32, #tpu.memory_space<vmem>>, vector<16x128xf32>
    %c10_56 = arith.constant 10 : index
    %c0_57 = arith.constant 0 : index
    %c0_58 = arith.constant 0 : index
    %69 = vector.load %arg4[%c10_56, %c0_57, %c0_58] : memref<15x16x128xf32, #tpu.memory_space<vmem>>, vector<1x16x128xf32>
    %70 = vector.shape_cast %69 : vector<1x16x128xf32> to vector<16x128xf32>
    %71 = arith.mulf %68, %70 : vector<16x128xf32>
    %72 = arith.addf %62, %71 : vector<16x128xf32>
    %c12 = arith.constant 12 : index
    %c0_59 = arith.constant 0 : index
    %73 = vector.load %arg11[%c12, %c0_59] : memref<32x128xf32, #tpu.memory_space<vmem>>, vector<16x128xf32>
    %c11_60 = arith.constant 11 : index
    %c0_61 = arith.constant 0 : index
    %c0_62 = arith.constant 0 : index
    %74 = vector.load %arg4[%c11_60, %c0_61, %c0_62] : memref<15x16x128xf32, #tpu.memory_space<vmem>>, vector<1x16x128xf32>
    %75 = vector.shape_cast %74 : vector<1x16x128xf32> to vector<16x128xf32>
    %76 = arith.mulf %73, %75 : vector<16x128xf32>
    %77 = arith.addf %67, %76 : vector<16x128xf32>
    %c13 = arith.constant 13 : index
    %c0_63 = arith.constant 0 : index
    %78 = vector.load %arg11[%c13, %c0_63] : memref<32x128xf32, #tpu.memory_space<vmem>>, vector<16x128xf32>
    %c12_64 = arith.constant 12 : index
    %c0_65 = arith.constant 0 : index
    %c0_66 = arith.constant 0 : index
    %79 = vector.load %arg4[%c12_64, %c0_65, %c0_66] : memref<15x16x128xf32, #tpu.memory_space<vmem>>, vector<1x16x128xf32>
    %80 = vector.shape_cast %79 : vector<1x16x128xf32> to vector<16x128xf32>
    %81 = arith.mulf %78, %80 : vector<16x128xf32>
    %82 = arith.addf %72, %81 : vector<16x128xf32>
    %c14 = arith.constant 14 : index
    %c0_67 = arith.constant 0 : index
    %83 = vector.load %arg11[%c14, %c0_67] : memref<32x128xf32, #tpu.memory_space<vmem>>, vector<16x128xf32>
    %c13_68 = arith.constant 13 : index
    %c0_69 = arith.constant 0 : index
    %c0_70 = arith.constant 0 : index
    %84 = vector.load %arg4[%c13_68, %c0_69, %c0_70] : memref<15x16x128xf32, #tpu.memory_space<vmem>>, vector<1x16x128xf32>
    %85 = vector.shape_cast %84 : vector<1x16x128xf32> to vector<16x128xf32>
    %86 = arith.mulf %83, %85 : vector<16x128xf32>
    %87 = arith.addf %77, %86 : vector<16x128xf32>
    %c15 = arith.constant 15 : index
    %c0_71 = arith.constant 0 : index
    %88 = vector.load %arg11[%c15, %c0_71] : memref<32x128xf32, #tpu.memory_space<vmem>>, vector<16x128xf32>
    %c14_72 = arith.constant 14 : index
    %c0_73 = arith.constant 0 : index
    %c0_74 = arith.constant 0 : index
    %89 = vector.load %arg4[%c14_72, %c0_73, %c0_74] : memref<15x16x128xf32, #tpu.memory_space<vmem>>, vector<1x16x128xf32>
    %90 = vector.shape_cast %89 : vector<1x16x128xf32> to vector<16x128xf32>
    %91 = arith.mulf %88, %90 : vector<16x128xf32>
    %92 = arith.addf %82, %91 : vector<16x128xf32>
    %93 = arith.addf %92, %87 : vector<16x128xf32>
    %c0_75 = arith.constant 0 : index
    %c0_76 = arith.constant 0 : index
    %94 = vector.load %arg5[%c0_75, %c0_76] : memref<16x128xf32, #tpu.memory_space<vmem>>, vector<16x128xf32>
    %95 = arith.addf %93, %94 : vector<16x128xf32>
    %96 = arith.negf %95 : vector<16x128xf32>
    %97 = math.exp %96 : vector<16x128xf32>
    %cst_77 = arith.constant 1.000000e+00 : f32
    %98 = vector.broadcast %cst_77 : f32 to vector<16x128xf32>
    %99 = arith.addf %98, %97 : vector<16x128xf32>
    %100 = arith.divf %98, %99 : vector<16x128xf32>
    %101 = arith.mulf %100, %1 : vector<16x128xf32>
    %cst_78 = arith.constant 0.000000e+00 : f32
    %102 = vector.broadcast %cst_78 : f32 to vector<16x128xf32>
    %c7_79 = arith.constant 7 : index
    %c0_80 = arith.constant 0 : index
    %103 = vector.load %arg11[%c7_79, %c0_80] : memref<32x128xf32, #tpu.memory_space<vmem>>, vector<16x128xf32>
    %c0_81 = arith.constant 0 : index
    %c0_82 = arith.constant 0 : index
    %c0_83 = arith.constant 0 : index
    %104 = vector.load %arg6[%c0_81, %c0_82, %c0_83] : memref<3x128x128xf32, #tpu.memory_space<vmem>>, vector<1x128x128xf32>
    %105 = vector.shape_cast %104 : vector<1x128x128xf32> to vector<128x128xf32>
    %cst_84 = arith.constant dense<0.000000e+00> : vector<16x128xf32>
    %106 = tpu.matmul %103, %105, %cst_84 {dimension_numbers = #tpu.dot_dimension_numbers<[1], [0], [0], [1], [0, 0, 1, 1], [], []>} : vector<16x128xf32>, vector<128x128xf32>, vector<16x128xf32> -> vector<16x128xf32>
    %107 = arith.addf %102, %106 : vector<16x128xf32>
    %c8_85 = arith.constant 8 : index
    %c0_86 = arith.constant 0 : index
    %108 = vector.load %arg11[%c8_85, %c0_86] : memref<32x128xf32, #tpu.memory_space<vmem>>, vector<16x128xf32>
    %c1_87 = arith.constant 1 : index
    %c0_88 = arith.constant 0 : index
    %c0_89 = arith.constant 0 : index
    %109 = vector.load %arg6[%c1_87, %c0_88, %c0_89] : memref<3x128x128xf32, #tpu.memory_space<vmem>>, vector<1x128x128xf32>
    %110 = vector.shape_cast %109 : vector<1x128x128xf32> to vector<128x128xf32>
    %cst_90 = arith.constant dense<0.000000e+00> : vector<16x128xf32>
    %111 = tpu.matmul %108, %110, %cst_90 {dimension_numbers = #tpu.dot_dimension_numbers<[1], [0], [0], [1], [0, 0, 1, 1], [], []>} : vector<16x128xf32>, vector<128x128xf32>, vector<16x128xf32> -> vector<16x128xf32>
    %112 = arith.addf %107, %111 : vector<16x128xf32>
    %c9_91 = arith.constant 9 : index
    %c0_92 = arith.constant 0 : index
    %113 = vector.load %arg11[%c9_91, %c0_92] : memref<32x128xf32, #tpu.memory_space<vmem>>, vector<16x128xf32>
    %c2_93 = arith.constant 2 : index
    %c0_94 = arith.constant 0 : index
    %c0_95 = arith.constant 0 : index
    %114 = vector.load %arg6[%c2_93, %c0_94, %c0_95] : memref<3x128x128xf32, #tpu.memory_space<vmem>>, vector<1x128x128xf32>
    %115 = vector.shape_cast %114 : vector<1x128x128xf32> to vector<128x128xf32>
    %cst_96 = arith.constant dense<0.000000e+00> : vector<16x128xf32>
    %116 = tpu.matmul %113, %115, %cst_96 {dimension_numbers = #tpu.dot_dimension_numbers<[1], [0], [0], [1], [0, 0, 1, 1], [], []>} : vector<16x128xf32>, vector<128x128xf32>, vector<16x128xf32> -> vector<16x128xf32>
    %117 = arith.addf %112, %116 : vector<16x128xf32>
    %c0_97 = arith.constant 0 : index
    %c0_98 = arith.constant 0 : index
    %118 = vector.load %arg7[%c0_97, %c0_98] : memref<16x128xf32, #tpu.memory_space<vmem>>, vector<16x128xf32>
    %119 = arith.addf %117, %118 : vector<16x128xf32>
    %120 = arith.negf %119 : vector<16x128xf32>
    %121 = math.exp %120 : vector<16x128xf32>
    %cst_99 = arith.constant 1.000000e+00 : f32
    %122 = vector.broadcast %cst_99 : f32 to vector<16x128xf32>
    %123 = arith.addf %122, %121 : vector<16x128xf32>
    %124 = arith.divf %122, %123 : vector<16x128xf32>
    %125 = arith.mulf %124, %1 : vector<16x128xf32>
    %126 = arith.addf %15, %101 : vector<16x128xf32>
    %127 = arith.addf %126, %125 : vector<16x128xf32>
    %c0_100 = arith.constant 0 : index
    %c0_101 = arith.constant 0 : index
    %128 = vector.load %arg8[%c0_100, %c0_101] : memref<128x384xf32, #tpu.memory_space<vmem>>, vector<128x384xf32>
    %cst_102 = arith.constant dense<0.000000e+00> : vector<16x384xf32>
    %129 = tpu.matmul %127, %128, %cst_102 {dimension_numbers = #tpu.dot_dimension_numbers<[1], [0], [0], [1], [0, 0, 1, 1], [], []>} : vector<16x128xf32>, vector<128x384xf32>, vector<16x384xf32> -> vector<16x384xf32>
    %c0_103 = arith.constant 0 : index
    %c0_104 = arith.constant 0 : index
    %130 = vector.load %arg9[%c0_103, %c0_104] : memref<16x384xf32, #tpu.memory_space<vmem>>, vector<16x384xf32>
    %131 = arith.addf %129, %130 : vector<16x384xf32>
    %c0_105 = arith.constant 0 : index
    %c0_106 = arith.constant 0 : index
    %c0_107 = arith.constant 0 : index
    %132 = vector.load %arg10[%c0_105, %c0_106, %c0_107] : memref<1x16x384xf32, #tpu.memory_space<vmem>>, vector<1x16x384xf32>
    %133 = vector.shape_cast %132 : vector<1x16x384xf32> to vector<16x384xf32>
    %134 = vector.shape_cast %131 : vector<16x384xf32> to vector<1x16x384xf32>
    tpu.vector_store %arg10[%c0_105, %c0_106, %c0_107], %134 {strides = array<i32>} : memref<1x16x384xf32, #tpu.memory_space<vmem>>, vector<1x16x384xf32>,
    return
  }
  func.func @transform_0(%arg0: i32) -> (i32, i32, i32) {
    %c0_i32 = arith.constant 0 : i32
    %c0_i32_0 = arith.constant 0 : i32
    %c0_i32_1 = arith.constant 0 : i32
    return %arg0, %c0_i32, %c0_i32_0 : i32, i32, i32
  }
  func.func @transform_1(%arg0: i32) -> (i32, i32) {
    %c0_i32 = arith.constant 0 : i32
    %c0_i32_0 = arith.constant 0 : i32
    %c0_i32_1 = arith.constant 0 : i32
    return %c0_i32, %c0_i32_0 : i32, i32
  }
  func.func @transform_2(%arg0: i32) -> (i32, i32) {
    %c0_i32 = arith.constant 0 : i32
    %c0_i32_0 = arith.constant 0 : i32
    %c0_i32_1 = arith.constant 0 : i32
    return %c0_i32, %c0_i32_0 : i32, i32
  }
  func.func @transform_3(%arg0: i32) -> (i32, i32, i32) {
    %c0_i32 = arith.constant 0 : i32
    %c0_i32_0 = arith.constant 0 : i32
    %c0_i32_1 = arith.constant 0 : i32
    %c0_i32_2 = arith.constant 0 : i32
    return %c0_i32, %c0_i32_0, %c0_i32_1 : i32, i32, i32
  }
  func.func @transform_4(%arg0: i32) -> (i32, i32) {
    %c0_i32 = arith.constant 0 : i32
    %c0_i32_0 = arith.constant 0 : i32
    %c0_i32_1 = arith.constant 0 : i32
    return %c0_i32, %c0_i32_0 : i32, i32
  }
  func.func @transform_5(%arg0: i32) -> (i32, i32, i32) {
    %c0_i32 = arith.constant 0 : i32
    %c0_i32_0 = arith.constant 0 : i32
    %c0_i32_1 = arith.constant 0 : i32
    %c0_i32_2 = arith.constant 0 : i32
    return %c0_i32, %c0_i32_0, %c0_i32_1 : i32, i32, i32
  }
  func.func @transform_6(%arg0: i32) -> (i32, i32) {
    %c0_i32 = arith.constant 0 : i32
    %c0_i32_0 = arith.constant 0 : i32
    %c0_i32_1 = arith.constant 0 : i32
    return %c0_i32, %c0_i32_0 : i32, i32
  }
  func.func @transform_7(%arg0: i32) -> (i32, i32) {
    %c0_i32 = arith.constant 0 : i32
    %c0_i32_0 = arith.constant 0 : i32
    %c0_i32_1 = arith.constant 0 : i32
    return %c0_i32, %c0_i32_0 : i32, i32
  }
  func.func @transform_8(%arg0: i32) -> (i32, i32) {
    %c0_i32 = arith.constant 0 : i32
    %c0_i32_0 = arith.constant 0 : i32
    %c0_i32_1 = arith.constant 0 : i32
    return %c0_i32, %c0_i32_0 : i32, i32
  }
  func.func @transform_9(%arg0: i32) -> (i32, i32, i32) {
    %c0_i32 = arith.constant 0 : i32
    %c0_i32_0 = arith.constant 0 : i32
    %c0_i32_1 = arith.constant 0 : i32
    return %arg0, %c0_i32, %c0_i32_0 : i32, i32, i32
  }
}

module attributes {stable_mosaic.version = 11 : i64} {
  func.func @kernel(%arg0: i32, %arg1: memref<1x16x128xf32, #tpu.memory_space<vmem>>, %arg2: memref<1x16x1152xf32, #tpu.memory_space<vmem>>, %arg3: memref<1152x128xf32, #tpu.memory_space<vmem>>, %arg4: memref<16x128xf32, #tpu.memory_space<vmem>>, %arg5: memref<15x128x128xf32, #tpu.memory_space<vmem>>, %arg6: memref<16x128xf32, #tpu.memory_space<vmem>>, %arg7: memref<3x128x128xf32, #tpu.memory_space<vmem>>, %arg8: memref<128x128xf32, #tpu.memory_space<vmem>>, %arg9: memref<16x128xf32, #tpu.memory_space<vmem>>, %arg10: memref<128x128xf32, #tpu.memory_space<vmem>>, %arg11: memref<128x128xf32, #tpu.memory_space<vmem>>, %arg12: memref<16x128xf32, #tpu.memory_space<vmem>>, %arg13: memref<1x16x128xf32, #tpu.memory_space<vmem>>, %arg14: memref<32x128xf32, #tpu.memory_space<vmem>>) attributes {dimension_semantics = [#tpu.dimension_semantics<parallel>], iteration_bounds = array<i64: 2>, scalar_prefetch = 0 : i64, scratch_operands = 1 : i64, tpu.core_type = #tpu.core_type<tc>, window_params = [{transform_indices = @transform_0, window_bounds = array<i64: 1, 16, 128>}, {transform_indices = @transform_1, window_bounds = array<i64: 1, 16, 1152>}, {pipeline_mode = #tpu.pipeline_mode<synchronous>, transform_indices = @transform_2, window_bounds = array<i64: 1152, 128>}, {pipeline_mode = #tpu.pipeline_mode<synchronous>, transform_indices = @transform_3, window_bounds = array<i64: 16, 128>}, {pipeline_mode = #tpu.pipeline_mode<synchronous>, transform_indices = @transform_4, window_bounds = array<i64: 15, 128, 128>}, {pipeline_mode = #tpu.pipeline_mode<synchronous>, transform_indices = @transform_5, window_bounds = array<i64: 16, 128>}, {pipeline_mode = #tpu.pipeline_mode<synchronous>, transform_indices = @transform_6, window_bounds = array<i64: 3, 128, 128>}, {pipeline_mode = #tpu.pipeline_mode<synchronous>, transform_indices = @transform_7, window_bounds = array<i64: 128, 128>}, {pipeline_mode = #tpu.pipeline_mode<synchronous>, transform_indices = @transform_8, window_bounds = array<i64: 16, 128>}, {pipeline_mode = #tpu.pipeline_mode<synchronous>, transform_indices = @transform_9, window_bounds = array<i64: 128, 128>}, {pipeline_mode = #tpu.pipeline_mode<synchronous>, transform_indices = @transform_10, window_bounds = array<i64: 128, 128>}, {pipeline_mode = #tpu.pipeline_mode<synchronous>, transform_indices = @transform_11, window_bounds = array<i64: 16, 128>}, {transform_indices = @transform_12, window_bounds = array<i64: 1, 16, 128>}]} {
    %c0 = arith.constant 0 : index
    %c0_0 = arith.constant 0 : index
    %c0_1 = arith.constant 0 : index
    %0 = vector.load %arg1[%c0, %c0_0, %c0_1] : memref<1x16x128xf32, #tpu.memory_space<vmem>>, vector<1x16x128xf32>
    %1 = vector.shape_cast %0 : vector<1x16x128xf32> to vector<16x128xf32>
    %c0_2 = arith.constant 0 : index
    %c0_3 = arith.constant 0 : index
    %c0_4 = arith.constant 0 : index
    %2 = vector.load %arg2[%c0_2, %c0_3, %c0_4] : memref<1x16x1152xf32, #tpu.memory_space<vmem>>, vector<1x16x1152xf32>
    %3 = vector.shape_cast %2 : vector<1x16x1152xf32> to vector<16x1152xf32>
    %c0_5 = arith.constant 0 : index
    %c0_6 = arith.constant 0 : index
    %4 = vector.load %arg3[%c0_5, %c0_6] : memref<1152x128xf32, #tpu.memory_space<vmem>>, vector<1152x128xf32>
    %cst = arith.constant dense<0.000000e+00> : vector<16x128xf32>
    %5 = tpu.matmul %3, %4, %cst {dimension_numbers = #tpu.dot_dimension_numbers<[1], [0], [0], [1], [0, 0, 1, 1], [], []>} : vector<16x1152xf32>, vector<1152x128xf32>, vector<16x128xf32> -> vector<16x128xf32>
    %c0_7 = arith.constant 0 : index
    %c0_8 = arith.constant 0 : index
    %6 = vector.load %arg4[%c0_7, %c0_8] : memref<16x128xf32, #tpu.memory_space<vmem>>, vector<16x128xf32>
    %7 = arith.addf %5, %6 : vector<16x128xf32>
    %8 = arith.mulf %7, %1 : vector<16x128xf32>
    %cst_9 = arith.constant 0.000000e+00 : f32
    %9 = vector.broadcast %cst_9 : f32 to vector<8x128xf32>
    %c0_10 = arith.constant 0 : index
    %c0_11 = arith.constant 0 : index
    %10 = vector.load %arg14[%c0_10, %c0_11] : memref<32x128xf32, #tpu.memory_space<vmem>>, vector<8x128xf32>
    tpu.vector_store %arg14[%c0_10, %c0_11], %9 {strides = array<i32>} : memref<32x128xf32, #tpu.memory_space<vmem>>, vector<8x128xf32>,
    %c24 = arith.constant 24 : index
    %c0_12 = arith.constant 0 : index
    %11 = vector.load %arg14[%c24, %c0_12] : memref<32x128xf32, #tpu.memory_space<vmem>>, vector<8x128xf32>
    tpu.vector_store %arg14[%c24, %c0_12], %9 {strides = array<i32>} : memref<32x128xf32, #tpu.memory_space<vmem>>, vector<8x128xf32>,
    %c8 = arith.constant 8 : index
    %c0_13 = arith.constant 0 : index
    %12 = vector.load %arg14[%c8, %c0_13] : memref<32x128xf32, #tpu.memory_space<vmem>>, vector<16x128xf32>
    tpu.vector_store %arg14[%c8, %c0_13], %1 {strides = array<i32>} : memref<32x128xf32, #tpu.memory_space<vmem>>, vector<16x128xf32>,
    %cst_14 = arith.constant 0.000000e+00 : f32
    %13 = vector.broadcast %cst_14 : f32 to vector<16x128xf32>
    %cst_15 = arith.constant 0.000000e+00 : f32
    %14 = vector.broadcast %cst_15 : f32 to vector<16x128xf32>
    %c1 = arith.constant 1 : index
    %c0_16 = arith.constant 0 : index
    %15 = vector.load %arg14[%c1, %c0_16] : memref<32x128xf32, #tpu.memory_space<vmem>>, vector<16x128xf32>
    %c0_17 = arith.constant 0 : index
    %c0_18 = arith.constant 0 : index
    %c0_19 = arith.constant 0 : index
    %16 = vector.load %arg5[%c0_17, %c0_18, %c0_19] : memref<15x128x128xf32, #tpu.memory_space<vmem>>, vector<1x128x128xf32>
    %17 = vector.shape_cast %16 : vector<1x128x128xf32> to vector<128x128xf32>
    %cst_20 = arith.constant dense<0.000000e+00> : vector<16x128xf32>
    %18 = tpu.matmul %15, %17, %cst_20 {dimension_numbers = #tpu.dot_dimension_numbers<[1], [0], [0], [1], [0, 0, 1, 1], [], []>} : vector<16x128xf32>, vector<128x128xf32>, vector<16x128xf32> -> vector<16x128xf32>
    %19 = arith.addf %13, %18 : vector<16x128xf32>
    %c2 = arith.constant 2 : index
    %c0_21 = arith.constant 0 : index
    %20 = vector.load %arg14[%c2, %c0_21] : memref<32x128xf32, #tpu.memory_space<vmem>>, vector<16x128xf32>
    %c1_22 = arith.constant 1 : index
    %c0_23 = arith.constant 0 : index
    %c0_24 = arith.constant 0 : index
    %21 = vector.load %arg5[%c1_22, %c0_23, %c0_24] : memref<15x128x128xf32, #tpu.memory_space<vmem>>, vector<1x128x128xf32>
    %22 = vector.shape_cast %21 : vector<1x128x128xf32> to vector<128x128xf32>
    %cst_25 = arith.constant dense<0.000000e+00> : vector<16x128xf32>
    %23 = tpu.matmul %20, %22, %cst_25 {dimension_numbers = #tpu.dot_dimension_numbers<[1], [0], [0], [1], [0, 0, 1, 1], [], []>} : vector<16x128xf32>, vector<128x128xf32>, vector<16x128xf32> -> vector<16x128xf32>
    %24 = arith.addf %14, %23 : vector<16x128xf32>
    %c3 = arith.constant 3 : index
    %c0_26 = arith.constant 0 : index
    %25 = vector.load %arg14[%c3, %c0_26] : memref<32x128xf32, #tpu.memory_space<vmem>>, vector<16x128xf32>
    %c2_27 = arith.constant 2 : index
    %c0_28 = arith.constant 0 : index
    %c0_29 = arith.constant 0 : index
    %26 = vector.load %arg5[%c2_27, %c0_28, %c0_29] : memref<15x128x128xf32, #tpu.memory_space<vmem>>, vector<1x128x128xf32>
    %27 = vector.shape_cast %26 : vector<1x128x128xf32> to vector<128x128xf32>
    %cst_30 = arith.constant dense<0.000000e+00> : vector<16x128xf32>
    %28 = tpu.matmul %25, %27, %cst_30 {dimension_numbers = #tpu.dot_dimension_numbers<[1], [0], [0], [1], [0, 0, 1, 1], [], []>} : vector<16x128xf32>, vector<128x128xf32>, vector<16x128xf32> -> vector<16x128xf32>
    %29 = arith.addf %19, %28 : vector<16x128xf32>
    %c4 = arith.constant 4 : index
    %c0_31 = arith.constant 0 : index
    %30 = vector.load %arg14[%c4, %c0_31] : memref<32x128xf32, #tpu.memory_space<vmem>>, vector<16x128xf32>
    %c3_32 = arith.constant 3 : index
    %c0_33 = arith.constant 0 : index
    %c0_34 = arith.constant 0 : index
    %31 = vector.load %arg5[%c3_32, %c0_33, %c0_34] : memref<15x128x128xf32, #tpu.memory_space<vmem>>, vector<1x128x128xf32>
    %32 = vector.shape_cast %31 : vector<1x128x128xf32> to vector<128x128xf32>
    %cst_35 = arith.constant dense<0.000000e+00> : vector<16x128xf32>
    %33 = tpu.matmul %30, %32, %cst_35 {dimension_numbers = #tpu.dot_dimension_numbers<[1], [0], [0], [1], [0, 0, 1, 1], [], []>} : vector<16x128xf32>, vector<128x128xf32>, vector<16x128xf32> -> vector<16x128xf32>
    %34 = arith.addf %24, %33 : vector<16x128xf32>
    %c5 = arith.constant 5 : index
    %c0_36 = arith.constant 0 : index
    %35 = vector.load %arg14[%c5, %c0_36] : memref<32x128xf32, #tpu.memory_space<vmem>>, vector<16x128xf32>
    %c4_37 = arith.constant 4 : index
    %c0_38 = arith.constant 0 : index
    %c0_39 = arith.constant 0 : index
    %36 = vector.load %arg5[%c4_37, %c0_38, %c0_39] : memref<15x128x128xf32, #tpu.memory_space<vmem>>, vector<1x128x128xf32>
    %37 = vector.shape_cast %36 : vector<1x128x128xf32> to vector<128x128xf32>
    %cst_40 = arith.constant dense<0.000000e+00> : vector<16x128xf32>
    %38 = tpu.matmul %35, %37, %cst_40 {dimension_numbers = #tpu.dot_dimension_numbers<[1], [0], [0], [1], [0, 0, 1, 1], [], []>} : vector<16x128xf32>, vector<128x128xf32>, vector<16x128xf32> -> vector<16x128xf32>
    %39 = arith.addf %29, %38 : vector<16x128xf32>
    %c6 = arith.constant 6 : index
    %c0_41 = arith.constant 0 : index
    %40 = vector.load %arg14[%c6, %c0_41] : memref<32x128xf32, #tpu.memory_space<vmem>>, vector<16x128xf32>
    %c5_42 = arith.constant 5 : index
    %c0_43 = arith.constant 0 : index
    %c0_44 = arith.constant 0 : index
    %41 = vector.load %arg5[%c5_42, %c0_43, %c0_44] : memref<15x128x128xf32, #tpu.memory_space<vmem>>, vector<1x128x128xf32>
    %42 = vector.shape_cast %41 : vector<1x128x128xf32> to vector<128x128xf32>
    %cst_45 = arith.constant dense<0.000000e+00> : vector<16x128xf32>
    %43 = tpu.matmul %40, %42, %cst_45 {dimension_numbers = #tpu.dot_dimension_numbers<[1], [0], [0], [1], [0, 0, 1, 1], [], []>} : vector<16x128xf32>, vector<128x128xf32>, vector<16x128xf32> -> vector<16x128xf32>
    %44 = arith.addf %34, %43 : vector<16x128xf32>
    %c7 = arith.constant 7 : index
    %c0_46 = arith.constant 0 : index
    %45 = vector.load %arg14[%c7, %c0_46] : memref<32x128xf32, #tpu.memory_space<vmem>>, vector<16x128xf32>
    %c6_47 = arith.constant 6 : index
    %c0_48 = arith.constant 0 : index
    %c0_49 = arith.constant 0 : index
    %46 = vector.load %arg5[%c6_47, %c0_48, %c0_49] : memref<15x128x128xf32, #tpu.memory_space<vmem>>, vector<1x128x128xf32>
    %47 = vector.shape_cast %46 : vector<1x128x128xf32> to vector<128x128xf32>
    %cst_50 = arith.constant dense<0.000000e+00> : vector<16x128xf32>
    %48 = tpu.matmul %45, %47, %cst_50 {dimension_numbers = #tpu.dot_dimension_numbers<[1], [0], [0], [1], [0, 0, 1, 1], [], []>} : vector<16x128xf32>, vector<128x128xf32>, vector<16x128xf32> -> vector<16x128xf32>
    %49 = arith.addf %39, %48 : vector<16x128xf32>
    %c8_51 = arith.constant 8 : index
    %c0_52 = arith.constant 0 : index
    %50 = vector.load %arg14[%c8_51, %c0_52] : memref<32x128xf32, #tpu.memory_space<vmem>>, vector<16x128xf32>
    %c7_53 = arith.constant 7 : index
    %c0_54 = arith.constant 0 : index
    %c0_55 = arith.constant 0 : index
    %51 = vector.load %arg5[%c7_53, %c0_54, %c0_55] : memref<15x128x128xf32, #tpu.memory_space<vmem>>, vector<1x128x128xf32>
    %52 = vector.shape_cast %51 : vector<1x128x128xf32> to vector<128x128xf32>
    %cst_56 = arith.constant dense<0.000000e+00> : vector<16x128xf32>
    %53 = tpu.matmul %50, %52, %cst_56 {dimension_numbers = #tpu.dot_dimension_numbers<[1], [0], [0], [1], [0, 0, 1, 1], [], []>} : vector<16x128xf32>, vector<128x128xf32>, vector<16x128xf32> -> vector<16x128xf32>
    %54 = arith.addf %44, %53 : vector<16x128xf32>
    %c9 = arith.constant 9 : index
    %c0_57 = arith.constant 0 : index
    %55 = vector.load %arg14[%c9, %c0_57] : memref<32x128xf32, #tpu.memory_space<vmem>>, vector<16x128xf32>
    %c8_58 = arith.constant 8 : index
    %c0_59 = arith.constant 0 : index
    %c0_60 = arith.constant 0 : index
    %56 = vector.load %arg5[%c8_58, %c0_59, %c0_60] : memref<15x128x128xf32, #tpu.memory_space<vmem>>, vector<1x128x128xf32>
    %57 = vector.shape_cast %56 : vector<1x128x128xf32> to vector<128x128xf32>
    %cst_61 = arith.constant dense<0.000000e+00> : vector<16x128xf32>
    %58 = tpu.matmul %55, %57, %cst_61 {dimension_numbers = #tpu.dot_dimension_numbers<[1], [0], [0], [1], [0, 0, 1, 1], [], []>} : vector<16x128xf32>, vector<128x128xf32>, vector<16x128xf32> -> vector<16x128xf32>
    %59 = arith.addf %49, %58 : vector<16x128xf32>
    %c10 = arith.constant 10 : index
    %c0_62 = arith.constant 0 : index
    %60 = vector.load %arg14[%c10, %c0_62] : memref<32x128xf32, #tpu.memory_space<vmem>>, vector<16x128xf32>
    %c9_63 = arith.constant 9 : index
    %c0_64 = arith.constant 0 : index
    %c0_65 = arith.constant 0 : index
    %61 = vector.load %arg5[%c9_63, %c0_64, %c0_65] : memref<15x128x128xf32, #tpu.memory_space<vmem>>, vector<1x128x128xf32>
    %62 = vector.shape_cast %61 : vector<1x128x128xf32> to vector<128x128xf32>
    %cst_66 = arith.constant dense<0.000000e+00> : vector<16x128xf32>
    %63 = tpu.matmul %60, %62, %cst_66 {dimension_numbers = #tpu.dot_dimension_numbers<[1], [0], [0], [1], [0, 0, 1, 1], [], []>} : vector<16x128xf32>, vector<128x128xf32>, vector<16x128xf32> -> vector<16x128xf32>
    %64 = arith.addf %54, %63 : vector<16x128xf32>
    %c11 = arith.constant 11 : index
    %c0_67 = arith.constant 0 : index
    %65 = vector.load %arg14[%c11, %c0_67] : memref<32x128xf32, #tpu.memory_space<vmem>>, vector<16x128xf32>
    %c10_68 = arith.constant 10 : index
    %c0_69 = arith.constant 0 : index
    %c0_70 = arith.constant 0 : index
    %66 = vector.load %arg5[%c10_68, %c0_69, %c0_70] : memref<15x128x128xf32, #tpu.memory_space<vmem>>, vector<1x128x128xf32>
    %67 = vector.shape_cast %66 : vector<1x128x128xf32> to vector<128x128xf32>
    %cst_71 = arith.constant dense<0.000000e+00> : vector<16x128xf32>
    %68 = tpu.matmul %65, %67, %cst_71 {dimension_numbers = #tpu.dot_dimension_numbers<[1], [0], [0], [1], [0, 0, 1, 1], [], []>} : vector<16x128xf32>, vector<128x128xf32>, vector<16x128xf32> -> vector<16x128xf32>
    %69 = arith.addf %59, %68 : vector<16x128xf32>
    %c12 = arith.constant 12 : index
    %c0_72 = arith.constant 0 : index
    %70 = vector.load %arg14[%c12, %c0_72] : memref<32x128xf32, #tpu.memory_space<vmem>>, vector<16x128xf32>
    %c11_73 = arith.constant 11 : index
    %c0_74 = arith.constant 0 : index
    %c0_75 = arith.constant 0 : index
    %71 = vector.load %arg5[%c11_73, %c0_74, %c0_75] : memref<15x128x128xf32, #tpu.memory_space<vmem>>, vector<1x128x128xf32>
    %72 = vector.shape_cast %71 : vector<1x128x128xf32> to vector<128x128xf32>
    %cst_76 = arith.constant dense<0.000000e+00> : vector<16x128xf32>
    %73 = tpu.matmul %70, %72, %cst_76 {dimension_numbers = #tpu.dot_dimension_numbers<[1], [0], [0], [1], [0, 0, 1, 1], [], []>} : vector<16x128xf32>, vector<128x128xf32>, vector<16x128xf32> -> vector<16x128xf32>
    %74 = arith.addf %64, %73 : vector<16x128xf32>
    %c13 = arith.constant 13 : index
    %c0_77 = arith.constant 0 : index
    %75 = vector.load %arg14[%c13, %c0_77] : memref<32x128xf32, #tpu.memory_space<vmem>>, vector<16x128xf32>
    %c12_78 = arith.constant 12 : index
    %c0_79 = arith.constant 0 : index
    %c0_80 = arith.constant 0 : index
    %76 = vector.load %arg5[%c12_78, %c0_79, %c0_80] : memref<15x128x128xf32, #tpu.memory_space<vmem>>, vector<1x128x128xf32>
    %77 = vector.shape_cast %76 : vector<1x128x128xf32> to vector<128x128xf32>
    %cst_81 = arith.constant dense<0.000000e+00> : vector<16x128xf32>
    %78 = tpu.matmul %75, %77, %cst_81 {dimension_numbers = #tpu.dot_dimension_numbers<[1], [0], [0], [1], [0, 0, 1, 1], [], []>} : vector<16x128xf32>, vector<128x128xf32>, vector<16x128xf32> -> vector<16x128xf32>
    %79 = arith.addf %69, %78 : vector<16x128xf32>
    %c14 = arith.constant 14 : index
    %c0_82 = arith.constant 0 : index
    %80 = vector.load %arg14[%c14, %c0_82] : memref<32x128xf32, #tpu.memory_space<vmem>>, vector<16x128xf32>
    %c13_83 = arith.constant 13 : index
    %c0_84 = arith.constant 0 : index
    %c0_85 = arith.constant 0 : index
    %81 = vector.load %arg5[%c13_83, %c0_84, %c0_85] : memref<15x128x128xf32, #tpu.memory_space<vmem>>, vector<1x128x128xf32>
    %82 = vector.shape_cast %81 : vector<1x128x128xf32> to vector<128x128xf32>
    %cst_86 = arith.constant dense<0.000000e+00> : vector<16x128xf32>
    %83 = tpu.matmul %80, %82, %cst_86 {dimension_numbers = #tpu.dot_dimension_numbers<[1], [0], [0], [1], [0, 0, 1, 1], [], []>} : vector<16x128xf32>, vector<128x128xf32>, vector<16x128xf32> -> vector<16x128xf32>
    %84 = arith.addf %74, %83 : vector<16x128xf32>
    %c15 = arith.constant 15 : index
    %c0_87 = arith.constant 0 : index
    %85 = vector.load %arg14[%c15, %c0_87] : memref<32x128xf32, #tpu.memory_space<vmem>>, vector<16x128xf32>
    %c14_88 = arith.constant 14 : index
    %c0_89 = arith.constant 0 : index
    %c0_90 = arith.constant 0 : index
    %86 = vector.load %arg5[%c14_88, %c0_89, %c0_90] : memref<15x128x128xf32, #tpu.memory_space<vmem>>, vector<1x128x128xf32>
    %87 = vector.shape_cast %86 : vector<1x128x128xf32> to vector<128x128xf32>
    %cst_91 = arith.constant dense<0.000000e+00> : vector<16x128xf32>
    %88 = tpu.matmul %85, %87, %cst_91 {dimension_numbers = #tpu.dot_dimension_numbers<[1], [0], [0], [1], [0, 0, 1, 1], [], []>} : vector<16x128xf32>, vector<128x128xf32>, vector<16x128xf32> -> vector<16x128xf32>
    %89 = arith.addf %79, %88 : vector<16x128xf32>
    %90 = arith.addf %89, %84 : vector<16x128xf32>
    %c0_92 = arith.constant 0 : index
    %c0_93 = arith.constant 0 : index
    %91 = vector.load %arg6[%c0_92, %c0_93] : memref<16x128xf32, #tpu.memory_space<vmem>>, vector<16x128xf32>
    %92 = arith.addf %90, %91 : vector<16x128xf32>
    %c8_94 = arith.constant 8 : index
    %c0_95 = arith.constant 0 : index
    %93 = vector.load %arg14[%c8_94, %c0_95] : memref<32x128xf32, #tpu.memory_space<vmem>>, vector<16x128xf32>
    tpu.vector_store %arg14[%c8_94, %c0_95], %92 {strides = array<i32>} : memref<32x128xf32, #tpu.memory_space<vmem>>, vector<16x128xf32>,
    %cst_96 = arith.constant 0.000000e+00 : f32
    %94 = vector.broadcast %cst_96 : f32 to vector<16x128xf32>
    %c7_97 = arith.constant 7 : index
    %c0_98 = arith.constant 0 : index
    %95 = vector.load %arg14[%c7_97, %c0_98] : memref<32x128xf32, #tpu.memory_space<vmem>>, vector<16x128xf32>
    %c0_99 = arith.constant 0 : index
    %c0_100 = arith.constant 0 : index
    %c0_101 = arith.constant 0 : index
    %96 = vector.load %arg7[%c0_99, %c0_100, %c0_101] : memref<3x128x128xf32, #tpu.memory_space<vmem>>, vector<1x128x128xf32>
    %97 = vector.shape_cast %96 : vector<1x128x128xf32> to vector<128x128xf32>
    %cst_102 = arith.constant dense<0.000000e+00> : vector<16x128xf32>
    %98 = tpu.matmul %95, %97, %cst_102 {dimension_numbers = #tpu.dot_dimension_numbers<[1], [0], [0], [1], [0, 0, 1, 1], [], []>} : vector<16x128xf32>, vector<128x128xf32>, vector<16x128xf32> -> vector<16x128xf32>
    %99 = arith.addf %94, %98 : vector<16x128xf32>
    %c8_103 = arith.constant 8 : index
    %c0_104 = arith.constant 0 : index
    %100 = vector.load %arg14[%c8_103, %c0_104] : memref<32x128xf32, #tpu.memory_space<vmem>>, vector<16x128xf32>
    %c1_105 = arith.constant 1 : index
    %c0_106 = arith.constant 0 : index
    %c0_107 = arith.constant 0 : index
    %101 = vector.load %arg7[%c1_105, %c0_106, %c0_107] : memref<3x128x128xf32, #tpu.memory_space<vmem>>, vector<1x128x128xf32>
    %102 = vector.shape_cast %101 : vector<1x128x128xf32> to vector<128x128xf32>
    %cst_108 = arith.constant dense<0.000000e+00> : vector<16x128xf32>
    %103 = tpu.matmul %100, %102, %cst_108 {dimension_numbers = #tpu.dot_dimension_numbers<[1], [0], [0], [1], [0, 0, 1, 1], [], []>} : vector<16x128xf32>, vector<128x128xf32>, vector<16x128xf32> -> vector<16x128xf32>
    %104 = arith.addf %99, %103 : vector<16x128xf32>
    %c9_109 = arith.constant 9 : index
    %c0_110 = arith.constant 0 : index
    %105 = vector.load %arg14[%c9_109, %c0_110] : memref<32x128xf32, #tpu.memory_space<vmem>>, vector<16x128xf32>
    %c2_111 = arith.constant 2 : index
    %c0_112 = arith.constant 0 : index
    %c0_113 = arith.constant 0 : index
    %106 = vector.load %arg7[%c2_111, %c0_112, %c0_113] : memref<3x128x128xf32, #tpu.memory_space<vmem>>, vector<1x128x128xf32>
    %107 = vector.shape_cast %106 : vector<1x128x128xf32> to vector<128x128xf32>
    %cst_114 = arith.constant dense<0.000000e+00> : vector<16x128xf32>
    %108 = tpu.matmul %105, %107, %cst_114 {dimension_numbers = #tpu.dot_dimension_numbers<[1], [0], [0], [1], [0, 0, 1, 1], [], []>} : vector<16x128xf32>, vector<128x128xf32>, vector<16x128xf32> -> vector<16x128xf32>
    %109 = arith.addf %104, %108 : vector<16x128xf32>
    %110 = arith.subf %92, %109 : vector<16x128xf32>
    %c0_115 = arith.constant 0 : index
    %c0_116 = arith.constant 0 : index
    %111 = vector.load %arg8[%c0_115, %c0_116] : memref<128x128xf32, #tpu.memory_space<vmem>>, vector<128x128xf32>
    %cst_117 = arith.constant dense<0.000000e+00> : vector<16x128xf32>
    %112 = tpu.matmul %110, %111, %cst_117 {dimension_numbers = #tpu.dot_dimension_numbers<[1], [0], [0], [1], [0, 0, 1, 1], [], []>} : vector<16x128xf32>, vector<128x128xf32>, vector<16x128xf32> -> vector<16x128xf32>
    %c0_118 = arith.constant 0 : index
    %c0_119 = arith.constant 0 : index
    %113 = vector.load %arg9[%c0_118, %c0_119] : memref<16x128xf32, #tpu.memory_space<vmem>>, vector<16x128xf32>
    %114 = arith.addf %112, %113 : vector<16x128xf32>
    %115 = arith.negf %114 : vector<16x128xf32>
    %116 = math.exp %115 : vector<16x128xf32>
    %cst_120 = arith.constant 1.000000e+00 : f32
    %117 = vector.broadcast %cst_120 : f32 to vector<16x128xf32>
    %118 = arith.addf %117, %116 : vector<16x128xf32>
    %119 = arith.divf %117, %118 : vector<16x128xf32>
    %120 = arith.mulf %119, %1 : vector<16x128xf32>
    %c0_121 = arith.constant 0 : index
    %c0_122 = arith.constant 0 : index
    %121 = vector.load %arg10[%c0_121, %c0_122] : memref<128x128xf32, #tpu.memory_space<vmem>>, vector<128x128xf32>
    %cst_123 = arith.constant dense<0.000000e+00> : vector<16x128xf32>
    %122 = tpu.matmul %8, %121, %cst_123 {dimension_numbers = #tpu.dot_dimension_numbers<[1], [0], [0], [1], [0, 0, 1, 1], [], []>} : vector<16x128xf32>, vector<128x128xf32>, vector<16x128xf32> -> vector<16x128xf32>
    %c0_124 = arith.constant 0 : index
    %c0_125 = arith.constant 0 : index
    %123 = vector.load %arg11[%c0_124, %c0_125] : memref<128x128xf32, #tpu.memory_space<vmem>>, vector<128x128xf32>
    %cst_126 = arith.constant dense<0.000000e+00> : vector<16x128xf32>
    %124 = tpu.matmul %120, %123, %cst_126 {dimension_numbers = #tpu.dot_dimension_numbers<[1], [0], [0], [1], [0, 0, 1, 1], [], []>} : vector<16x128xf32>, vector<128x128xf32>, vector<16x128xf32> -> vector<16x128xf32>
    %125 = arith.addf %122, %124 : vector<16x128xf32>
    %c0_127 = arith.constant 0 : index
    %c0_128 = arith.constant 0 : index
    %126 = vector.load %arg12[%c0_127, %c0_128] : memref<16x128xf32, #tpu.memory_space<vmem>>, vector<16x128xf32>
    %127 = arith.addf %125, %126 : vector<16x128xf32>
    %c0_129 = arith.constant 0 : index
    %c0_130 = arith.constant 0 : index
    %c0_131 = arith.constant 0 : index
    %128 = vector.load %arg13[%c0_129, %c0_130, %c0_131] : memref<1x16x128xf32, #tpu.memory_space<vmem>>, vector<1x16x128xf32>
    %129 = vector.shape_cast %128 : vector<1x16x128xf32> to vector<16x128xf32>
    %130 = vector.shape_cast %127 : vector<16x128xf32> to vector<1x16x128xf32>
    tpu.vector_store %arg13[%c0_129, %c0_130, %c0_131], %130 {strides = array<i32>} : memref<1x16x128xf32, #tpu.memory_space<vmem>>, vector<1x16x128xf32>,
    return
  }
  func.func @transform_0(%arg0: i32) -> (i32, i32, i32) {
    %c0_i32 = arith.constant 0 : i32
    %c0_i32_0 = arith.constant 0 : i32
    %c0_i32_1 = arith.constant 0 : i32
    return %arg0, %c0_i32, %c0_i32_0 : i32, i32, i32
  }
  func.func @transform_1(%arg0: i32) -> (i32, i32, i32) {
    %c0_i32 = arith.constant 0 : i32
    %c0_i32_0 = arith.constant 0 : i32
    %c0_i32_1 = arith.constant 0 : i32
    return %arg0, %c0_i32, %c0_i32_0 : i32, i32, i32
  }
  func.func @transform_2(%arg0: i32) -> (i32, i32) {
    %c0_i32 = arith.constant 0 : i32
    %c0_i32_0 = arith.constant 0 : i32
    %c0_i32_1 = arith.constant 0 : i32
    return %c0_i32, %c0_i32_0 : i32, i32
  }
  func.func @transform_3(%arg0: i32) -> (i32, i32) {
    %c0_i32 = arith.constant 0 : i32
    %c0_i32_0 = arith.constant 0 : i32
    %c0_i32_1 = arith.constant 0 : i32
    return %c0_i32, %c0_i32_0 : i32, i32
  }
  func.func @transform_4(%arg0: i32) -> (i32, i32, i32) {
    %c0_i32 = arith.constant 0 : i32
    %c0_i32_0 = arith.constant 0 : i32
    %c0_i32_1 = arith.constant 0 : i32
    %c0_i32_2 = arith.constant 0 : i32
    return %c0_i32, %c0_i32_0, %c0_i32_1 : i32, i32, i32
  }
  func.func @transform_5(%arg0: i32) -> (i32, i32) {
    %c0_i32 = arith.constant 0 : i32
    %c0_i32_0 = arith.constant 0 : i32
    %c0_i32_1 = arith.constant 0 : i32
    return %c0_i32, %c0_i32_0 : i32, i32
  }
  func.func @transform_6(%arg0: i32) -> (i32, i32, i32) {
    %c0_i32 = arith.constant 0 : i32
    %c0_i32_0 = arith.constant 0 : i32
    %c0_i32_1 = arith.constant 0 : i32
    %c0_i32_2 = arith.constant 0 : i32
    return %c0_i32, %c0_i32_0, %c0_i32_1 : i32, i32, i32
  }
  func.func @transform_7(%arg0: i32) -> (i32, i32) {
    %c0_i32 = arith.constant 0 : i32
    %c0_i32_0 = arith.constant 0 : i32
    %c0_i32_1 = arith.constant 0 : i32
    return %c0_i32, %c0_i32_0 : i32, i32
  }
  func.func @transform_8(%arg0: i32) -> (i32, i32) {
    %c0_i32 = arith.constant 0 : i32
    %c0_i32_0 = arith.constant 0 : i32
    %c0_i32_1 = arith.constant 0 : i32
    return %c0_i32, %c0_i32_0 : i32, i32
  }
  func.func @transform_9(%arg0: i32) -> (i32, i32) {
    %c0_i32 = arith.constant 0 : i32
    %c0_i32_0 = arith.constant 0 : i32
    %c0_i32_1 = arith.constant 0 : i32
    return %c0_i32, %c0_i32_0 : i32, i32
  }
  func.func @transform_10(%arg0: i32) -> (i32, i32) {
    %c0_i32 = arith.constant 0 : i32
    %c0_i32_0 = arith.constant 0 : i32
    %c0_i32_1 = arith.constant 0 : i32
    return %c0_i32, %c0_i32_0 : i32, i32
  }
  func.func @transform_11(%arg0: i32) -> (i32, i32) {
    %c0_i32 = arith.constant 0 : i32
    %c0_i32_0 = arith.constant 0 : i32
    %c0_i32_1 = arith.constant 0 : i32
    return %c0_i32, %c0_i32_0 : i32, i32
  }
  func.func @transform_12(%arg0: i32) -> (i32, i32, i32) {
    %c0_i32 = arith.constant 0 : i32
    %c0_i32_0 = arith.constant 0 : i32
    %c0_i32_1 = arith.constant 0 : i32
    return %arg0, %c0_i32, %c0_i32_0 : i32, i32, i32
  }
}

</mosaic_0001>

<llo_original>
// kernel: edge_enhancement_forward.2
$region0: #{edge_enhancement_forward.2}
  #allocation0 [shape = 'u32[]', space=smem, size = 0x4, offset = 0x4, fixed_abs, tag = 'smem constant byte address 0x4 - core index']
  #allocation1 [shape = 'u32[144,128]{1,0:T(1,128)}', space=vmem, size = 0x12000, scoped, tag = 'internal scratch']
  #allocation2 [shape = 'f32[32,128]{1,0:T(8,128)}', space=vmem, size = 0x4000, scoped, tag = 'scratch operand']
  %s0 = inlined_call_operand.vmem [shape: f32[2,16,128], index: 0, kind: input, shape index: {}]
  %s1 = inlined_call_operand.hbm [shape: f32[128,128], index: 1, kind: input, shape index: {}]
  %s2 = inlined_call_operand.hbm [shape: f32[16,128], index: 2, kind: input, shape index: {}]
  %s3 = inlined_call_operand.hbm [shape: f32[15,16,128], index: 3, kind: input, shape index: {}]
  %s4 = inlined_call_operand.hbm [shape: f32[16,128], index: 4, kind: input, shape index: {}]
  %s5 = inlined_call_operand.hbm [shape: f32[3,128,128], index: 5, kind: input, shape index: {}]
  %s6 = inlined_call_operand.hbm [shape: f32[16,128], index: 6, kind: input, shape index: {}]
  %s7 = inlined_call_operand.hbm [shape: f32[128,384], index: 7, kind: input, shape index: {}]
  %s8 = inlined_call_operand.hbm [shape: f32[16,384], index: 8, kind: input, shape index: {}]
  %s9 = inlined_call_operand.vmem [shape: f32[2,16,384], index: 9, kind: output, shape index: {}]
  %s10 = sld [smem:[#allocation0]]
  $region101: #{edge_enhancement_forward.2} parent=0
    _
  %s12 = ssub.s32 1, %s10
  %s13 = scalar_select 0, %s12, %s10
  $region1: #{edge_enhancement_forward.2} parent=0
    #allocation3 [shape = 'u8[65536]{0}', space=vmem, size = 0x10000, scoped, tag = 'input window, operand 1, single buffered']
    #allocation4 [shape = 's32[2]{0}', space=sflag, size = 0x8, scoped, tag = 'scoped memory for edge_enhancement_forward.2']
    #allocation5 [shape = 'u8[8192]{0}', space=vmem, size = 0x2000, scoped, tag = 'input window, operand 2, single buffered']
    #allocation6 [shape = 's32[1]{0}', space=sflag, size = 0x4, scoped, tag = 'scoped memory for edge_enhancement_forward.2']
    #allocation7 [shape = 'u8[122880]{0}', space=vmem, size = 0x1e000, scoped, tag = 'input window, operand 3, single buffered']
    #allocation8 [shape = 'u8[8192]{0}', space=vmem, size = 0x2000, scoped, tag = 'input window, operand 4, single buffered']
    #allocation9 [shape = 's32[1]{0}', space=sflag, size = 0x4, scoped, tag = 'scoped memory for edge_enhancement_forward.2']
    #allocation10 [shape = 'u8[196608]{0}', space=vmem, size = 0x30000, scoped, tag = 'input window, operand 5, single buffered']
    #allocation11 [shape = 'u8[8192]{0}', space=vmem, size = 0x2000, scoped, tag = 'input window, operand 6, single buffered']
    #allocation12 [shape = 's32[1]{0}', space=sflag, size = 0x4, scoped, tag = 'scoped memory for edge_enhancement_forward.2']
    #allocation13 [shape = 'u8[196608]{0}', space=vmem, size = 0x30000, scoped, tag = 'input window, operand 7, single buffered']
    #allocation14 [shape = 'u8[24576]{0}', space=vmem, size = 0x6000, scoped, tag = 'input window, operand 8, single buffered']
    #allocation15 [shape = 's32[1]{0}', space=sflag, size = 0x4, scoped, tag = 'scoped memory for edge_enhancement_forward.2']
    %14 = vsyncpa [#allocation4], 0
    %15 = vsyncpa [#allocation6], 0
    %16 = vsyncpa [#allocation9], 0
    %17 = vsyncpa [#allocation12], 0
    %18 = vsyncpa [#allocation15], 0
    loop: start=0, step=1, limit=4
    $region2: #{edge_enhancement_forward.2} parent=1 // loop_pre_header
      _
    $region3: #{edge_enhancement_forward.2} parent=1 // loop_header
      %s20 = sphi 0, %s24
      %p21 = scmp.ge.s32.totalorder %s20, 4
      %s30 = sphi 0, %s32
      %s33 = sphi 0, %s30
      %s34 = sphi 0, %s33
      %s50 = sphi 0, %s34
      %s54 = sphi 0, %s54
      %s56 = sphi 0, %s54
      %s57 = sphi 0, %s56
      %s71 = sphi 0, %s57
      %s75 = sphi 0, %s75
      %s77 = sphi 0, %s75
      %s78 = sphi 0, %s77
      %s92 = sphi 0, %s78
      %s96 = sphi 0, %s96
      %s98 = sphi 0, %s96
      %s99 = sphi 0, %s98
      %s113 = sphi 0, %s99
      %s117 = sphi 0, %s117
      %s119 = sphi 0, %s117
      %s120 = sphi 0, %s119
      %s134 = sphi 0, %s120
      %s138 = sphi 0, %s138
      %s140 = sphi 0, %s138
      %s141 = sphi 0, %s140
      %s155 = sphi 0, %s141
      %s159 = sphi 0, %s159
      %s161 = sphi 0, %s159
      %s162 = sphi 0, %s161
      %s176 = sphi 0, %s162
      %s180 = sphi 0, %s180
      %s182 = sphi 0, %s180
      %s183 = sphi 0, %s182
      %s197 = sphi 0, %s183
      %s201 = sphi 0, %s201
      %s203 = sphi 0, %s201
      %s204 = sphi 0, %s203
      %s218 = sphi 0, %s204
      %s224 = sphi 0, %s226
      %s227 = sphi 0, %s224
      %s228 = sphi 0, %s227
      %s244 = sphi 0, %s228
    $region4: #{edge_enhancement_forward.2} parent=1 // loop_header_branch
      %23 = sbr.rel (%p21) target = $region8
    $region5: #{edge_enhancement_forward.2} parent=1 // loop_body
      %s25 = ssub.s32 %s20, 1
      %s26 = ssub.s32 %s20, 2
      %s27 = sadd.s32 %s20, 1
      %s28 = ssub.s32 %s20, %s27
      %p29 = scmp.eq.s32.totalorder %s28, 0
      %s31 = sadd.s32 %s30, 1
      %s32 = scalar_select %p29, %s30, %s31
      %p35 = pneg %p29
      %p36 = scmp.eq.s32.totalorder %s20, 1
      %p37 = por %p35, %p36
      %p38 = scmp.ne.s32.totalorder %s30, %s33
      %p39 = scmp.eq.s32.totalorder %s20, 0
      %p40 = por %p38, %p39
      %p41 = scmp.ne.s32.totalorder %s30, %s33
      %p42 = scmp.eq.s32.totalorder %s25, 1
      %p43 = por %p41, %p42
      %p44 = scmp.ne.s32.totalorder %s33, %s34
      %p45 = scmp.eq.s32.totalorder %s25, 0
      %p46 = por %p44, %p45
      %p47 = scmp.ne.s32.totalorder %s33, %s34
      %p48 = scmp.eq.s32.totalorder %s26, 1
      %p49 = por %p47, %p48
      %p51 = scmp.ne.s32.totalorder %s34, %s50
      %p52 = scmp.eq.s32.totalorder %s26, 0
      %p53 = por %p51, %p52
      %s55 = sadd.s32 %s54, 1
      %p58 = scmp.eq.s32.totalorder %s20, 1
      %p59 = scmp.ne.s32.totalorder %s54, %s56
      %p60 = scmp.eq.s32.totalorder %s20, 0
      %p61 = por %p59, %p60
      %p62 = scmp.ne.s32.totalorder %s54, %s56
      %p63 = scmp.eq.s32.totalorder %s25, 1
      %p64 = por %p62, %p63
      %p65 = scmp.ne.s32.totalorder %s56, %s57
      %p66 = scmp.eq.s32.totalorder %s25, 0
      %p67 = por %p65, %p66
      %p68 = scmp.ne.s32.totalorder %s56, %s57
      %p69 = scmp.eq.s32.totalorder %s26, 1
      %p70 = por %p68, %p69
      %p72 = scmp.ne.s32.totalorder %s57, %s71
      %p73 = scmp.eq.s32.totalorder %s26, 0
      %p74 = por %p72, %p73
      %s76 = sadd.s32 %s75, 1
      %p79 = scmp.eq.s32.totalorder %s20, 1
      %p80 = scmp.ne.s32.totalorder %s75, %s77
      %p81 = scmp.eq.s32.totalorder %s20, 0
      %p82 = por %p80, %p81
      %p83 = scmp.ne.s32.totalorder %s75, %s77
      %p84 = scmp.eq.s32.totalorder %s25, 1
      %p85 = por %p83, %p84
      %p86 = scmp.ne.s32.totalorder %s77, %s78
      %p87 = scmp.eq.s32.totalorder %s25, 0
      %p88 = por %p86, %p87
      %p89 = scmp.ne.s32.totalorder %s77, %s78
      %p90 = scmp.eq.s32.totalorder %s26, 1
      %p91 = por %p89, %p90
      %p93 = scmp.ne.s32.totalorder %s78, %s92
      %p94 = scmp.eq.s32.totalorder %s26, 0
      %p95 = por %p93, %p94
      %s97 = sadd.s32 %s96, 1
      %p100 = scmp.eq.s32.totalorder %s20, 1
      %p101 = scmp.ne.s32.totalorder %s96, %s98
      %p102 = scmp.eq.s32.totalorder %s20, 0
      %p103 = por %p101, %p102
      %p104 = scmp.ne.s32.totalorder %s96, %s98
      %p105 = scmp.eq.s32.totalorder %s25, 1
      %p106 = por %p104, %p105
      %p107 = scmp.ne.s32.totalorder %s98, %s99
      %p108 = scmp.eq.s32.totalorder %s25, 0
      %p109 = por %p107, %p108
      %p110 = scmp.ne.s32.totalorder %s98, %s99
      %p111 = scmp.eq.s32.totalorder %s26, 1
      %p112 = por %p110, %p111
      %p114 = scmp.ne.s32.totalorder %s99, %s113
      %p115 = scmp.eq.s32.totalorder %s26, 0
      %p116 = por %p114, %p115
      %s118 = sadd.s32 %s117, 1
      %p121 = scmp.eq.s32.totalorder %s20, 1
      %p122 = scmp.ne.s32.totalorder %s117, %s119
      %p123 = scmp.eq.s32.totalorder %s20, 0
      %p124 = por %p122, %p123
      %p125 = scmp.ne.s32.totalorder %s117, %s119
      %p126 = scmp.eq.s32.totalorder %s25, 1
      %p127 = por %p125, %p126
      %p128 = scmp.ne.s32.totalorder %s119, %s120
      %p129 = scmp.eq.s32.totalorder %s25, 0
      %p130 = por %p128, %p129
      %p131 = scmp.ne.s32.totalorder %s119, %s120
      %p132 = scmp.eq.s32.totalorder %s26, 1
      %p133 = por %p131, %p132
      %p135 = scmp.ne.s32.totalorder %s120, %s134
      %p136 = scmp.eq.s32.totalorder %s26, 0
      %p137 = por %p135, %p136
      %s139 = sadd.s32 %s138, 1
      %p142 = scmp.eq.s32.totalorder %s20, 1
      %p143 = scmp.ne.s32.totalorder %s138, %s140
      %p144 = scmp.eq.s32.totalorder %s20, 0
      %p145 = por %p143, %p144
      %p146 = scmp.ne.s32.totalorder %s138, %s140
      %p147 = scmp.eq.s32.totalorder %s25, 1
      %p148 = por %p146, %p147
      %p149 = scmp.ne.s32.totalorder %s140, %s141
      %p150 = scmp.eq.s32.totalorder %s25, 0
      %p151 = por %p149, %p150
      %p152 = scmp.ne.s32.totalorder %s140, %s141
      %p153 = scmp.eq.s32.totalorder %s26, 1
      %p154 = por %p152, %p153
      %p156 = scmp.ne.s32.totalorder %s141, %s155
      %p157 = scmp.eq.s32.totalorder %s26, 0
      %p158 = por %p156, %p157
      %s160 = sadd.s32 %s159, 1
      %p163 = scmp.eq.s32.totalorder %s20, 1
      %p164 = scmp.ne.s32.totalorder %s159, %s161
      %p165 = scmp.eq.s32.totalorder %s20, 0
      %p166 = por %p164, %p165
      %p167 = scmp.ne.s32.totalorder %s159, %s161
      %p168 = scmp.eq.s32.totalorder %s25, 1
      %p169 = por %p167, %p168
      %p170 = scmp.ne.s32.totalorder %s161, %s162
      %p171 = scmp.eq.s32.totalorder %s25, 0
      %p172 = por %p170, %p171
      %p173 = scmp.ne.s32.totalorder %s161, %s162
      %p174 = scmp.eq.s32.totalorder %s26, 1
      %p175 = por %p173, %p174
      %p177 = scmp.ne.s32.totalorder %s162, %s176
      %p178 = scmp.eq.s32.totalorder %s26, 0
      %p179 = por %p177, %p178
      %s181 = sadd.s32 %s180, 1
      %p184 = scmp.eq.s32.totalorder %s20, 1
      %p185 = scmp.ne.s32.totalorder %s180, %s182
      %p186 = scmp.eq.s32.totalorder %s20, 0
      %p187 = por %p185, %p186
      %p188 = scmp.ne.s32.totalorder %s180, %s182
      %p189 = scmp.eq.s32.totalorder %s25, 1
      %p190 = por %p188, %p189
      %p191 = scmp.ne.s32.totalorder %s182, %s183
      %p192 = scmp.eq.s32.totalorder %s25, 0
      %p193 = por %p191, %p192
      %p194 = scmp.ne.s32.totalorder %s182, %s183
      %p195 = scmp.eq.s32.totalorder %s26, 1
      %p196 = por %p194, %p195
      %p198 = scmp.ne.s32.totalorder %s183, %s197
      %p199 = scmp.eq.s32.totalorder %s26, 0
      %p200 = por %p198, %p199
      %s202 = sadd.s32 %s201, 1
      %p205 = scmp.eq.s32.totalorder %s20, 1
      %p206 = scmp.ne.s32.totalorder %s201, %s203
      %p207 = scmp.eq.s32.totalorder %s20, 0
      %p208 = por %p206, %p207
      %p209 = scmp.ne.s32.totalorder %s201, %s203
      %p210 = scmp.eq.s32.totalorder %s25, 1
      %p211 = por %p209, %p210
      %p212 = scmp.ne.s32.totalorder %s203, %s204
      %p213 = scmp.eq.s32.totalorder %s25, 0
      %p214 = por %p212, %p213
      %p215 = scmp.ne.s32.totalorder %s203, %s204
      %p216 = scmp.eq.s32.totalorder %s26, 1
      %p217 = por %p215, %p216
      %p219 = scmp.ne.s32.totalorder %s204, %s218
      %p220 = scmp.eq.s32.totalorder %s26, 0
      %p221 = por %p219, %p220
      %s222 = ssub.s32 %s20, %s27
      %p223 = scmp.eq.s32.totalorder %s222, 0
      %s225 = sadd.s32 %s224, 1
      %s226 = scalar_select %p223, %s224, %s225
      %p229 = pneg %p223
      %p230 = scmp.eq.s32.totalorder %s20, 1
      %p231 = por %p229, %p230
      %p232 = scmp.ne.s32.totalorder %s224, %s227
      %p233 = scmp.eq.s32.totalorder %s20, 0
      %p234 = por %p232, %p233
      %p235 = scmp.ne.s32.totalorder %s224, %s227
      %p236 = scmp.eq.s32.totalorder %s25, 1
      %p237 = por %p235, %p236
      %p238 = scmp.ne.s32.totalorder %s227, %s228
      %p239 = scmp.eq.s32.totalorder %s25, 0
      %p240 = por %p238, %p239
      %p241 = scmp.ne.s32.totalorder %s227, %s228
      %p242 = scmp.eq.s32.totalorder %s26, 1
      %p243 = por %p241, %p242
      %p245 = scmp.ne.s32.totalorder %s228, %s244
      %p246 = scmp.eq.s32.totalorder %s26, 0
      %p247 = por %p245, %p246
      %p248 = scmp.le.s32.totalorder 1, %s20
      %p249 = scmp.lt.s32.totalorder %s20, 3
      %p250 = pnand %p248, %p249
      %p251 = pneg %p250
      // Predicated region
      $region9: #{edge_enhancement_forward.2} parent=5 // pred_check
        _
      $region10: #{edge_enhancement_forward.2} parent=5 // pred_check_branch
        %253 = sbr.rel (%p250) target = $region12
      $region11: #{edge_enhancement_forward.2} parent=5 // pred_region
        %s254 = ssub.s32 %s20, 1
        // Predicated region
        $region13: #{edge_enhancement_forward.2} parent=11 // pred_check
          %p255 = pneg %p67
        $region14: #{edge_enhancement_forward.2} parent=11 // pred_check_branch
          %257 = sbr.rel (%p255) target = $region16
        $region15: #{edge_enhancement_forward.2} parent=11 // pred_region
          %s259 = ssub.s32 2048, 2048
          %260 = vsyncadd [#allocation4], %s259
          %s261 = sshll.u32 [#allocation3], 4
          %s262 = int_to_ptr.vmem [resolvable:$true] %s261
          %267 = dma.hbm_to_vmem [thread:$0]  %s1, 2048, %s262, [#allocation4], 128, 128, 8
        $region16: #{edge_enhancement_forward.2} parent=11 // pred_fallthru
          _
        // Predicated region
        $region17: #{edge_enhancement_forward.2} parent=11 // pred_check
          %p268 = pneg %p88
        $region18: #{edge_enhancement_forward.2} parent=11 // pred_check_branch
          %270 = sbr.rel (%p268) target = $region20
        $region19: #{edge_enhancement_forward.2} parent=11 // pred_region
          %s272 = ssub.s32 256, 256
          %273 = vsyncadd [#allocation6], %s272
          %s274 = sshll.u32 [#allocation5], 4
          %s275 = int_to_ptr.vmem [resolvable:$true] %s274
          %280 = dma.hbm_to_vmem [thread:$0]  %s2, 256, %s275, [#allocation6], 128, 128, 8
        $region20: #{edge_enhancement_forward.2} parent=11 // pred_fallthru
          _
        // Predicated region
        $region21: #{edge_enhancement_forward.2} parent=11 // pred_check
          %p281 = pneg %p109
        $region22: #{edge_enhancement_forward.2} parent=11 // pred_check_branch
          %283 = sbr.rel (%p281) target = $region24
        $region23: #{edge_enhancement_forward.2} parent=11 // pred_region
          %s285 = ssub.s32 3840, 3840
          %286 = vsyncadd [#allocation6], %s285
          %s287 = sshll.u32 [#allocation7], 4
          %s288 = int_to_ptr.vmem [resolvable:$true] %s287
          %293 = dma.hbm_to_vmem [thread:$0]  %s3, 3840, %s288, [#allocation6], 128, 128, 8
        $region24: #{edge_enhancement_forward.2} parent=11 // pred_fallthru
          _
        // Predicated region
        $region25: #{edge_enhancement_forward.2} parent=11 // pred_check
          %p294 = pneg %p130
        $region26: #{edge_enhancement_forward.2} parent=11 // pred_check_branch
          %296 = sbr.rel (%p294) target = $region28
        $region27: #{edge_enhancement_forward.2} parent=11 // pred_region
          %s298 = ssub.s32 256, 256
          %299 = vsyncadd [#allocation9], %s298
          %s300 = sshll.u32 [#allocation8], 4
          %s301 = int_to_ptr.vmem [resolvable:$true] %s300
          %306 = dma.hbm_to_vmem [thread:$0]  %s4, 256, %s301, [#allocation9], 128, 128, 8
        $region28: #{edge_enhancement_forward.2} parent=11 // pred_fallthru
          _
        // Predicated region
        $region29: #{edge_enhancement_forward.2} parent=11 // pred_check
          %p307 = pneg %p151
        $region30: #{edge_enhancement_forward.2} parent=11 // pred_check_branch
          %309 = sbr.rel (%p307) target = $region32
        $region31: #{edge_enhancement_forward.2} parent=11 // pred_region
          %s311 = ssub.s32 6144, 6144
          %312 = vsyncadd [#allocation9], %s311
          %s313 = sshll.u32 [#allocation10], 4
          %s314 = int_to_ptr.vmem [resolvable:$true] %s313
          %319 = dma.hbm_to_vmem [thread:$0]  %s5, 6144, %s314, [#allocation9], 128, 128, 8
        $region32: #{edge_enhancement_forward.2} parent=11 // pred_fallthru
          _
        // Predicated region
        $region33: #{edge_enhancement_forward.2} parent=11 // pred_check
          %p320 = pneg %p172
        $region34: #{edge_enhancement_forward.2} parent=11 // pred_check_branch
          %322 = sbr.rel (%p320) target = $region36
        $region35: #{edge_enhancement_forward.2} parent=11 // pred_region
          %s324 = ssub.s32 256, 256
          %325 = vsyncadd [#allocation12], %s324
          %s326 = sshll.u32 [#allocation11], 4
          %s327 = int_to_ptr.vmem [resolvable:$true] %s326
          %332 = dma.hbm_to_vmem [thread:$0]  %s6, 256, %s327, [#allocation12], 128, 128, 8
        $region36: #{edge_enhancement_forward.2} parent=11 // pred_fallthru
          _
        // Predicated region
        $region37: #{edge_enhancement_forward.2} parent=11 // pred_check
          %p333 = pneg %p193
        $region38: #{edge_enhancement_forward.2} parent=11 // pred_check_branch
          %335 = sbr.rel (%p333) target = $region40
        $region39: #{edge_enhancement_forward.2} parent=11 // pred_region
          %s337 = ssub.s32 6144, 6144
          %338 = vsyncadd [#allocation12], %s337
          %s339 = sshll.u32 [#allocation13], 4
          %s340 = int_to_ptr.vmem [resolvable:$true] %s339
          %345 = dma.hbm_to_vmem [thread:$0]  %s7, 6144, %s340, [#allocation12], 384, 384, 24
        $region40: #{edge_enhancement_forward.2} parent=11 // pred_fallthru
          _
        // Predicated region
        $region41: #{edge_enhancement_forward.2} parent=11 // pred_check
          %p346 = pneg %p214
        $region42: #{edge_enhancement_forward.2} parent=11 // pred_check_branch
          %348 = sbr.rel (%p346) target = $region44
        $region43: #{edge_enhancement_forward.2} parent=11 // pred_region
          %s350 = ssub.s32 768, 768
          %351 = vsyncadd [#allocation15], %s350
          %s352 = sshll.u32 [#allocation14], 4
          %s353 = int_to_ptr.vmem [resolvable:$true] %s352
          %358 = dma.hbm_to_vmem [thread:$0]  %s8, 768, %s353, [#allocation15], 384, 384, 24
        $region44: #{edge_enhancement_forward.2} parent=11 // pred_fallthru
          _
      $region12: #{edge_enhancement_forward.2} parent=5 // pred_fallthru
        _
      %p359 = scmp.lt.s32.totalorder %s20, 2
      // Predicated region
      $region45: #{edge_enhancement_forward.2} parent=5 // pred_check
        %p360 = pneg %p359
      $region46: #{edge_enhancement_forward.2} parent=5 // pred_check_branch
        %362 = sbr.rel (%p360) target = $region48
      $region47: #{edge_enhancement_forward.2} parent=5 // pred_region
        // Predicated region
        $region49: #{edge_enhancement_forward.2} parent=47 // pred_check
          %p363 = pneg %p40
        $region50: #{edge_enhancement_forward.2} parent=47 // pred_check_branch
          %365 = sbr.rel (%p363) target = $region52
        $region51: #{edge_enhancement_forward.2} parent=47 // pred_region
          %p366 = scmp.lt.s32.totalorder %s20, 1
          %s367 = scalar_select %p366, %s20, 1
          %s368 = smul.addr %s367, 2
          %s369 = smul.addr %s368, 8
          %s370 = scalar_lea.vmem %s0, %s369
        $region52: #{edge_enhancement_forward.2} parent=47 // pred_fallthru
          _
      $region48: #{edge_enhancement_forward.2} parent=5 // pred_fallthru
        _
      %p371 = scmp.le.s32.totalorder 1, %s20
      %p372 = scmp.lt.s32.totalorder %s20, 3
      %p373 = pnand %p371, %p372
      %p374 = pneg %p373
      // Predicated region
      $region53: #{edge_enhancement_forward.2} parent=5 // pred_check
        _
      $region54: #{edge_enhancement_forward.2} parent=5 // pred_check_branch
        %376 = sbr.rel (%p373) target = $region56
      $region55: #{edge_enhancement_forward.2} parent=5 // pred_region
        %s377 = ssub.s32 %s20, 1
        // Predicated region
        $region57: #{edge_enhancement_forward.2} parent=55 // pred_check
          %p378 = pneg %p67
        $region58: #{edge_enhancement_forward.2} parent=55 // pred_check_branch
          %380 = sbr.rel (%p378) target = $region60
        $region59: #{edge_enhancement_forward.2} parent=55 // pred_region
          %381 = dma.done [#allocation4], 2048
        $region60: #{edge_enhancement_forward.2} parent=55 // pred_fallthru
          _
        // Predicated region
        $region61: #{edge_enhancement_forward.2} parent=55 // pred_check
          %p382 = pneg %p88
        $region62: #{edge_enhancement_forward.2} parent=55 // pred_check_branch
          %384 = sbr.rel (%p382) target = $region64
        $region63: #{edge_enhancement_forward.2} parent=55 // pred_region
          %385 = dma.done [#allocation6], 256
        $region64: #{edge_enhancement_forward.2} parent=55 // pred_fallthru
          _
        // Predicated region
        $region65: #{edge_enhancement_forward.2} parent=55 // pred_check
          %p386 = pneg %p109
        $region66: #{edge_enhancement_forward.2} parent=55 // pred_check_branch
          %388 = sbr.rel (%p386) target = $region68
        $region67: #{edge_enhancement_forward.2} parent=55 // pred_region
          %389 = dma.done [#allocation6], 3840
        $region68: #{edge_enhancement_forward.2} parent=55 // pred_fallthru
          _
        // Predicated region
        $region69: #{edge_enhancement_forward.2} parent=55 // pred_check
          %p390 = pneg %p130
        $region70: #{edge_enhancement_forward.2} parent=55 // pred_check_branch
          %392 = sbr.rel (%p390) target = $region72
        $region71: #{edge_enhancement_forward.2} parent=55 // pred_region
          %393 = dma.done [#allocation9], 256
        $region72: #{edge_enhancement_forward.2} parent=55 // pred_fallthru
          _
        // Predicated region
        $region73: #{edge_enhancement_forward.2} parent=55 // pred_check
          %p394 = pneg %p151
        $region74: #{edge_enhancement_forward.2} parent=55 // pred_check_branch
          %396 = sbr.rel (%p394) target = $region76
        $region75: #{edge_enhancement_forward.2} parent=55 // pred_region
          %397 = dma.done [#allocation9], 6144
        $region76: #{edge_enhancement_forward.2} parent=55 // pred_fallthru
          _
        // Predicated region
        $region77: #{edge_enhancement_forward.2} parent=55 // pred_check
          %p398 = pneg %p172
        $region78: #{edge_enhancement_forward.2} parent=55 // pred_check_branch
          %400 = sbr.rel (%p398) target = $region80
        $region79: #{edge_enhancement_forward.2} parent=55 // pred_region
          %401 = dma.done [#allocation12], 256
        $region80: #{edge_enhancement_forward.2} parent=55 // pred_fallthru
          _
        // Predicated region
        $region81: #{edge_enhancement_forward.2} parent=55 // pred_check
          %p402 = pneg %p193
        $region82: #{edge_enhancement_forward.2} parent=55 // pred_check_branch
          %404 = sbr.rel (%p402) target = $region84
        $region83: #{edge_enhancement_forward.2} parent=55 // pred_region
          %405 = dma.done [#allocation12], 6144
        $region84: #{edge_enhancement_forward.2} parent=55 // pred_fallthru
          _
        // Predicated region
        $region85: #{edge_enhancement_forward.2} parent=55 // pred_check
          %p406 = pneg %p214
        $region86: #{edge_enhancement_forward.2} parent=55 // pred_check_branch
          %408 = sbr.rel (%p406) target = $region88
        $region87: #{edge_enhancement_forward.2} parent=55 // pred_region
          %409 = dma.done [#allocation15], 768
        $region88: #{edge_enhancement_forward.2} parent=55 // pred_fallthru
          _
        %p410 = scmp.lt.s32.totalorder %s25, 1
        %s411 = scalar_select %p410, %s25, 1
        %s412 = smul.addr %s411, 2
        %s413 = smul.addr %s412, 8
        %s414 = scalar_lea.vmem %s0, %s413
        %p415 = pneg %p46
        %p416 = pneg %p43
        %p417 = pneg %p67
        %p418 = pneg %p64
        %p419 = pneg %p88
        %p420 = pneg %p85
        %p421 = pneg %p109
        %p422 = pneg %p106
        %p423 = pneg %p130
        %p424 = pneg %p127
        %p425 = pneg %p151
        %p426 = pneg %p148
        %p427 = pneg %p172
        %p428 = pneg %p169
        %p429 = pneg %p193
        %p430 = pneg %p190
        %p431 = pneg %p214
        %p432 = pneg %p211
        %p433 = pneg %p240
        %p434 = pneg %p237
        %p435 = scmp.lt.s32.totalorder %s25, 1
        %s436 = scalar_select %p435, %s25, 1
        %s437 = smul.addr %s436, 6
        %s438 = smul.addr %s437, 8
        %s439 = scalar_lea.vmem %s9, %s438
        %p440 = scmp.lt.s32.totalorder %s25, 1
        %s441 = scalar_select %p440, %s25, 1
        %s442 = smul.addr %s441, 2
        %s443 = smul.addr %s442, 8
        %s444 = scalar_lea.vmem %s0, %s443
        %p445 = scmp.lt.s32.totalorder %s25, 1
        %s446 = scalar_select %p445, %s25, 1
        %s447 = smul.addr %s446, 6
        %s448 = smul.addr %s447, 8
        %s449 = scalar_lea.vmem %s9, %s448
        %v450 = vld [vmem:[%s444] sm:$0xff]
        %v451 = vld [vmem:[%s444 + $0x8] sm:$0xff]
        %452 = vst [vmem:[#allocation2] sm:$0xff] 0.0
        %453 = vst [vmem:[#allocation2 + $0x18] sm:$0xff] 0.0
        %454 = vst [vmem:[#allocation2 + $0x8] sm:$0xff] %v450
        %455 = vst [vmem:[#allocation2 + $0x10] sm:$0xff] %v451
        %v456 = vld [vmem:[#allocation3] sm:$0xff]
        %v457 = vld [vmem:[#allocation3 + $0x8] sm:$0xff]
        %v458 = vld [vmem:[#allocation3 + $0x10] sm:$0xff]
        %v459 = vld [vmem:[#allocation3 + $0x18] sm:$0xff]
        %v460 = vld [vmem:[#allocation3 + $0x20] sm:$0xff]
        %v461 = vld [vmem:[#allocation3 + $0x28] sm:$0xff]
        %v462 = vld [vmem:[#allocation3 + $0x30] sm:$0xff]
        %v463 = vld [vmem:[#allocation3 + $0x38] sm:$0xff]
        %v464 = vld [vmem:[#allocation3 + $0x40] sm:$0xff]
        %v465 = vld [vmem:[#allocation3 + $0x48] sm:$0xff]
        %v466 = vld [vmem:[#allocation3 + $0x50] sm:$0xff]
        %v467 = vld [vmem:[#allocation3 + $0x58] sm:$0xff]
        %v468 = vld [vmem:[#allocation3 + $0x60] sm:$0xff]
        %v469 = vld [vmem:[#allocation3 + $0x68] sm:$0xff]
        %v470 = vld [vmem:[#allocation3 + $0x70] sm:$0xff]
        %v471 = vld [vmem:[#allocation3 + $0x78] sm:$0xff]
        %v472 = vld [vmem:[#allocation5] sm:$0xff]
        %v473 = vld [vmem:[#allocation5 + $0x8] sm:$0xff]
        %474 = vmatprep.subr.mxu0 0.0
        %475 = vmatpush1.msra.mxu0 %v456
        %476 = vmatprep.subr.mxu0 0.0
        %477 = vmatpush1.msra.mxu0 %v457
        %478 = vmatprep.subr.mxu0 0.0
        %479 = vmatpush1.msra.mxu0 %v458
        %480 = vmatprep.subr.mxu0 0.0
        %481 = vmatpush1.msra.mxu0 %v459
        %482 = vmatprep.subr.mxu0 0.0
        %483 = vmatpush1.msra.mxu0 %v460
        %484 = vmatprep.subr.mxu0 0.0
        %485 = vmatpush1.msra.mxu0 %v461
        %486 = vmatprep.subr.mxu0 0.0
        %487 = vmatpush1.msra.mxu0 %v462
        %488 = vmatprep.subr.mxu0 0.0
        %489 = vmatpush1.msra.mxu0 %v463
        %490 = vmatprep.subr.mxu0 0.0
        %491 = vmatpush1.msra.mxu0 %v464
        %492 = vmatprep.subr.mxu0 0.0
        %493 = vmatpush1.msra.mxu0 %v465
        %494 = vmatprep.subr.mxu0 0.0
        %495 = vmatpush1.msra.mxu0 %v466
        %496 = vmatprep.subr.mxu0 0.0
        %497 = vmatpush1.msra.mxu0 %v467
        %498 = vmatprep.subr.mxu0 0.0
        %499 = vmatpush1.msra.mxu0 %v468
        %500 = vmatprep.subr.mxu0 0.0
        %501 = vmatpush1.msra.mxu0 %v469
        %502 = vmatprep.subr.mxu0 0.0
        %503 = vmatpush1.msra.mxu0 %v470
        %504 = vmatprep.subr.mxu0 0.0
        %505 = vmatpush1.msra.mxu0 %v471
        %506 = vmatprep.subr.mxu0 0.0
        %507 = vmatpush1.msra.mxu0 0.0
        %508 = vmatprep.subr.mxu0 0.0
        %509 = vmatpush1.msra.mxu0 0.0
        %510 = vmatprep.subr.mxu0 0.0
        %511 = vmatpush1.msra.mxu0 0.0
        %512 = vmatprep.subr.mxu0 0.0
        %513 = vmatpush1.msra.mxu0 0.0
        %514 = vmatprep.subr.mxu0 0.0
        %515 = vmatpush1.msra.mxu0 0.0
        %516 = vmatprep.subr.mxu0 0.0
        %517 = vmatpush1.msra.mxu0 0.0
        %518 = vmatprep.subr.mxu0 0.0
        %519 = vmatpush1.msra.mxu0 0.0
        %520 = vmatprep.subr.mxu0 0.0
        %521 = vmatpush1.msra.mxu0 0.0
        %522 = vmatprep.subr.mxu0 0.0
        %523 = vmatpush1.msra.mxu0 0.0
        %524 = vmatprep.subr.mxu0 0.0
        %525 = vmatpush1.msra.mxu0 0.0
        %526 = vmatprep.subr.mxu0 0.0
        %527 = vmatpush1.msra.mxu0 0.0
        %528 = vmatprep.subr.mxu0 0.0
        %529 = vmatpush1.msra.mxu0 0.0
        %530 = vmatprep.subr.mxu0 0.0
        %531 = vmatpush1.msra.mxu0 0.0
        %532 = vmatprep.subr.mxu0 0.0
        %533 = vmatpush1.msra.mxu0 0.0
        %534 = vmatprep.subr.mxu0 0.0
        %535 = vmatpush1.msra.mxu0 0.0
        %536 = vmatprep.subr.mxu0 0.0
        %537 = vmatpush1.msra.mxu0 0.0
        %538 = vmatprep.mubr.f32.mxu0 0.0
        %539 = vmatmul.mubr.f32.gmra.mrb[0].mxu0 %v450
        %v540 = vpop.f32.mrb[0].mxu0
        %v541 = vadd.f32 %v472, %v540
        %v542 = vpop.f32.mrb[0].mxu0
        %543 = vmatprep.mubr.f32.mxu0 0.0
        %544 = vmatmul.mubr.f32.gmra.mrb[0].mxu0 %v451
        %v545 = vpop.f32.mrb[0].mxu0
        %v546 = vadd.f32 %v473, %v545
        %v547 = vpop.f32.mrb[0].mxu0
        %548 = vdwg.mxu0
        %v549 = vxor.u32 %v541, 2147483648
        %v550 = vxor.u32 %v546, 2147483648
        %v551 = vmul.f32 %v549, 1.442695
        %v552 = vpow.pop %v551
        %v553 = vmul.f32 %v550, 1.442695
        %v554 = vpow.pop %v553
        %v555 = vadd.f32 %v552, 1.0
        %v556 = vadd.f32 %v554, 1.0
        %v557 = vrcp.pop %v555
        %v558 = vmul.f32 1.0, %v557
        %v559 = vrcp.pop %v556
        %v560 = vmul.f32 1.0, %v559
        %v561 = vmul.f32 %v558, %v450
        %v562 = vmul.f32 %v560, %v451
        %v563 = vld [vmem:[#allocation2 + $0x1] sm:$0xff]
        %v564 = vld [vmem:[#allocation2 + $0x9] sm:$0xff]
        %v565 = vld [vmem:[#allocation7] sm:$0xff]
        %v566 = vld [vmem:[#allocation7 + $0x8] sm:$0xff]
        %v567 = vmul.f32 %v563, %v565
        %v568 = vmul.f32 %v564, %v566
        %v569 = vadd.f32 %v567, 0.0
        %v570 = vadd.f32 %v568, 0.0
        %v571 = vld [vmem:[#allocation2 + $0x2] sm:$0xff]
        %v572 = vld [vmem:[#allocation2 + $0xa] sm:$0xff]
        %s573 = scalar_lea.vmem [#allocation7], 16
        %v574 = vld [vmem:[%s573] sm:$0xff]
        %v575 = vld [vmem:[%s573 + $0x8] sm:$0xff]
        %v576 = vmul.f32 %v571, %v574
        %v577 = vmul.f32 %v572, %v575
        %v578 = vadd.f32 %v576, 0.0
        %v579 = vadd.f32 %v577, 0.0
        %v580 = vld [vmem:[#allocation2 + $0x3] sm:$0xff]
        %v581 = vld [vmem:[#allocation2 + $0xb] sm:$0xff]
        %s582 = scalar_lea.vmem [#allocation7], 32
        %v583 = vld [vmem:[%s582] sm:$0xff]
        %v584 = vld [vmem:[%s582 + $0x8] sm:$0xff]
        %v585 = vmul.f32 %v580, %v583
        %v586 = vmul.f32 %v581, %v584
        %v587 = vadd.f32 %v569, %v585
        %v588 = vadd.f32 %v570, %v586
        %v589 = vld [vmem:[#allocation2 + $0x4] sm:$0xff]
        %v590 = vld [vmem:[#allocation2 + $0xc] sm:$0xff]
        %s591 = scalar_lea.vmem [#allocation7], 48
        %v592 = vld [vmem:[%s591] sm:$0xff]
        %v593 = vld [vmem:[%s591 + $0x8] sm:$0xff]
        %v594 = vmul.f32 %v589, %v592
        %v595 = vmul.f32 %v590, %v593
        %v596 = vadd.f32 %v578, %v594
        %v597 = vadd.f32 %v579, %v595
        %v598 = vld [vmem:[#allocation2 + $0x5] sm:$0xff]
        %v599 = vld [vmem:[#allocation2 + $0xd] sm:$0xff]
        %s600 = scalar_lea.vmem [#allocation7], 64
        %v601 = vld [vmem:[%s600] sm:$0xff]
        %v602 = vld [vmem:[%s600 + $0x8] sm:$0xff]
        %v603 = vmul.f32 %v598, %v601
        %v604 = vmul.f32 %v599, %v602
        %v605 = vadd.f32 %v587, %v603
        %v606 = vadd.f32 %v588, %v604
        %v607 = vld [vmem:[#allocation2 + $0x6] sm:$0xff]
        %v608 = vld [vmem:[#allocation2 + $0xe] sm:$0xff]
        %s609 = scalar_lea.vmem [#allocation7], 80
        %v610 = vld [vmem:[%s609] sm:$0xff]
        %v611 = vld [vmem:[%s609 + $0x8] sm:$0xff]
        %v612 = vmul.f32 %v607, %v610
        %v613 = vmul.f32 %v608, %v611
        %v614 = vadd.f32 %v596, %v612
        %v615 = vadd.f32 %v597, %v613
        %v616 = vld [vmem:[#allocation2 + $0x7] sm:$0xff]
        %v617 = vld [vmem:[#allocation2 + $0xf] sm:$0xff]
        %s618 = scalar_lea.vmem [#allocation7], 96
        %v619 = vld [vmem:[%s618] sm:$0xff]
        %v620 = vld [vmem:[%s618 + $0x8] sm:$0xff]
        %v621 = vmul.f32 %v616, %v619
        %v622 = vmul.f32 %v617, %v620
        %v623 = vadd.f32 %v605, %v621
        %v624 = vadd.f32 %v606, %v622
        %v625 = vld [vmem:[#allocation2 + $0x8] sm:$0xff]
        %v626 = vld [vmem:[#allocation2 + $0x10] sm:$0xff]
        %s627 = scalar_lea.vmem [#allocation7], 112
        %v628 = vld [vmem:[%s627] sm:$0xff]
        %v629 = vld [vmem:[%s627 + $0x8] sm:$0xff]
        %v630 = vmul.f32 %v625, %v628
        %v631 = vmul.f32 %v626, %v629
        %v632 = vadd.f32 %v614, %v630
        %v633 = vadd.f32 %v615, %v631
        %v634 = vld [vmem:[#allocation2 + $0x11] sm:$0xff]
        %s635 = scalar_lea.vmem [#allocation7], 128
        %v636 = vld [vmem:[%s635] sm:$0xff]
        %v637 = vld [vmem:[%s635 + $0x8] sm:$0xff]
        %v638 = vmul.f32 %v564, %v636
        %v639 = vmul.f32 %v634, %v637
        %v640 = vadd.f32 %v623, %v638
        %v641 = vadd.f32 %v624, %v639
        %v642 = vld [vmem:[#allocation2 + $0x12] sm:$0xff]
        %s643 = scalar_lea.vmem [#allocation7], 144
        %v644 = vld [vmem:[%s643] sm:$0xff]
        %v645 = vld [vmem:[%s643 + $0x8] sm:$0xff]
        %v646 = vmul.f32 %v572, %v644
        %v647 = vmul.f32 %v642, %v645
        %v648 = vadd.f32 %v632, %v646
        %v649 = vadd.f32 %v633, %v647
        %v650 = vld [vmem:[#allocation2 + $0x13] sm:$0xff]
        %s651 = scalar_lea.vmem [#allocation7], 160
        %v652 = vld [vmem:[%s651] sm:$0xff]
        %v653 = vld [vmem:[%s651 + $0x8] sm:$0xff]
        %v654 = vmul.f32 %v581, %v652
        %v655 = vmul.f32 %v650, %v653
        %v656 = vadd.f32 %v640, %v654
        %v657 = vadd.f32 %v641, %v655
        %v658 = vld [vmem:[#allocation2 + $0x14] sm:$0xff]
        %s659 = scalar_lea.vmem [#allocation7], 176
        %v660 = vld [vmem:[%s659] sm:$0xff]
        %v661 = vld [vmem:[%s659 + $0x8] sm:$0xff]
        %v662 = vmul.f32 %v590, %v660
        %v663 = vmul.f32 %v658, %v661
        %v664 = vadd.f32 %v648, %v662
        %v665 = vadd.f32 %v649, %v663
        %v666 = vld [vmem:[#allocation2 + $0x15] sm:$0xff]
        %s667 = scalar_lea.vmem [#allocation7], 192
        %v668 = vld [vmem:[%s667] sm:$0xff]
        %v669 = vld [vmem:[%s667 + $0x8] sm:$0xff]
        %v670 = vmul.f32 %v599, %v668
        %v671 = vmul.f32 %v666, %v669
        %v672 = vadd.f32 %v656, %v670
        %v673 = vadd.f32 %v657, %v671
        %v674 = vld [vmem:[#allocation2 + $0x16] sm:$0xff]
        %s675 = scalar_lea.vmem [#allocation7], 208
        %v676 = vld [vmem:[%s675] sm:$0xff]
        %v677 = vld [vmem:[%s675 + $0x8] sm:$0xff]
        %v678 = vmul.f32 %v608, %v676
        %v679 = vmul.f32 %v674, %v677
        %v680 = vadd.f32 %v664, %v678
        %v681 = vadd.f32 %v665, %v679
        %v682 = vld [vmem:[#allocation2 + $0x17] sm:$0xff]
        %s683 = scalar_lea.vmem [#allocation7], 224
        %v684 = vld [vmem:[%s683] sm:$0xff]
        %v685 = vld [vmem:[%s683 + $0x8] sm:$0xff]
        %v686 = vmul.f32 %v617, %v684
        %v687 = vmul.f32 %v682, %v685
        %v688 = vadd.f32 %v672, %v686
        %v689 = vadd.f32 %v673, %v687
        %v690 = vadd.f32 %v688, %v680
        %v691 = vadd.f32 %v689, %v681
        %v692 = vld [vmem:[#allocation8] sm:$0xff]
        %v693 = vld [vmem:[#allocation8 + $0x8] sm:$0xff]
        %v694 = vadd.f32 %v690, %v692
        %v695 = vadd.f32 %v691, %v693
        %v696 = vxor.u32 %v694, 2147483648
        %v697 = vxor.u32 %v695, 2147483648
        %v698 = vmul.f32 %v696, 1.442695
        %v699 = vpow.pop %v698
        %v700 = vmul.f32 %v697, 1.442695
        %v701 = vpow.pop %v700
        %v702 = vadd.f32 %v699, 1.0
        %v703 = vadd.f32 %v701, 1.0
        %v704 = vrcp.pop %v702
        %v705 = vmul.f32 1.0, %v704
        %v706 = vrcp.pop %v703
        %v707 = vmul.f32 1.0, %v706
        %v708 = vmul.f32 %v705, %v450
        %v709 = vmul.f32 %v707, %v451
        %v710 = vld [vmem:[#allocation10] sm:$0xff]
        %v711 = vld [vmem:[#allocation10 + $0x8] sm:$0xff]
        %v712 = vld [vmem:[#allocation10 + $0x10] sm:$0xff]
        %v713 = vld [vmem:[#allocation10 + $0x18] sm:$0xff]
        %v714 = vld [vmem:[#allocation10 + $0x20] sm:$0xff]
        %v715 = vld [vmem:[#allocation10 + $0x28] sm:$0xff]
        %v716 = vld [vmem:[#allocation10 + $0x30] sm:$0xff]
        %v717 = vld [vmem:[#allocation10 + $0x38] sm:$0xff]
        %v718 = vld [vmem:[#allocation10 + $0x40] sm:$0xff]
        %v719 = vld [vmem:[#allocation10 + $0x48] sm:$0xff]
        %v720 = vld [vmem:[#allocation10 + $0x50] sm:$0xff]
        %v721 = vld [vmem:[#allocation10 + $0x58] sm:$0xff]
        %v722 = vld [vmem:[#allocation10 + $0x60] sm:$0xff]
        %v723 = vld [vmem:[#allocation10 + $0x68] sm:$0xff]
        %v724 = vld [vmem:[#allocation10 + $0x70] sm:$0xff]
        %v725 = vld [vmem:[#allocation10 + $0x78] sm:$0xff]
        %s726 = scalar_lea.vmem [#allocation10], 128
        %v727 = vld [vmem:[%s726] sm:$0xff]
        %v728 = vld [vmem:[%s726 + $0x8] sm:$0xff]
        %v729 = vld [vmem:[%s726 + $0x10] sm:$0xff]
        %v730 = vld [vmem:[%s726 + $0x18] sm:$0xff]
        %v731 = vld [vmem:[%s726 + $0x20] sm:$0xff]
        %v732 = vld [vmem:[%s726 + $0x28] sm:$0xff]
        %v733 = vld [vmem:[%s726 + $0x30] sm:$0xff]
        %v734 = vld [vmem:[%s726 + $0x38] sm:$0xff]
        %v735 = vld [vmem:[%s726 + $0x40] sm:$0xff]
        %v736 = vld [vmem:[%s726 + $0x48] sm:$0xff]
        %v737 = vld [vmem:[%s726 + $0x50] sm:$0xff]
        %v738 = vld [vmem:[%s726 + $0x58] sm:$0xff]
        %v739 = vld [vmem:[%s726 + $0x60] sm:$0xff]
        %v740 = vld [vmem:[%s726 + $0x68] sm:$0xff]
        %v741 = vld [vmem:[%s726 + $0x70] sm:$0xff]
        %v742 = vld [vmem:[%s726 + $0x78] sm:$0xff]
        %743 = vmatprep.subr.mxu0 0.0
        %744 = vmatpush1.msra.mxu0 %v727
        %745 = vmatprep.subr.mxu0 0.0
        %746 = vmatpush1.msra.mxu0 %v728
        %747 = vmatprep.subr.mxu0 0.0
        %748 = vmatpush1.msra.mxu0 %v729
        %749 = vmatprep.subr.mxu0 0.0
        %750 = vmatpush1.msra.mxu0 %v730
        %751 = vmatprep.subr.mxu0 0.0
        %752 = vmatpush1.msra.mxu0 %v731
        %753 = vmatprep.subr.mxu0 0.0
        %754 = vmatpush1.msra.mxu0 %v732
        %755 = vmatprep.subr.mxu0 0.0
        %756 = vmatpush1.msra.mxu0 %v733
        %757 = vmatprep.subr.mxu0 0.0
        %758 = vmatpush1.msra.mxu0 %v734
        %759 = vmatprep.subr.mxu0 0.0
        %760 = vmatpush1.msra.mxu0 %v735
        %761 = vmatprep.subr.mxu0 0.0
        %762 = vmatpush1.msra.mxu0 %v736
        %763 = vmatprep.subr.mxu0 0.0
        %764 = vmatpush1.msra.mxu0 %v737
        %765 = vmatprep.subr.mxu0 0.0
        %766 = vmatpush1.msra.mxu0 %v738
        %767 = vmatprep.subr.mxu0 0.0
        %768 = vmatpush1.msra.mxu0 %v739
        %769 = vmatprep.subr.mxu0 0.0
        %770 = vmatpush1.msra.mxu0 %v740
        %771 = vmatprep.subr.mxu0 0.0
        %772 = vmatpush1.msra.mxu0 %v741
        %773 = vmatprep.subr.mxu0 0.0
        %774 = vmatpush1.msra.mxu0 %v742
        %775 = vmatprep.subr.mxu0 0.0
        %776 = vmatpush1.msra.mxu0 0.0
        %777 = vmatprep.subr.mxu0 0.0
        %778 = vmatpush1.msra.mxu0 0.0
        %779 = vmatprep.subr.mxu0 0.0
        %780 = vmatpush1.msra.mxu0 0.0
        %781 = vmatprep.subr.mxu0 0.0
        %782 = vmatpush1.msra.mxu0 0.0
        %783 = vmatprep.subr.mxu0 0.0
        %784 = vmatpush1.msra.mxu0 0.0
        %785 = vmatprep.subr.mxu0 0.0
        %786 = vmatpush1.msra.mxu0 0.0
        %787 = vmatprep.subr.mxu0 0.0
        %788 = vmatpush1.msra.mxu0 0.0
        %789 = vmatprep.subr.mxu0 0.0
        %790 = vmatpush1.msra.mxu0 0.0
        %791 = vmatprep.subr.mxu0 0.0
        %792 = vmatpush1.msra.mxu0 0.0
        %793 = vmatprep.subr.mxu0 0.0
        %794 = vmatpush1.msra.mxu0 0.0
        %795 = vmatprep.subr.mxu0 0.0
        %796 = vmatpush1.msra.mxu0 0.0
        %797 = vmatprep.subr.mxu0 0.0
        %798 = vmatpush1.msra.mxu0 0.0
        %799 = vmatprep.subr.mxu0 0.0
        %800 = vmatpush1.msra.mxu0 0.0
        %801 = vmatprep.subr.mxu0 0.0
        %802 = vmatpush1.msra.mxu0 0.0
        %803 = vmatprep.subr.mxu0 0.0
        %804 = vmatpush1.msra.mxu0 0.0
        %805 = vmatprep.subr.mxu0 0.0
        %806 = vmatpush1.msra.mxu0 0.0
        %807 = vmatprep.mubr.f32.mxu0 0.0
        %808 = vmatmul.mubr.f32.gmra.mrb[0].mxu0 %v625
        %v809 = vpop.f32.mrb[0].mxu0
        %v810 = vadd.f32 0.0, %v809
        %v811 = vpop.f32.mrb[0].mxu0
        %812 = vmatprep.mubr.f32.mxu0 0.0
        %813 = vmatmul.mubr.f32.gmra.mrb[0].mxu0 %v626
        %v814 = vpop.f32.mrb[0].mxu0
        %v815 = vadd.f32 0.0, %v814
        %v816 = vpop.f32.mrb[0].mxu0
        %817 = vdwg.mxu0
        %818 = vmatprep.subr.mxu0 0.0
        %819 = vmatpush1.msra.mxu0 %v710
        %820 = vmatprep.subr.mxu0 0.0
        %821 = vmatpush1.msra.mxu0 %v711
        %822 = vmatprep.subr.mxu0 0.0
        %823 = vmatpush1.msra.mxu0 %v712
        %824 = vmatprep.subr.mxu0 0.0
        %825 = vmatpush1.msra.mxu0 %v713
        %826 = vmatprep.subr.mxu0 0.0
        %827 = vmatpush1.msra.mxu0 %v714
        %828 = vmatprep.subr.mxu0 0.0
        %829 = vmatpush1.msra.mxu0 %v715
        %830 = vmatprep.subr.mxu0 0.0
        %831 = vmatpush1.msra.mxu0 %v716
        %832 = vmatprep.subr.mxu0 0.0
        %833 = vmatpush1.msra.mxu0 %v717
        %834 = vmatprep.subr.mxu0 0.0
        %835 = vmatpush1.msra.mxu0 %v718
        %836 = vmatprep.subr.mxu0 0.0
        %837 = vmatpush1.msra.mxu0 %v719
        %838 = vmatprep.subr.mxu0 0.0
        %839 = vmatpush1.msra.mxu0 %v720
        %840 = vmatprep.subr.mxu0 0.0
        %841 = vmatpush1.msra.mxu0 %v721
        %842 = vmatprep.subr.mxu0 0.0
        %843 = vmatpush1.msra.mxu0 %v722
        %844 = vmatprep.subr.mxu0 0.0
        %845 = vmatpush1.msra.mxu0 %v723
        %846 = vmatprep.subr.mxu0 0.0
        %847 = vmatpush1.msra.mxu0 %v724
        %848 = vmatprep.subr.mxu0 0.0
        %849 = vmatpush1.msra.mxu0 %v725
        %850 = vmatprep.subr.mxu0 0.0
        %851 = vmatpush1.msra.mxu0 0.0
        %852 = vmatprep.subr.mxu0 0.0
        %853 = vmatpush1.msra.mxu0 0.0
        %854 = vmatprep.subr.mxu0 0.0
        %855 = vmatpush1.msra.mxu0 0.0
        %856 = vmatprep.subr.mxu0 0.0
        %857 = vmatpush1.msra.mxu0 0.0
        %858 = vmatprep.subr.mxu0 0.0
        %859 = vmatpush1.msra.mxu0 0.0
        %860 = vmatprep.subr.mxu0 0.0
        %861 = vmatpush1.msra.mxu0 0.0
        %862 = vmatprep.subr.mxu0 0.0
        %863 = vmatpush1.msra.mxu0 0.0
        %864 = vmatprep.subr.mxu0 0.0
        %865 = vmatpush1.msra.mxu0 0.0
        %866 = vmatprep.subr.mxu0 0.0
        %867 = vmatpush1.msra.mxu0 0.0
        %868 = vmatprep.subr.mxu0 0.0
        %869 = vmatpush1.msra.mxu0 0.0
        %870 = vmatprep.subr.mxu0 0.0
        %871 = vmatpush1.msra.mxu0 0.0
        %872 = vmatprep.subr.mxu0 0.0
        %873 = vmatpush1.msra.mxu0 0.0
        %874 = vmatprep.subr.mxu0 0.0
        %875 = vmatpush1.msra.mxu0 0.0
        %876 = vmatprep.subr.mxu0 0.0
        %877 = vmatpush1.msra.mxu0 0.0
        %878 = vmatprep.subr.mxu0 0.0
        %879 = vmatpush1.msra.mxu0 0.0
        %880 = vmatprep.subr.mxu0 0.0
        %881 = vmatpush1.msra.mxu0 0.0
        %882 = vmatprep.mubr.f32.mxu0 0.0
        %883 = vmatmul.mubr.f32.gmra.mrb[0].mxu0 %v616
        %v884 = vpop.f32.mrb[0].mxu0
        %v885 = vadd.f32 %v810, %v884
        %v886 = vpop.f32.mrb[0].mxu0
        %887 = vmatprep.mubr.f32.mxu0 0.0
        %888 = vmatmul.mubr.f32.gmra.mrb[0].mxu0 %v617
        %v889 = vpop.f32.mrb[0].mxu0
        %v890 = vadd.f32 %v815, %v889
        %v891 = vpop.f32.mrb[0].mxu0
        %892 = vdwg.mxu0
        %s893 = scalar_lea.vmem [#allocation10], 256
        %v894 = vld [vmem:[%s893] sm:$0xff]
        %v895 = vld [vmem:[%s893 + $0x8] sm:$0xff]
        %v896 = vld [vmem:[%s893 + $0x10] sm:$0xff]
        %v897 = vld [vmem:[%s893 + $0x18] sm:$0xff]
        %v898 = vld [vmem:[%s893 + $0x20] sm:$0xff]
        %v899 = vld [vmem:[%s893 + $0x28] sm:$0xff]
        %v900 = vld [vmem:[%s893 + $0x30] sm:$0xff]
        %v901 = vld [vmem:[%s893 + $0x38] sm:$0xff]
        %v902 = vld [vmem:[%s893 + $0x40] sm:$0xff]
        %v903 = vld [vmem:[%s893 + $0x48] sm:$0xff]
        %v904 = vld [vmem:[%s893 + $0x50] sm:$0xff]
        %v905 = vld [vmem:[%s893 + $0x58] sm:$0xff]
        %v906 = vld [vmem:[%s893 + $0x60] sm:$0xff]
        %v907 = vld [vmem:[%s893 + $0x68] sm:$0xff]
        %v908 = vld [vmem:[%s893 + $0x70] sm:$0xff]
        %v909 = vld [vmem:[%s893 + $0x78] sm:$0xff]
        %910 = vmatprep.subr.mxu0 0.0
        %911 = vmatpush1.msra.mxu0 %v894
        %912 = vmatprep.subr.mxu0 0.0
        %913 = vmatpush1.msra.mxu0 %v895
        %914 = vmatprep.subr.mxu0 0.0
        %915 = vmatpush1.msra.mxu0 %v896
        %916 = vmatprep.subr.mxu0 0.0
        %917 = vmatpush1.msra.mxu0 %v897
        %918 = vmatprep.subr.mxu0 0.0
        %919 = vmatpush1.msra.mxu0 %v898
        %920 = vmatprep.subr.mxu0 0.0
        %921 = vmatpush1.msra.mxu0 %v899
        %922 = vmatprep.subr.mxu0 0.0
        %923 = vmatpush1.msra.mxu0 %v900
        %924 = vmatprep.subr.mxu0 0.0
        %925 = vmatpush1.msra.mxu0 %v901
        %926 = vmatprep.subr.mxu0 0.0
        %927 = vmatpush1.msra.mxu0 %v902
        %928 = vmatprep.subr.mxu0 0.0
        %929 = vmatpush1.msra.mxu0 %v903
        %930 = vmatprep.subr.mxu0 0.0
        %931 = vmatpush1.msra.mxu0 %v904
        %932 = vmatprep.subr.mxu0 0.0
        %933 = vmatpush1.msra.mxu0 %v905
        %934 = vmatprep.subr.mxu0 0.0
        %935 = vmatpush1.msra.mxu0 %v906
        %936 = vmatprep.subr.mxu0 0.0
        %937 = vmatpush1.msra.mxu0 %v907
        %938 = vmatprep.subr.mxu0 0.0
        %939 = vmatpush1.msra.mxu0 %v908
        %940 = vmatprep.subr.mxu0 0.0
        %941 = vmatpush1.msra.mxu0 %v909
        %942 = vmatprep.subr.mxu0 0.0
        %943 = vmatpush1.msra.mxu0 0.0
        %944 = vmatprep.subr.mxu0 0.0
        %945 = vmatpush1.msra.mxu0 0.0
        %946 = vmatprep.subr.mxu0 0.0
        %947 = vmatpush1.msra.mxu0 0.0
        %948 = vmatprep.subr.mxu0 0.0
        %949 = vmatpush1.msra.mxu0 0.0
        %950 = vmatprep.subr.mxu0 0.0
        %951 = vmatpush1.msra.mxu0 0.0
        %952 = vmatprep.subr.mxu0 0.0
        %953 = vmatpush1.msra.mxu0 0.0
        %954 = vmatprep.subr.mxu0 0.0
        %955 = vmatpush1.msra.mxu0 0.0
        %956 = vmatprep.subr.mxu0 0.0
        %957 = vmatpush1.msra.mxu0 0.0
        %958 = vmatprep.subr.mxu0 0.0
        %959 = vmatpush1.msra.mxu0 0.0
        %960 = vmatprep.subr.mxu0 0.0
        %961 = vmatpush1.msra.mxu0 0.0
        %962 = vmatprep.subr.mxu0 0.0
        %963 = vmatpush1.msra.mxu0 0.0
        %964 = vmatprep.subr.mxu0 0.0
        %965 = vmatpush1.msra.mxu0 0.0
        %966 = vmatprep.subr.mxu0 0.0
        %967 = vmatpush1.msra.mxu0 0.0
        %968 = vmatprep.subr.mxu0 0.0
        %969 = vmatpush1.msra.mxu0 0.0
        %970 = vmatprep.subr.mxu0 0.0
        %971 = vmatpush1.msra.mxu0 0.0
        %972 = vmatprep.subr.mxu0 0.0
        %973 = vmatpush1.msra.mxu0 0.0
        %974 = vmatprep.mubr.f32.mxu0 0.0
        %975 = vmatmul.mubr.f32.gmra.mrb[0].mxu0 %v564
        %v976 = vpop.f32.mrb[0].mxu0
        %v977 = vadd.f32 0.0, %v976
        %v978 = vpop.f32.mrb[0].mxu0
        %979 = vmatprep.mubr.f32.mxu0 0.0
        %980 = vmatmul.mubr.f32.gmra.mrb[0].mxu0 %v634
        %v981 = vpop.f32.mrb[0].mxu0
        %v982 = vadd.f32 0.0, %v981
        %v983 = vpop.f32.mrb[0].mxu0
        %984 = vdwg.mxu0
        %v985 = vadd.f32 %v885, %v977
        %v986 = vadd.f32 %v890, %v982
        %v987 = vld [vmem:[#allocation11] sm:$0xff]
        %v988 = vld [vmem:[#allocation11 + $0x8] sm:$0xff]
        %v989 = vadd.f32 %v985, %v987
        %v990 = vadd.f32 %v986, %v988
        %v991 = vxor.u32 %v989, 2147483648
        %v992 = vxor.u32 %v990, 2147483648
        %v993 = vmul.f32 %v991, 1.442695
        %v994 = vpow.pop %v993
        %v995 = vmul.f32 %v992, 1.442695
        %v996 = vpow.pop %v995
        %v997 = vadd.f32 %v994, 1.0
        %v998 = vadd.f32 %v996, 1.0
        %v999 = vrcp.pop %v997
        %v1000 = vmul.f32 1.0, %v999
        %v1001 = vrcp.pop %v998
        %v1002 = vmul.f32 1.0, %v1001
        %v1003 = vmul.f32 %v1000, %v450
        %v1004 = vmul.f32 %v1002, %v451
        %v1005 = vadd.f32 %v561, %v708
        %v1006 = vadd.f32 %v562, %v709
        %v1007 = vadd.f32 %v1005, %v1003
        %v1008 = vadd.f32 %v1006, %v1004
        %v1009 = vld [vmem:[#allocation13] sm:$0xff]
        %v1010 = vld [vmem:[#allocation13 + $0x8] sm:$0xff]
        %v1011 = vld [vmem:[#allocation13 + $0x10] sm:$0xff]
        %v1012 = vld [vmem:[#allocation13 + $0x18] sm:$0xff]
        %v1013 = vld [vmem:[#allocation13 + $0x20] sm:$0xff]
        %v1014 = vld [vmem:[#allocation13 + $0x28] sm:$0xff]
        %v1015 = vld [vmem:[#allocation13 + $0x30] sm:$0xff]
        %v1016 = vld [vmem:[#allocation13 + $0x38] sm:$0xff]
        %v1017 = vld [vmem:[#allocation13 + $0x40] sm:$0xff]
        %v1018 = vld [vmem:[#allocation13 + $0x48] sm:$0xff]
        %v1019 = vld [vmem:[#allocation13 + $0x50] sm:$0xff]
        %v1020 = vld [vmem:[#allocation13 + $0x58] sm:$0xff]
        %v1021 = vld [vmem:[#allocation13 + $0x60] sm:$0xff]
        %v1022 = vld [vmem:[#allocation13 + $0x68] sm:$0xff]
        %v1023 = vld [vmem:[#allocation13 + $0x70] sm:$0xff]
        %v1024 = vld [vmem:[#allocation13 + $0x78] sm:$0xff]
        %v1025 = vld [vmem:[#allocation13 + $0x80] sm:$0xff]
        %v1026 = vld [vmem:[#allocation13 + $0x88] sm:$0xff]
        %v1027 = vld [vmem:[#allocation13 + $0x90] sm:$0xff]
        %v1028 = vld [vmem:[#allocation13 + $0x98] sm:$0xff]
        %v1029 = vld [vmem:[#allocation13 + $0xa0] sm:$0xff]
        %v1030 = vld [vmem:[#allocation13 + $0xa8] sm:$0xff]
        %v1031 = vld [vmem:[#allocation13 + $0xb0] sm:$0xff]
        %v1032 = vld [vmem:[#allocation13 + $0xb8] sm:$0xff]
        %v1033 = vld [vmem:[#allocation13 + $0xc0] sm:$0xff]
        %v1034 = vld [vmem:[#allocation13 + $0xc8] sm:$0xff]
        %v1035 = vld [vmem:[#allocation13 + $0xd0] sm:$0xff]
        %v1036 = vld [vmem:[#allocation13 + $0xd8] sm:$0xff]
        %v1037 = vld [vmem:[#allocation13 + $0xe0] sm:$0xff]
        %v1038 = vld [vmem:[#allocation13 + $0xe8] sm:$0xff]
        %v1039 = vld [vmem:[#allocation13 + $0xf0] sm:$0xff]
        %v1040 = vld [vmem:[#allocation13 + $0xf8] sm:$0xff]
        %v1041 = vld [vmem:[#allocation13 + $0x100] sm:$0xff]
        %v1042 = vld [vmem:[#allocation13 + $0x108] sm:$0xff]
        %v1043 = vld [vmem:[#allocation13 + $0x110] sm:$0xff]
        %v1044 = vld [vmem:[#allocation13 + $0x118] sm:$0xff]
        %v1045 = vld [vmem:[#allocation13 + $0x120] sm:$0xff]
        %v1046 = vld [vmem:[#allocation13 + $0x128] sm:$0xff]
        %v1047 = vld [vmem:[#allocation13 + $0x130] sm:$0xff]
        %v1048 = vld [vmem:[#allocation13 + $0x138] sm:$0xff]
        %v1049 = vld [vmem:[#allocation13 + $0x140] sm:$0xff]
        %v1050 = vld [vmem:[#allocation13 + $0x148] sm:$0xff]
        %v1051 = vld [vmem:[#allocation13 + $0x150] sm:$0xff]
        %v1052 = vld [vmem:[#allocation13 + $0x158] sm:$0xff]
        %v1053 = vld [vmem:[#allocation13 + $0x160] sm:$0xff]
        %v1054 = vld [vmem:[#allocation13 + $0x168] sm:$0xff]
        %v1055 = vld [vmem:[#allocation13 + $0x170] sm:$0xff]
        %v1056 = vld [vmem:[#allocation13 + $0x178] sm:$0xff]
        %v1057 = vld [vmem:[#allocation14] sm:$0xff]
        %v1058 = vld [vmem:[#allocation14 + $0x8] sm:$0xff]
        %v1059 = vld [vmem:[#allocation14 + $0x10] sm:$0xff]
        %v1060 = vld [vmem:[#allocation14 + $0x18] sm:$0xff]
        %v1061 = vld [vmem:[#allocation14 + $0x20] sm:$0xff]
        %v1062 = vld [vmem:[#allocation14 + $0x28] sm:$0xff]
        %1063 = vmatprep.subr.mxu0 %v1010
        %1064 = vmatpush1.msra.mxu0 %v1009
        %1065 = vmatprep.subr.mxu0 %v1013
        %1066 = vmatpush1.msra.mxu0 %v1012
        %1067 = vmatprep.subr.mxu0 %v1016
        %1068 = vmatpush1.msra.mxu0 %v1015
        %1069 = vmatprep.subr.mxu0 %v1019
        %1070 = vmatpush1.msra.mxu0 %v1018
        %1071 = vmatprep.subr.mxu0 %v1022
        %1072 = vmatpush1.msra.mxu0 %v1021
        %1073 = vmatprep.subr.mxu0 %v1025
        %1074 = vmatpush1.msra.mxu0 %v1024
        %1075 = vmatprep.subr.mxu0 %v1028
        %1076 = vmatpush1.msra.mxu0 %v1027
        %1077 = vmatprep.subr.mxu0 %v1031
        %1078 = vmatpush1.msra.mxu0 %v1030
        %1079 = vmatprep.subr.mxu0 %v1034
        %1080 = vmatpush1.msra.mxu0 %v1033
        %1081 = vmatprep.subr.mxu0 %v1037
        %1082 = vmatpush1.msra.mxu0 %v1036
        %1083 = vmatprep.subr.mxu0 %v1040
        %1084 = vmatpush1.msra.mxu0 %v1039
        %1085 = vmatprep.subr.mxu0 %v1043
        %1086 = vmatpush1.msra.mxu0 %v1042
        %1087 = vmatprep.subr.mxu0 %v1046
        %1088 = vmatpush1.msra.mxu0 %v1045
        %1089 = vmatprep.subr.mxu0 %v1049
        %1090 = vmatpush1.msra.mxu0 %v1048
        %1091 = vmatprep.subr.mxu0 %v1052
        %1092 = vmatpush1.msra.mxu0 %v1051
        %1093 = vmatprep.subr.mxu0 %v1055
        %1094 = vmatpush1.msra.mxu0 %v1054
        %1095 = vmatprep.subr.mxu0 0.0
        %1096 = vmatpush1.msra.mxu0 0.0
        %1097 = vmatprep.subr.mxu0 0.0
        %1098 = vmatpush1.msra.mxu0 0.0
        %1099 = vmatprep.subr.mxu0 0.0
        %1100 = vmatpush1.msra.mxu0 0.0
        %1101 = vmatprep.subr.mxu0 0.0
        %1102 = vmatpush1.msra.mxu0 0.0
        %1103 = vmatprep.subr.mxu0 0.0
        %1104 = vmatpush1.msra.mxu0 0.0
        %1105 = vmatprep.subr.mxu0 0.0
        %1106 = vmatpush1.msra.mxu0 0.0
        %1107 = vmatprep.subr.mxu0 0.0
        %1108 = vmatpush1.msra.mxu0 0.0
        %1109 = vmatprep.subr.mxu0 0.0
        %1110 = vmatpush1.msra.mxu0 0.0
        %1111 = vmatprep.subr.mxu0 0.0
        %1112 = vmatpush1.msra.mxu0 0.0
        %1113 = vmatprep.subr.mxu0 0.0
        %1114 = vmatpush1.msra.mxu0 0.0
        %1115 = vmatprep.subr.mxu0 0.0
        %1116 = vmatpush1.msra.mxu0 0.0
        %1117 = vmatprep.subr.mxu0 0.0
        %1118 = vmatpush1.msra.mxu0 0.0
        %1119 = vmatprep.subr.mxu0 0.0
        %1120 = vmatpush1.msra.mxu0 0.0
        %1121 = vmatprep.subr.mxu0 0.0
        %1122 = vmatpush1.msra.mxu0 0.0
        %1123 = vmatprep.subr.mxu0 0.0
        %1124 = vmatpush1.msra.mxu0 0.0
        %1125 = vmatprep.subr.mxu0 0.0
        %1126 = vmatpush1.msra.mxu0 0.0
        %1127 = vmatprep.mubr.f32.mxu0 0.0
        %1128 = vmatmul.mubr.f32.gmra.mrb[0].mxu0 %v1007
        %v1129 = vpop.f32.mrb[0].mxu0
        %v1130 = vadd.f32 %v1057, %v1129
        %v1131 = vpop.f32.mrb[0].mxu0
        %v1132 = vadd.f32 %v1058, %v1131
        %1133 = vmatprep.mubr.f32.mxu0 0.0
        %1134 = vmatmul.mubr.f32.gmra.mrb[0].mxu0 %v1008
        %v1135 = vpop.f32.mrb[0].mxu0
        %v1136 = vadd.f32 %v1060, %v1135
        %v1137 = vpop.f32.mrb[0].mxu0
        %v1138 = vadd.f32 %v1061, %v1137
        %1139 = vdwg.mxu0
        %1140 = vmatprep.subr.mxu0 0.0
        %1141 = vmatpush1.msra.mxu0 %v1011
        %1142 = vmatprep.subr.mxu0 0.0
        %1143 = vmatpush1.msra.mxu0 %v1014
        %1144 = vmatprep.subr.mxu0 0.0
        %1145 = vmatpush1.msra.mxu0 %v1017
        %1146 = vmatprep.subr.mxu0 0.0
        %1147 = vmatpush1.msra.mxu0 %v1020
        %1148 = vmatprep.subr.mxu0 0.0
        %1149 = vmatpush1.msra.mxu0 %v1023
        %1150 = vmatprep.subr.mxu0 0.0
        %1151 = vmatpush1.msra.mxu0 %v1026
        %1152 = vmatprep.subr.mxu0 0.0
        %1153 = vmatpush1.msra.mxu0 %v1029
        %1154 = vmatprep.subr.mxu0 0.0
        %1155 = vmatpush1.msra.mxu0 %v1032
        %1156 = vmatprep.subr.mxu0 0.0
        %1157 = vmatpush1.msra.mxu0 %v1035
        %1158 = vmatprep.subr.mxu0 0.0
        %1159 = vmatpush1.msra.mxu0 %v1038
        %1160 = vmatprep.subr.mxu0 0.0
        %1161 = vmatpush1.msra.mxu0 %v1041
        %1162 = vmatprep.subr.mxu0 0.0
        %1163 = vmatpush1.msra.mxu0 %v1044
        %1164 = vmatprep.subr.mxu0 0.0
        %1165 = vmatpush1.msra.mxu0 %v1047
        %1166 = vmatprep.subr.mxu0 0.0
        %1167 = vmatpush1.msra.mxu0 %v1050
        %1168 = vmatprep.subr.mxu0 0.0
        %1169 = vmatpush1.msra.mxu0 %v1053
        %1170 = vmatprep.subr.mxu0 0.0
        %1171 = vmatpush1.msra.mxu0 %v1056
        %1172 = vmatprep.subr.mxu0 0.0
        %1173 = vmatpush1.msra.mxu0 0.0
        %1174 = vmatprep.subr.mxu0 0.0
        %1175 = vmatpush1.msra.mxu0 0.0
        %1176 = vmatprep.subr.mxu0 0.0
        %1177 = vmatpush1.msra.mxu0 0.0
        %1178 = vmatprep.subr.mxu0 0.0
        %1179 = vmatpush1.msra.mxu0 0.0
        %1180 = vmatprep.subr.mxu0 0.0
        %1181 = vmatpush1.msra.mxu0 0.0
        %1182 = vmatprep.subr.mxu0 0.0
        %1183 = vmatpush1.msra.mxu0 0.0
        %1184 = vmatprep.subr.mxu0 0.0
        %1185 = vmatpush1.msra.mxu0 0.0
        %1186 = vmatprep.subr.mxu0 0.0
        %1187 = vmatpush1.msra.mxu0 0.0
        %1188 = vmatprep.subr.mxu0 0.0
        %1189 = vmatpush1.msra.mxu0 0.0
        %1190 = vmatprep.subr.mxu0 0.0
        %1191 = vmatpush1.msra.mxu0 0.0
        %1192 = vmatprep.subr.mxu0 0.0
        %1193 = vmatpush1.msra.mxu0 0.0
        %1194 = vmatprep.subr.mxu0 0.0
        %1195 = vmatpush1.msra.mxu0 0.0
        %1196 = vmatprep.subr.mxu0 0.0
        %1197 = vmatpush1.msra.mxu0 0.0
        %1198 = vmatprep.subr.mxu0 0.0
        %1199 = vmatpush1.msra.mxu0 0.0
        %1200 = vmatprep.subr.mxu0 0.0
        %1201 = vmatpush1.msra.mxu0 0.0
        %1202 = vmatprep.subr.mxu0 0.0
        %1203 = vmatpush1.msra.mxu0 0.0
        %1204 = vmatprep.mubr.f32.mxu0 0.0
        %1205 = vmatmul.mubr.f32.gmra.mrb[0].mxu0 %v1007
        %v1206 = vpop.f32.mrb[0].mxu0
        %v1207 = vadd.f32 %v1059, %v1206
        %v1208 = vpop.f32.mrb[0].mxu0
        %1209 = vmatprep.mubr.f32.mxu0 0.0
        %1210 = vmatmul.mubr.f32.gmra.mrb[0].mxu0 %v1008
        %v1211 = vpop.f32.mrb[0].mxu0
        %v1212 = vadd.f32 %v1062, %v1211
        %v1213 = vpop.f32.mrb[0].mxu0
        %1214 = vdwg.mxu0
        %1215 = vst [vmem:[%s449] sm:$0xff] %v1130
        %1216 = vst [vmem:[%s449 + $0x8] sm:$0xff] %v1132
        %1217 = vst [vmem:[%s449 + $0x10] sm:$0xff] %v1207
        %1218 = vst [vmem:[%s449 + $0x18] sm:$0xff] %v1136
        %1219 = vst [vmem:[%s449 + $0x20] sm:$0xff] %v1138
        %1220 = vst [vmem:[%s449 + $0x28] sm:$0xff] %v1212
        %p1221 = scmp.lt.s32.totalorder %s25, 1
        %s1222 = scalar_select %p1221, %s25, 1
        %s1223 = smul.addr %s1222, 6
        %s1224 = smul.addr %s1223, 8
        %s1225 = scalar_lea.vmem %s9, %s1224
        // Predicated region
        $region89: #{edge_enhancement_forward.2} parent=55 // pred_check
          %p1226 = pneg %p237
        $region90: #{edge_enhancement_forward.2} parent=55 // pred_check_branch
          %1228 = sbr.rel (%p1226) target = $region92
        $region91: #{edge_enhancement_forward.2} parent=55 // pred_region
          _
        $region92: #{edge_enhancement_forward.2} parent=55 // pred_fallthru
          _
      $region56: #{edge_enhancement_forward.2} parent=5 // pred_fallthru
        _
      %p1229 = scmp.le.s32.totalorder 2, %s20
      // Predicated region
      $region93: #{edge_enhancement_forward.2} parent=5 // pred_check
        %p1230 = pneg %p1229
      $region94: #{edge_enhancement_forward.2} parent=5 // pred_check_branch
        %1232 = sbr.rel (%p1230) target = $region96
      $region95: #{edge_enhancement_forward.2} parent=5 // pred_region
        %s1233 = ssub.s32 %s20, 2
        // Predicated region
        $region97: #{edge_enhancement_forward.2} parent=95 // pred_check
          %p1234 = pneg %p243
        $region98: #{edge_enhancement_forward.2} parent=95 // pred_check_branch
          %1236 = sbr.rel (%p1234) target = $region100
        $region99: #{edge_enhancement_forward.2} parent=95 // pred_region
          %p1237 = scmp.lt.s32.totalorder %s26, 1
          %s1238 = scalar_select %p1237, %s26, 1
          %s1239 = smul.addr %s1238, 6
          %s1240 = smul.addr %s1239, 8
          %s1241 = scalar_lea.vmem %s9, %s1240
        $region100: #{edge_enhancement_forward.2} parent=95 // pred_fallthru
          _
      $region96: #{edge_enhancement_forward.2} parent=5 // pred_fallthru
        _
    $region6: #{edge_enhancement_forward.2} parent=1 // loop_footer
      %s24 = sadd.s32 1, %s20
    $region7: #{edge_enhancement_forward.2} parent=1 // loop_footer_branch
      %19 = sbr.rel target = $region3
    $region8: #{edge_enhancement_forward.2} parent=1 // loop_exit
      _
    %1242 = vsyncpa [#allocation4], 1
    %s1243 = scalar_lea.sflag [#allocation4], 1
    %1244 = vsyncpa %s1243, 1
    %1245 = vsyncpa [#allocation6], 1
    %1246 = vsyncpa [#allocation9], 1
    %1247 = vsyncpa [#allocation12], 1
    %1248 = vsyncpa [#allocation15], 1

// kernel: edge_enhancement_forward.3
$region0: #{edge_enhancement_forward.3}
  #allocation0 [shape = 'u32[]', space=smem, size = 0x4, offset = 0x4, fixed_abs, tag = 'smem constant byte address 0x4 - core index']
  #allocation1 [shape = 'u32[144,128]{1,0:T(1,128)}', space=vmem, size = 0x12000, scoped, tag = 'internal scratch']
  #allocation2 [shape = 'f32[32,128]{1,0:T(8,128)}', space=vmem, size = 0x4000, scoped, tag = 'scratch operand']
  %s0 = inlined_call_operand.vmem [shape: f32[2,16,128], index: 0, kind: input, shape index: {}]
  %s1 = inlined_call_operand.vmem [shape: f32[2,16,1152], index: 1, kind: input, shape index: {}]
  %s2 = inlined_call_operand.vmem [shape: f32[1152,128], index: 2, kind: input, shape index: {}]
  %s3 = inlined_call_operand.vmem [shape: f32[16,128], index: 3, kind: input, shape index: {}]
  %s4 = inlined_call_operand.vmem [shape: f32[15,128,128], index: 4, kind: input, shape index: {}]
  %s5 = inlined_call_operand.vmem [shape: f32[16,128], index: 5, kind: input, shape index: {}]
  %s6 = inlined_call_operand.vmem [shape: f32[3,128,128], index: 6, kind: input, shape index: {}]
  %s7 = inlined_call_operand.vmem [shape: f32[128,128], index: 7, kind: input, shape index: {}]
  %s8 = inlined_call_operand.vmem [shape: f32[16,128], index: 8, kind: input, shape index: {}]
  %s9 = inlined_call_operand.vmem [shape: f32[128,128], index: 9, kind: input, shape index: {}]
  %s10 = inlined_call_operand.vmem [shape: f32[128,128], index: 10, kind: input, shape index: {}]
  %s11 = inlined_call_operand.vmem [shape: f32[16,128], index: 11, kind: input, shape index: {}]
  %s12 = inlined_call_operand.vmem [shape: f32[2,16,128], index: 12, kind: output, shape index: {}]
  %s13 = sld [smem:[#allocation0]]
  $region81: #{edge_enhancement_forward.3} parent=0
    _
  %s15 = ssub.s32 1, %s13
  %s16 = scalar_select 0, %s15, %s13
  loop: start=0, step=1, limit=4
  $region2: #{edge_enhancement_forward.3} parent=0 // loop_pre_header
    _
  $region3: #{edge_enhancement_forward.3} parent=0 // loop_header
    %s18 = sphi 0, %s22
    %p19 = scmp.ge.s32.totalorder %s18, 4
    %s28 = sphi 0, %s30
    %s31 = sphi 0, %s28
    %s32 = sphi 0, %s31
    %s48 = sphi 0, %s32
    %s54 = sphi 0, %s56
    %s57 = sphi 0, %s54
    %s58 = sphi 0, %s57
    %s74 = sphi 0, %s58
    %s78 = sphi 0, %s78
    %s80 = sphi 0, %s78
    %s81 = sphi 0, %s80
    %s95 = sphi 0, %s81
    %s99 = sphi 0, %s99
    %s101 = sphi 0, %s99
    %s102 = sphi 0, %s101
    %s116 = sphi 0, %s102
    %s120 = sphi 0, %s120
    %s122 = sphi 0, %s120
    %s123 = sphi 0, %s122
    %s137 = sphi 0, %s123
    %s141 = sphi 0, %s141
    %s143 = sphi 0, %s141
    %s144 = sphi 0, %s143
    %s158 = sphi 0, %s144
    %s162 = sphi 0, %s162
    %s164 = sphi 0, %s162
    %s165 = sphi 0, %s164
    %s179 = sphi 0, %s165
    %s183 = sphi 0, %s183
    %s185 = sphi 0, %s183
    %s186 = sphi 0, %s185
    %s200 = sphi 0, %s186
    %s204 = sphi 0, %s204
    %s206 = sphi 0, %s204
    %s207 = sphi 0, %s206
    %s221 = sphi 0, %s207
    %s225 = sphi 0, %s225
    %s227 = sphi 0, %s225
    %s228 = sphi 0, %s227
    %s242 = sphi 0, %s228
    %s246 = sphi 0, %s246
    %s248 = sphi 0, %s246
    %s249 = sphi 0, %s248
    %s263 = sphi 0, %s249
    %s267 = sphi 0, %s267
    %s269 = sphi 0, %s267
    %s270 = sphi 0, %s269
    %s284 = sphi 0, %s270
    %s290 = sphi 0, %s292
    %s293 = sphi 0, %s290
    %s294 = sphi 0, %s293
    %s310 = sphi 0, %s294
  $region4: #{edge_enhancement_forward.3} parent=0 // loop_header_branch
    %21 = sbr.rel (%p19) target = $region8
  $region5: #{edge_enhancement_forward.3} parent=0 // loop_body
    %s23 = ssub.s32 %s18, 1
    %s24 = ssub.s32 %s18, 2
    %s25 = sadd.s32 %s18, 1
    %s26 = ssub.s32 %s18, %s25
    %p27 = scmp.eq.s32.totalorder %s26, 0
    %s29 = sadd.s32 %s28, 1
    %s30 = scalar_select %p27, %s28, %s29
    %p33 = pneg %p27
    %p34 = scmp.eq.s32.totalorder %s18, 1
    %p35 = por %p33, %p34
    %p36 = scmp.ne.s32.totalorder %s28, %s31
    %p37 = scmp.eq.s32.totalorder %s18, 0
    %p38 = por %p36, %p37
    %p39 = scmp.ne.s32.totalorder %s28, %s31
    %p40 = scmp.eq.s32.totalorder %s23, 1
    %p41 = por %p39, %p40
    %p42 = scmp.ne.s32.totalorder %s31, %s32
    %p43 = scmp.eq.s32.totalorder %s23, 0
    %p44 = por %p42, %p43
    %p45 = scmp.ne.s32.totalorder %s31, %s32
    %p46 = scmp.eq.s32.totalorder %s24, 1
    %p47 = por %p45, %p46
    %p49 = scmp.ne.s32.totalorder %s32, %s48
    %p50 = scmp.eq.s32.totalorder %s24, 0
    %p51 = por %p49, %p50
    %s52 = ssub.s32 %s18, %s25
    %p53 = scmp.eq.s32.totalorder %s52, 0
    %s55 = sadd.s32 %s54, 1
    %s56 = scalar_select %p53, %s54, %s55
    %p59 = pneg %p53
    %p60 = scmp.eq.s32.totalorder %s18, 1
    %p61 = por %p59, %p60
    %p62 = scmp.ne.s32.totalorder %s54, %s57
    %p63 = scmp.eq.s32.totalorder %s18, 0
    %p64 = por %p62, %p63
    %p65 = scmp.ne.s32.totalorder %s54, %s57
    %p66 = scmp.eq.s32.totalorder %s23, 1
    %p67 = por %p65, %p66
    %p68 = scmp.ne.s32.totalorder %s57, %s58
    %p69 = scmp.eq.s32.totalorder %s23, 0
    %p70 = por %p68, %p69
    %p71 = scmp.ne.s32.totalorder %s57, %s58
    %p72 = scmp.eq.s32.totalorder %s24, 1
    %p73 = por %p71, %p72
    %p75 = scmp.ne.s32.totalorder %s58, %s74
    %p76 = scmp.eq.s32.totalorder %s24, 0
    %p77 = por %p75, %p76
    %s79 = sadd.s32 %s78, 1
    %p82 = scmp.eq.s32.totalorder %s18, 1
    %p83 = scmp.ne.s32.totalorder %s78, %s80
    %p84 = scmp.eq.s32.totalorder %s18, 0
    %p85 = por %p83, %p84
    %p86 = scmp.ne.s32.totalorder %s78, %s80
    %p87 = scmp.eq.s32.totalorder %s23, 1
    %p88 = por %p86, %p87
    %p89 = scmp.ne.s32.totalorder %s80, %s81
    %p90 = scmp.eq.s32.totalorder %s23, 0
    %p91 = por %p89, %p90
    %p92 = scmp.ne.s32.totalorder %s80, %s81
    %p93 = scmp.eq.s32.totalorder %s24, 1
    %p94 = por %p92, %p93
    %p96 = scmp.ne.s32.totalorder %s81, %s95
    %p97 = scmp.eq.s32.totalorder %s24, 0
    %p98 = por %p96, %p97
    %s100 = sadd.s32 %s99, 1
    %p103 = scmp.eq.s32.totalorder %s18, 1
    %p104 = scmp.ne.s32.totalorder %s99, %s101
    %p105 = scmp.eq.s32.totalorder %s18, 0
    %p106 = por %p104, %p105
    %p107 = scmp.ne.s32.totalorder %s99, %s101
    %p108 = scmp.eq.s32.totalorder %s23, 1
    %p109 = por %p107, %p108
    %p110 = scmp.ne.s32.totalorder %s101, %s102
    %p111 = scmp.eq.s32.totalorder %s23, 0
    %p112 = por %p110, %p111
    %p113 = scmp.ne.s32.totalorder %s101, %s102
    %p114 = scmp.eq.s32.totalorder %s24, 1
    %p115 = por %p113, %p114
    %p117 = scmp.ne.s32.totalorder %s102, %s116
    %p118 = scmp.eq.s32.totalorder %s24, 0
    %p119 = por %p117, %p118
    %s121 = sadd.s32 %s120, 1
    %p124 = scmp.eq.s32.totalorder %s18, 1
    %p125 = scmp.ne.s32.totalorder %s120, %s122
    %p126 = scmp.eq.s32.totalorder %s18, 0
    %p127 = por %p125, %p126
    %p128 = scmp.ne.s32.totalorder %s120, %s122
    %p129 = scmp.eq.s32.totalorder %s23, 1
    %p130 = por %p128, %p129
    %p131 = scmp.ne.s32.totalorder %s122, %s123
    %p132 = scmp.eq.s32.totalorder %s23, 0
    %p133 = por %p131, %p132
    %p134 = scmp.ne.s32.totalorder %s122, %s123
    %p135 = scmp.eq.s32.totalorder %s24, 1
    %p136 = por %p134, %p135
    %p138 = scmp.ne.s32.totalorder %s123, %s137
    %p139 = scmp.eq.s32.totalorder %s24, 0
    %p140 = por %p138, %p139
    %s142 = sadd.s32 %s141, 1
    %p145 = scmp.eq.s32.totalorder %s18, 1
    %p146 = scmp.ne.s32.totalorder %s141, %s143
    %p147 = scmp.eq.s32.totalorder %s18, 0
    %p148 = por %p146, %p147
    %p149 = scmp.ne.s32.totalorder %s141, %s143
    %p150 = scmp.eq.s32.totalorder %s23, 1
    %p151 = por %p149, %p150
    %p152 = scmp.ne.s32.totalorder %s143, %s144
    %p153 = scmp.eq.s32.totalorder %s23, 0
    %p154 = por %p152, %p153
    %p155 = scmp.ne.s32.totalorder %s143, %s144
    %p156 = scmp.eq.s32.totalorder %s24, 1
    %p157 = por %p155, %p156
    %p159 = scmp.ne.s32.totalorder %s144, %s158
    %p160 = scmp.eq.s32.totalorder %s24, 0
    %p161 = por %p159, %p160
    %s163 = sadd.s32 %s162, 1
    %p166 = scmp.eq.s32.totalorder %s18, 1
    %p167 = scmp.ne.s32.totalorder %s162, %s164
    %p168 = scmp.eq.s32.totalorder %s18, 0
    %p169 = por %p167, %p168
    %p170 = scmp.ne.s32.totalorder %s162, %s164
    %p171 = scmp.eq.s32.totalorder %s23, 1
    %p172 = por %p170, %p171
    %p173 = scmp.ne.s32.totalorder %s164, %s165
    %p174 = scmp.eq.s32.totalorder %s23, 0
    %p175 = por %p173, %p174
    %p176 = scmp.ne.s32.totalorder %s164, %s165
    %p177 = scmp.eq.s32.totalorder %s24, 1
    %p178 = por %p176, %p177
    %p180 = scmp.ne.s32.totalorder %s165, %s179
    %p181 = scmp.eq.s32.totalorder %s24, 0
    %p182 = por %p180, %p181
    %s184 = sadd.s32 %s183, 1
    %p187 = scmp.eq.s32.totalorder %s18, 1
    %p188 = scmp.ne.s32.totalorder %s183, %s185
    %p189 = scmp.eq.s32.totalorder %s18, 0
    %p190 = por %p188, %p189
    %p191 = scmp.ne.s32.totalorder %s183, %s185
    %p192 = scmp.eq.s32.totalorder %s23, 1
    %p193 = por %p191, %p192
    %p194 = scmp.ne.s32.totalorder %s185, %s186
    %p195 = scmp.eq.s32.totalorder %s23, 0
    %p196 = por %p194, %p195
    %p197 = scmp.ne.s32.totalorder %s185, %s186
    %p198 = scmp.eq.s32.totalorder %s24, 1
    %p199 = por %p197, %p198
    %p201 = scmp.ne.s32.totalorder %s186, %s200
    %p202 = scmp.eq.s32.totalorder %s24, 0
    %p203 = por %p201, %p202
    %s205 = sadd.s32 %s204, 1
    %p208 = scmp.eq.s32.totalorder %s18, 1
    %p209 = scmp.ne.s32.totalorder %s204, %s206
    %p210 = scmp.eq.s32.totalorder %s18, 0
    %p211 = por %p209, %p210
    %p212 = scmp.ne.s32.totalorder %s204, %s206
    %p213 = scmp.eq.s32.totalorder %s23, 1
    %p214 = por %p212, %p213
    %p215 = scmp.ne.s32.totalorder %s206, %s207
    %p216 = scmp.eq.s32.totalorder %s23, 0
    %p217 = por %p215, %p216
    %p218 = scmp.ne.s32.totalorder %s206, %s207
    %p219 = scmp.eq.s32.totalorder %s24, 1
    %p220 = por %p218, %p219
    %p222 = scmp.ne.s32.totalorder %s207, %s221
    %p223 = scmp.eq.s32.totalorder %s24, 0
    %p224 = por %p222, %p223
    %s226 = sadd.s32 %s225, 1
    %p229 = scmp.eq.s32.totalorder %s18, 1
    %p230 = scmp.ne.s32.totalorder %s225, %s227
    %p231 = scmp.eq.s32.totalorder %s18, 0
    %p232 = por %p230, %p231
    %p233 = scmp.ne.s32.totalorder %s225, %s227
    %p234 = scmp.eq.s32.totalorder %s23, 1
    %p235 = por %p233, %p234
    %p236 = scmp.ne.s32.totalorder %s227, %s228
    %p237 = scmp.eq.s32.totalorder %s23, 0
    %p238 = por %p236, %p237
    %p239 = scmp.ne.s32.totalorder %s227, %s228
    %p240 = scmp.eq.s32.totalorder %s24, 1
    %p241 = por %p239, %p240
    %p243 = scmp.ne.s32.totalorder %s228, %s242
    %p244 = scmp.eq.s32.totalorder %s24, 0
    %p245 = por %p243, %p244
    %s247 = sadd.s32 %s246, 1
    %p250 = scmp.eq.s32.totalorder %s18, 1
    %p251 = scmp.ne.s32.totalorder %s246, %s248
    %p252 = scmp.eq.s32.totalorder %s18, 0
    %p253 = por %p251, %p252
    %p254 = scmp.ne.s32.totalorder %s246, %s248
    %p255 = scmp.eq.s32.totalorder %s23, 1
    %p256 = por %p254, %p255
    %p257 = scmp.ne.s32.totalorder %s248, %s249
    %p258 = scmp.eq.s32.totalorder %s23, 0
    %p259 = por %p257, %p258
    %p260 = scmp.ne.s32.totalorder %s248, %s249
    %p261 = scmp.eq.s32.totalorder %s24, 1
    %p262 = por %p260, %p261
    %p264 = scmp.ne.s32.totalorder %s249, %s263
    %p265 = scmp.eq.s32.totalorder %s24, 0
    %p266 = por %p264, %p265
    %s268 = sadd.s32 %s267, 1
    %p271 = scmp.eq.s32.totalorder %s18, 1
    %p272 = scmp.ne.s32.totalorder %s267, %s269
    %p273 = scmp.eq.s32.totalorder %s18, 0
    %p274 = por %p272, %p273
    %p275 = scmp.ne.s32.totalorder %s267, %s269
    %p276 = scmp.eq.s32.totalorder %s23, 1
    %p277 = por %p275, %p276
    %p278 = scmp.ne.s32.totalorder %s269, %s270
    %p279 = scmp.eq.s32.totalorder %s23, 0
    %p280 = por %p278, %p279
    %p281 = scmp.ne.s32.totalorder %s269, %s270
    %p282 = scmp.eq.s32.totalorder %s24, 1
    %p283 = por %p281, %p282
    %p285 = scmp.ne.s32.totalorder %s270, %s284
    %p286 = scmp.eq.s32.totalorder %s24, 0
    %p287 = por %p285, %p286
    %s288 = ssub.s32 %s18, %s25
    %p289 = scmp.eq.s32.totalorder %s288, 0
    %s291 = sadd.s32 %s290, 1
    %s292 = scalar_select %p289, %s290, %s291
    %p295 = pneg %p289
    %p296 = scmp.eq.s32.totalorder %s18, 1
    %p297 = por %p295, %p296
    %p298 = scmp.ne.s32.totalorder %s290, %s293
    %p299 = scmp.eq.s32.totalorder %s18, 0
    %p300 = por %p298, %p299
    %p301 = scmp.ne.s32.totalorder %s290, %s293
    %p302 = scmp.eq.s32.totalorder %s23, 1
    %p303 = por %p301, %p302
    %p304 = scmp.ne.s32.totalorder %s293, %s294
    %p305 = scmp.eq.s32.totalorder %s23, 0
    %p306 = por %p304, %p305
    %p307 = scmp.ne.s32.totalorder %s293, %s294
    %p308 = scmp.eq.s32.totalorder %s24, 1
    %p309 = por %p307, %p308
    %p311 = scmp.ne.s32.totalorder %s294, %s310
    %p312 = scmp.eq.s32.totalorder %s24, 0
    %p313 = por %p311, %p312
    %p314 = scmp.le.s32.totalorder 1, %s18
    %p315 = scmp.lt.s32.totalorder %s18, 3
    %p316 = pnand %p314, %p315
    %p317 = pneg %p316
    // Predicated region
    $region9: #{edge_enhancement_forward.3} parent=5 // pred_check
      _
    $region10: #{edge_enhancement_forward.3} parent=5 // pred_check_branch
      %319 = sbr.rel (%p316) target = $region12
    $region11: #{edge_enhancement_forward.3} parent=5 // pred_region
      %s320 = ssub.s32 %s18, 1
      // Predicated region
      $region13: #{edge_enhancement_forward.3} parent=11 // pred_check
        %p321 = pneg %p91
      $region14: #{edge_enhancement_forward.3} parent=11 // pred_check_branch
        %323 = sbr.rel (%p321) target = $region16
      $region15: #{edge_enhancement_forward.3} parent=11 // pred_region
        _
      $region16: #{edge_enhancement_forward.3} parent=11 // pred_fallthru
        _
      // Predicated region
      $region17: #{edge_enhancement_forward.3} parent=11 // pred_check
        %p324 = pneg %p112
      $region18: #{edge_enhancement_forward.3} parent=11 // pred_check_branch
        %326 = sbr.rel (%p324) target = $region20
      $region19: #{edge_enhancement_forward.3} parent=11 // pred_region
        _
      $region20: #{edge_enhancement_forward.3} parent=11 // pred_fallthru
        _
      // Predicated region
      $region21: #{edge_enhancement_forward.3} parent=11 // pred_check
        %p327 = pneg %p133
      $region22: #{edge_enhancement_forward.3} parent=11 // pred_check_branch
        %329 = sbr.rel (%p327) target = $region24
      $region23: #{edge_enhancement_forward.3} parent=11 // pred_region
        _
      $region24: #{edge_enhancement_forward.3} parent=11 // pred_fallthru
        _
      // Predicated region
      $region25: #{edge_enhancement_forward.3} parent=11 // pred_check
        %p330 = pneg %p154
      $region26: #{edge_enhancement_forward.3} parent=11 // pred_check_branch
        %332 = sbr.rel (%p330) target = $region28
      $region27: #{edge_enhancement_forward.3} parent=11 // pred_region
        _
      $region28: #{edge_enhancement_forward.3} parent=11 // pred_fallthru
        _
      // Predicated region
      $region29: #{edge_enhancement_forward.3} parent=11 // pred_check
        %p333 = pneg %p175
      $region30: #{edge_enhancement_forward.3} parent=11 // pred_check_branch
        %335 = sbr.rel (%p333) target = $region32
      $region31: #{edge_enhancement_forward.3} parent=11 // pred_region
        _
      $region32: #{edge_enhancement_forward.3} parent=11 // pred_fallthru
        _
      // Predicated region
      $region33: #{edge_enhancement_forward.3} parent=11 // pred_check
        %p336 = pneg %p196
      $region34: #{edge_enhancement_forward.3} parent=11 // pred_check_branch
        %338 = sbr.rel (%p336) target = $region36
      $region35: #{edge_enhancement_forward.3} parent=11 // pred_region
        _
      $region36: #{edge_enhancement_forward.3} parent=11 // pred_fallthru
        _
      // Predicated region
      $region37: #{edge_enhancement_forward.3} parent=11 // pred_check
        %p339 = pneg %p217
      $region38: #{edge_enhancement_forward.3} parent=11 // pred_check_branch
        %341 = sbr.rel (%p339) target = $region40
      $region39: #{edge_enhancement_forward.3} parent=11 // pred_region
        _
      $region40: #{edge_enhancement_forward.3} parent=11 // pred_fallthru
        _
      // Predicated region
      $region41: #{edge_enhancement_forward.3} parent=11 // pred_check
        %p342 = pneg %p238
      $region42: #{edge_enhancement_forward.3} parent=11 // pred_check_branch
        %344 = sbr.rel (%p342) target = $region44
      $region43: #{edge_enhancement_forward.3} parent=11 // pred_region
        _
      $region44: #{edge_enhancement_forward.3} parent=11 // pred_fallthru
        _
      // Predicated region
      $region45: #{edge_enhancement_forward.3} parent=11 // pred_check
        %p345 = pneg %p259
      $region46: #{edge_enhancement_forward.3} parent=11 // pred_check_branch
        %347 = sbr.rel (%p345) target = $region48
      $region47: #{edge_enhancement_forward.3} parent=11 // pred_region
        _
      $region48: #{edge_enhancement_forward.3} parent=11 // pred_fallthru
        _
      // Predicated region
      $region49: #{edge_enhancement_forward.3} parent=11 // pred_check
        %p348 = pneg %p280
      $region50: #{edge_enhancement_forward.3} parent=11 // pred_check_branch
        %350 = sbr.rel (%p348) target = $region52
      $region51: #{edge_enhancement_forward.3} parent=11 // pred_region
        _
      $region52: #{edge_enhancement_forward.3} parent=11 // pred_fallthru
        _
    $region12: #{edge_enhancement_forward.3} parent=5 // pred_fallthru
      _
    %p351 = scmp.lt.s32.totalorder %s18, 2
    // Predicated region
    $region53: #{edge_enhancement_forward.3} parent=5 // pred_check
      %p352 = pneg %p351
    $region54: #{edge_enhancement_forward.3} parent=5 // pred_check_branch
      %354 = sbr.rel (%p352) target = $region56
    $region55: #{edge_enhancement_forward.3} parent=5 // pred_region
      // Predicated region
      $region57: #{edge_enhancement_forward.3} parent=55 // pred_check
        %p355 = pneg %p38
      $region58: #{edge_enhancement_forward.3} parent=55 // pred_check_branch
        %357 = sbr.rel (%p355) target = $region60
      $region59: #{edge_enhancement_forward.3} parent=55 // pred_region
        %p358 = scmp.lt.s32.totalorder %s18, 1
        %s359 = scalar_select %p358, %s18, 1
        %s360 = smul.addr %s359, 2
        %s361 = smul.addr %s360, 8
        %s362 = scalar_lea.vmem %s0, %s361
      $region60: #{edge_enhancement_forward.3} parent=55 // pred_fallthru
        _
      // Predicated region
      $region61: #{edge_enhancement_forward.3} parent=55 // pred_check
        %p363 = pneg %p64
      $region62: #{edge_enhancement_forward.3} parent=55 // pred_check_branch
        %365 = sbr.rel (%p363) target = $region64
      $region63: #{edge_enhancement_forward.3} parent=55 // pred_region
        %p366 = scmp.lt.s32.totalorder %s18, 1
        %s367 = scalar_select %p366, %s18, 1
        %s368 = smul.addr %s367, 18
        %s369 = smul.addr %s368, 8
        %s370 = scalar_lea.vmem %s1, %s369
      $region64: #{edge_enhancement_forward.3} parent=55 // pred_fallthru
        _
    $region56: #{edge_enhancement_forward.3} parent=5 // pred_fallthru
      _
    %p371 = scmp.le.s32.totalorder 1, %s18
    %p372 = scmp.lt.s32.totalorder %s18, 3
    %p373 = pnand %p371, %p372
    %p374 = pneg %p373
    // Predicated region
    $region65: #{edge_enhancement_forward.3} parent=5 // pred_check
      _
    $region66: #{edge_enhancement_forward.3} parent=5 // pred_check_branch
      %376 = sbr.rel (%p373) target = $region68
    $region67: #{edge_enhancement_forward.3} parent=5 // pred_region
      %s377 = ssub.s32 %s18, 1
      %p378 = scmp.lt.s32.totalorder %s23, 1
      %s379 = scalar_select %p378, %s23, 1
      %s380 = smul.addr %s379, 2
      %s381 = smul.addr %s380, 8
      %s382 = scalar_lea.vmem %s0, %s381
      %p383 = pneg %p44
      %p384 = pneg %p41
      %p385 = scmp.lt.s32.totalorder %s23, 1
      %s386 = scalar_select %p385, %s23, 1
      %s387 = smul.addr %s386, 18
      %s388 = smul.addr %s387, 8
      %s389 = scalar_lea.vmem %s1, %s388
      %p390 = pneg %p70
      %p391 = pneg %p67
      %p392 = pneg %p91
      %p393 = pneg %p88
      %p394 = pneg %p112
      %p395 = pneg %p109
      %p396 = pneg %p133
      %p397 = pneg %p130
      %p398 = pneg %p154
      %p399 = pneg %p151
      %p400 = pneg %p175
      %p401 = pneg %p172
      %p402 = pneg %p196
      %p403 = pneg %p193
      %p404 = pneg %p217
      %p405 = pneg %p214
      %p406 = pneg %p238
      %p407 = pneg %p235
      %p408 = pneg %p259
      %p409 = pneg %p256
      %p410 = pneg %p280
      %p411 = pneg %p277
      %p412 = pneg %p306
      %p413 = pneg %p303
      %p414 = scmp.lt.s32.totalorder %s23, 1
      %s415 = scalar_select %p414, %s23, 1
      %s416 = smul.addr %s415, 2
      %s417 = smul.addr %s416, 8
      %s418 = scalar_lea.vmem %s12, %s417
      %p419 = scmp.lt.s32.totalorder %s23, 1
      %s420 = scalar_select %p419, %s23, 1
      %s421 = smul.addr %s420, 2
      %s422 = smul.addr %s421, 8
      %s423 = scalar_lea.vmem %s0, %s422
      %p424 = scmp.lt.s32.totalorder %s23, 1
      %s425 = scalar_select %p424, %s23, 1
      %s426 = smul.addr %s425, 18
      %s427 = smul.addr %s426, 8
      %s428 = scalar_lea.vmem %s1, %s427
      %p429 = scmp.lt.s32.totalorder %s23, 1
      %s430 = scalar_select %p429, %s23, 1
      %s431 = smul.addr %s430, 2
      %s432 = smul.addr %s431, 8
      %s433 = scalar_lea.vmem %s12, %s432
      %v434 = vld [vmem:[%s423] sm:$0xff]
      %v435 = vld [vmem:[%s423 + $0x8] sm:$0xff]
      %v436 = vld [vmem:[%s428] sm:$0xff]
      %v437 = vld [vmem:[%s428 + $0x8] sm:$0xff]
      %v438 = vld [vmem:[%s428 + $0x10] sm:$0xff]
      %v439 = vld [vmem:[%s428 + $0x18] sm:$0xff]
      %v440 = vld [vmem:[%s428 + $0x20] sm:$0xff]
      %v441 = vld [vmem:[%s428 + $0x28] sm:$0xff]
      %v442 = vld [vmem:[%s428 + $0x30] sm:$0xff]
      %v443 = vld [vmem:[%s428 + $0x38] sm:$0xff]
      %v444 = vld [vmem:[%s428 + $0x40] sm:$0xff]
      %v445 = vld [vmem:[%s428 + $0x48] sm:$0xff]
      %v446 = vld [vmem:[%s428 + $0x50] sm:$0xff]
      %v447 = vld [vmem:[%s428 + $0x58] sm:$0xff]
      %v448 = vld [vmem:[%s428 + $0x60] sm:$0xff]
      %v449 = vld [vmem:[%s428 + $0x68] sm:$0xff]
      %v450 = vld [vmem:[%s428 + $0x70] sm:$0xff]
      %v451 = vld [vmem:[%s428 + $0x78] sm:$0xff]
      %v452 = vld [vmem:[%s428 + $0x80] sm:$0xff]
      %v453 = vld [vmem:[%s428 + $0x88] sm:$0xff]
      %v454 = vld [vmem:[%s2] sm:$0xff]
      %v455 = vld [vmem:[%s2 + $0x8] sm:$0xff]
      %v456 = vld [vmem:[%s2 + $0x10] sm:$0xff]
      %v457 = vld [vmem:[%s2 + $0x18] sm:$0xff]
      %v458 = vld [vmem:[%s2 + $0x20] sm:$0xff]
      %v459 = vld [vmem:[%s2 + $0x28] sm:$0xff]
      %v460 = vld [vmem:[%s2 + $0x30] sm:$0xff]
      %v461 = vld [vmem:[%s2 + $0x38] sm:$0xff]
      %v462 = vld [vmem:[%s2 + $0x40] sm:$0xff]
      %v463 = vld [vmem:[%s2 + $0x48] sm:$0xff]
      %v464 = vld [vmem:[%s2 + $0x50] sm:$0xff]
      %v465 = vld [vmem:[%s2 + $0x58] sm:$0xff]
      %v466 = vld [vmem:[%s2 + $0x60] sm:$0xff]
      %v467 = vld [vmem:[%s2 + $0x68] sm:$0xff]
      %v468 = vld [vmem:[%s2 + $0x70] sm:$0xff]
      %v469 = vld [vmem:[%s2 + $0x78] sm:$0xff]
      %v470 = vld [vmem:[%s2 + $0x80] sm:$0xff]
      %v471 = vld [vmem:[%s2 + $0x88] sm:$0xff]
      %v472 = vld [vmem:[%s2 + $0x90] sm:$0xff]
      %v473 = vld [vmem:[%s2 + $0x98] sm:$0xff]
      %v474 = vld [vmem:[%s2 + $0xa0] sm:$0xff]
      %v475 = vld [vmem:[%s2 + $0xa8] sm:$0xff]
      %v476 = vld [vmem:[%s2 + $0xb0] sm:$0xff]
      %v477 = vld [vmem:[%s2 + $0xb8] sm:$0xff]
      %v478 = vld [vmem:[%s2 + $0xc0] sm:$0xff]
      %v479 = vld [vmem:[%s2 + $0xc8] sm:$0xff]
      %v480 = vld [vmem:[%s2 + $0xd0] sm:$0xff]
      %v481 = vld [vmem:[%s2 + $0xd8] sm:$0xff]
      %v482 = vld [vmem:[%s2 + $0xe0] sm:$0xff]
      %v483 = vld [vmem:[%s2 + $0xe8] sm:$0xff]
      %v484 = vld [vmem:[%s2 + $0xf0] sm:$0xff]
      %v485 = vld [vmem:[%s2 + $0xf8] sm:$0xff]
      %v486 = vld [vmem:[%s2 + $0x100] sm:$0xff]
      %v487 = vld [vmem:[%s2 + $0x108] sm:$0xff]
      %v488 = vld [vmem:[%s2 + $0x110] sm:$0xff]
      %v489 = vld [vmem:[%s2 + $0x118] sm:$0xff]
      %v490 = vld [vmem:[%s2 + $0x120] sm:$0xff]
      %v491 = vld [vmem:[%s2 + $0x128] sm:$0xff]
      %v492 = vld [vmem:[%s2 + $0x130] sm:$0xff]
      %v493 = vld [vmem:[%s2 + $0x138] sm:$0xff]
      %v494 = vld [vmem:[%s2 + $0x140] sm:$0xff]
      %v495 = vld [vmem:[%s2 + $0x148] sm:$0xff]
      %v496 = vld [vmem:[%s2 + $0x150] sm:$0xff]
      %v497 = vld [vmem:[%s2 + $0x158] sm:$0xff]
      %v498 = vld [vmem:[%s2 + $0x160] sm:$0xff]
      %v499 = vld [vmem:[%s2 + $0x168] sm:$0xff]
      %v500 = vld [vmem:[%s2 + $0x170] sm:$0xff]
      %v501 = vld [vmem:[%s2 + $0x178] sm:$0xff]
      %v502 = vld [vmem:[%s2 + $0x180] sm:$0xff]
      %v503 = vld [vmem:[%s2 + $0x188] sm:$0xff]
      %v504 = vld [vmem:[%s2 + $0x190] sm:$0xff]
      %v505 = vld [vmem:[%s2 + $0x198] sm:$0xff]
      %v506 = vld [vmem:[%s2 + $0x1a0] sm:$0xff]
      %v507 = vld [vmem:[%s2 + $0x1a8] sm:$0xff]
      %v508 = vld [vmem:[%s2 + $0x1b0] sm:$0xff]
      %v509 = vld [vmem:[%s2 + $0x1b8] sm:$0xff]
      %v510 = vld [vmem:[%s2 + $0x1c0] sm:$0xff]
      %v511 = vld [vmem:[%s2 + $0x1c8] sm:$0xff]
      %v512 = vld [vmem:[%s2 + $0x1d0] sm:$0xff]
      %v513 = vld [vmem:[%s2 + $0x1d8] sm:$0xff]
      %v514 = vld [vmem:[%s2 + $0x1e0] sm:$0xff]
      %v515 = vld [vmem:[%s2 + $0x1e8] sm:$0xff]
      %v516 = vld [vmem:[%s2 + $0x1f0] sm:$0xff]
      %v517 = vld [vmem:[%s2 + $0x1f8] sm:$0xff]
      %v518 = vld [vmem:[%s2 + $0x200] sm:$0xff]
      %v519 = vld [vmem:[%s2 + $0x208] sm:$0xff]
      %v520 = vld [vmem:[%s2 + $0x210] sm:$0xff]
      %v521 = vld [vmem:[%s2 + $0x218] sm:$0xff]
      %v522 = vld [vmem:[%s2 + $0x220] sm:$0xff]
      %v523 = vld [vmem:[%s2 + $0x228] sm:$0xff]
      %v524 = vld [vmem:[%s2 + $0x230] sm:$0xff]
      %v525 = vld [vmem:[%s2 + $0x238] sm:$0xff]
      %v526 = vld [vmem:[%s2 + $0x240] sm:$0xff]
      %v527 = vld [vmem:[%s2 + $0x248] sm:$0xff]
      %v528 = vld [vmem:[%s2 + $0x250] sm:$0xff]
      %v529 = vld [vmem:[%s2 + $0x258] sm:$0xff]
      %v530 = vld [vmem:[%s2 + $0x260] sm:$0xff]
      %v531 = vld [vmem:[%s2 + $0x268] sm:$0xff]
      %v532 = vld [vmem:[%s2 + $0x270] sm:$0xff]
      %v533 = vld [vmem:[%s2 + $0x278] sm:$0xff]
      %v534 = vld [vmem:[%s2 + $0x280] sm:$0xff]
      %v535 = vld [vmem:[%s2 + $0x288] sm:$0xff]
      %v536 = vld [vmem:[%s2 + $0x290] sm:$0xff]
      %v537 = vld [vmem:[%s2 + $0x298] sm:$0xff]
      %v538 = vld [vmem:[%s2 + $0x2a0] sm:$0xff]
      %v539 = vld [vmem:[%s2 + $0x2a8] sm:$0xff]
      %v540 = vld [vmem:[%s2 + $0x2b0] sm:$0xff]
      %v541 = vld [vmem:[%s2 + $0x2b8] sm:$0xff]
      %v542 = vld [vmem:[%s2 + $0x2c0] sm:$0xff]
      %v543 = vld [vmem:[%s2 + $0x2c8] sm:$0xff]
      %v544 = vld [vmem:[%s2 + $0x2d0] sm:$0xff]
      %v545 = vld [vmem:[%s2 + $0x2d8] sm:$0xff]
      %v546 = vld [vmem:[%s2 + $0x2e0] sm:$0xff]
      %v547 = vld [vmem:[%s2 + $0x2e8] sm:$0xff]
      %v548 = vld [vmem:[%s2 + $0x2f0] sm:$0xff]
      %v549 = vld [vmem:[%s2 + $0x2f8] sm:$0xff]
      %v550 = vld [vmem:[%s2 + $0x300] sm:$0xff]
      %v551 = vld [vmem:[%s2 + $0x308] sm:$0xff]
      %v552 = vld [vmem:[%s2 + $0x310] sm:$0xff]
      %v553 = vld [vmem:[%s2 + $0x318] sm:$0xff]
      %v554 = vld [vmem:[%s2 + $0x320] sm:$0xff]
      %v555 = vld [vmem:[%s2 + $0x328] sm:$0xff]
      %v556 = vld [vmem:[%s2 + $0x330] sm:$0xff]
      %v557 = vld [vmem:[%s2 + $0x338] sm:$0xff]
      %v558 = vld [vmem:[%s2 + $0x340] sm:$0xff]
      %v559 = vld [vmem:[%s2 + $0x348] sm:$0xff]
      %v560 = vld [vmem:[%s2 + $0x350] sm:$0xff]
      %v561 = vld [vmem:[%s2 + $0x358] sm:$0xff]
      %v562 = vld [vmem:[%s2 + $0x360] sm:$0xff]
      %v563 = vld [vmem:[%s2 + $0x368] sm:$0xff]
      %v564 = vld [vmem:[%s2 + $0x370] sm:$0xff]
      %v565 = vld [vmem:[%s2 + $0x378] sm:$0xff]
      %v566 = vld [vmem:[%s2 + $0x380] sm:$0xff]
      %v567 = vld [vmem:[%s2 + $0x388] sm:$0xff]
      %v568 = vld [vmem:[%s2 + $0x390] sm:$0xff]
      %v569 = vld [vmem:[%s2 + $0x398] sm:$0xff]
      %v570 = vld [vmem:[%s2 + $0x3a0] sm:$0xff]
      %v571 = vld [vmem:[%s2 + $0x3a8] sm:$0xff]
      %v572 = vld [vmem:[%s2 + $0x3b0] sm:$0xff]
      %v573 = vld [vmem:[%s2 + $0x3b8] sm:$0xff]
      %v574 = vld [vmem:[%s2 + $0x3c0] sm:$0xff]
      %v575 = vld [vmem:[%s2 + $0x3c8] sm:$0xff]
      %v576 = vld [vmem:[%s2 + $0x3d0] sm:$0xff]
      %v577 = vld [vmem:[%s2 + $0x3d8] sm:$0xff]
      %v578 = vld [vmem:[%s2 + $0x3e0] sm:$0xff]
      %v579 = vld [vmem:[%s2 + $0x3e8] sm:$0xff]
      %v580 = vld [vmem:[%s2 + $0x3f0] sm:$0xff]
      %v581 = vld [vmem:[%s2 + $0x3f8] sm:$0xff]
      %v582 = vld [vmem:[%s2 + $0x400] sm:$0xff]
      %v583 = vld [vmem:[%s2 + $0x408] sm:$0xff]
      %v584 = vld [vmem:[%s2 + $0x410] sm:$0xff]
      %v585 = vld [vmem:[%s2 + $0x418] sm:$0xff]
      %v586 = vld [vmem:[%s2 + $0x420] sm:$0xff]
      %v587 = vld [vmem:[%s2 + $0x428] sm:$0xff]
      %v588 = vld [vmem:[%s2 + $0x430] sm:$0xff]
      %v589 = vld [vmem:[%s2 + $0x438] sm:$0xff]
      %v590 = vld [vmem:[%s2 + $0x440] sm:$0xff]
      %v591 = vld [vmem:[%s2 + $0x448] sm:$0xff]
      %v592 = vld [vmem:[%s2 + $0x450] sm:$0xff]
      %v593 = vld [vmem:[%s2 + $0x458] sm:$0xff]
      %v594 = vld [vmem:[%s2 + $0x460] sm:$0xff]
      %v595 = vld [vmem:[%s2 + $0x468] sm:$0xff]
      %v596 = vld [vmem:[%s2 + $0x470] sm:$0xff]
      %v597 = vld [vmem:[%s2 + $0x478] sm:$0xff]
      %v598 = vld [vmem:[%s3] sm:$0xff]
      %v599 = vld [vmem:[%s3 + $0x8] sm:$0xff]
      %600 = vmatprep.subr.mxu0 0.0
      %601 = vmatpush1.msra.mxu0 %v454
      %602 = vmatprep.subr.mxu0 0.0
      %603 = vmatpush1.msra.mxu0 %v455
      %604 = vmatprep.subr.mxu0 0.0
      %605 = vmatpush1.msra.mxu0 %v456
      %606 = vmatprep.subr.mxu0 0.0
      %607 = vmatpush1.msra.mxu0 %v457
      %608 = vmatprep.subr.mxu0 0.0
      %609 = vmatpush1.msra.mxu0 %v458
      %610 = vmatprep.subr.mxu0 0.0
      %611 = vmatpush1.msra.mxu0 %v459
      %612 = vmatprep.subr.mxu0 0.0
      %613 = vmatpush1.msra.mxu0 %v460
      %614 = vmatprep.subr.mxu0 0.0
      %615 = vmatpush1.msra.mxu0 %v461
      %616 = vmatprep.subr.mxu0 0.0
      %617 = vmatpush1.msra.mxu0 %v462
      %618 = vmatprep.subr.mxu0 0.0
      %619 = vmatpush1.msra.mxu0 %v463
      %620 = vmatprep.subr.mxu0 0.0
      %621 = vmatpush1.msra.mxu0 %v464
      %622 = vmatprep.subr.mxu0 0.0
      %623 = vmatpush1.msra.mxu0 %v465
      %624 = vmatprep.subr.mxu0 0.0
      %625 = vmatpush1.msra.mxu0 %v466
      %626 = vmatprep.subr.mxu0 0.0
      %627 = vmatpush1.msra.mxu0 %v467
      %628 = vmatprep.subr.mxu0 0.0
      %629 = vmatpush1.msra.mxu0 %v468
      %630 = vmatprep.subr.mxu0 0.0
      %631 = vmatpush1.msra.mxu0 %v469
      %632 = vmatprep.subr.mxu0 0.0
      %633 = vmatpush1.msra.mxu0 %v470
      %634 = vmatprep.subr.mxu0 0.0
      %635 = vmatpush1.msra.mxu0 %v471
      %636 = vmatprep.subr.mxu0 0.0
      %637 = vmatpush1.msra.mxu0 %v472
      %638 = vmatprep.subr.mxu0 0.0
      %639 = vmatpush1.msra.mxu0 %v473
      %640 = vmatprep.subr.mxu0 0.0
      %641 = vmatpush1.msra.mxu0 %v474
      %642 = vmatprep.subr.mxu0 0.0
      %643 = vmatpush1.msra.mxu0 %v475
      %644 = vmatprep.subr.mxu0 0.0
      %645 = vmatpush1.msra.mxu0 %v476
      %646 = vmatprep.subr.mxu0 0.0
      %647 = vmatpush1.msra.mxu0 %v477
      %648 = vmatprep.subr.mxu0 0.0
      %649 = vmatpush1.msra.mxu0 %v478
      %650 = vmatprep.subr.mxu0 0.0
      %651 = vmatpush1.msra.mxu0 %v479
      %652 = vmatprep.subr.mxu0 0.0
      %653 = vmatpush1.msra.mxu0 %v480
      %654 = vmatprep.subr.mxu0 0.0
      %655 = vmatpush1.msra.mxu0 %v481
      %656 = vmatprep.subr.mxu0 0.0
      %657 = vmatpush1.msra.mxu0 %v482
      %658 = vmatprep.subr.mxu0 0.0
      %659 = vmatpush1.msra.mxu0 %v483
      %660 = vmatprep.subr.mxu0 0.0
      %661 = vmatpush1.msra.mxu0 %v484
      %662 = vmatprep.subr.mxu0 0.0
      %663 = vmatpush1.msra.mxu0 %v485
      %664 = vmatprep.mubr.f32.mxu0 %v437
      %665 = vmatmul.mubr.f32.gmra.mrb[0].mxu0 %v436
      %v666 = vpop.f32.mrb[0].mxu0
      %v667 = vadd.f32 %v598, %v666
      %v668 = vpop.f32.mrb[0].mxu0
      %669 = vmatprep.mubr.f32.mxu0 %v446
      %670 = vmatmul.mubr.f32.gmra.mrb[0].mxu0 %v445
      %v671 = vpop.f32.mrb[0].mxu0
      %v672 = vadd.f32 %v599, %v671
      %v673 = vpop.f32.mrb[0].mxu0
      %674 = vdwg.mxu0
      %675 = vmatprep.subr.mxu0 0.0
      %676 = vmatpush1.msra.mxu0 %v486
      %677 = vmatprep.subr.mxu0 0.0
      %678 = vmatpush1.msra.mxu0 %v487
      %679 = vmatprep.subr.mxu0 0.0
      %680 = vmatpush1.msra.mxu0 %v488
      %681 = vmatprep.subr.mxu0 0.0
      %682 = vmatpush1.msra.mxu0 %v489
      %683 = vmatprep.subr.mxu0 0.0
      %684 = vmatpush1.msra.mxu0 %v490
      %685 = vmatprep.subr.mxu0 0.0
      %686 = vmatpush1.msra.mxu0 %v491
      %687 = vmatprep.subr.mxu0 0.0
      %688 = vmatpush1.msra.mxu0 %v492
      %689 = vmatprep.subr.mxu0 0.0
      %690 = vmatpush1.msra.mxu0 %v493
      %691 = vmatprep.subr.mxu0 0.0
      %692 = vmatpush1.msra.mxu0 %v494
      %693 = vmatprep.subr.mxu0 0.0
      %694 = vmatpush1.msra.mxu0 %v495
      %695 = vmatprep.subr.mxu0 0.0
      %696 = vmatpush1.msra.mxu0 %v496
      %697 = vmatprep.subr.mxu0 0.0
      %698 = vmatpush1.msra.mxu0 %v497
      %699 = vmatprep.subr.mxu0 0.0
      %700 = vmatpush1.msra.mxu0 %v498
      %701 = vmatprep.subr.mxu0 0.0
      %702 = vmatpush1.msra.mxu0 %v499
      %703 = vmatprep.subr.mxu0 0.0
      %704 = vmatpush1.msra.mxu0 %v500
      %705 = vmatprep.subr.mxu0 0.0
      %706 = vmatpush1.msra.mxu0 %v501
      %707 = vmatprep.subr.mxu0 0.0
      %708 = vmatpush1.msra.mxu0 %v502
      %709 = vmatprep.subr.mxu0 0.0
      %710 = vmatpush1.msra.mxu0 %v503
      %711 = vmatprep.subr.mxu0 0.0
      %712 = vmatpush1.msra.mxu0 %v504
      %713 = vmatprep.subr.mxu0 0.0
      %714 = vmatpush1.msra.mxu0 %v505
      %715 = vmatprep.subr.mxu0 0.0
      %716 = vmatpush1.msra.mxu0 %v506
      %717 = vmatprep.subr.mxu0 0.0
      %718 = vmatpush1.msra.mxu0 %v507
      %719 = vmatprep.subr.mxu0 0.0
      %720 = vmatpush1.msra.mxu0 %v508
      %721 = vmatprep.subr.mxu0 0.0
      %722 = vmatpush1.msra.mxu0 %v509
      %723 = vmatprep.subr.mxu0 0.0
      %724 = vmatpush1.msra.mxu0 %v510
      %725 = vmatprep.subr.mxu0 0.0
      %726 = vmatpush1.msra.mxu0 %v511
      %727 = vmatprep.subr.mxu0 0.0
      %728 = vmatpush1.msra.mxu0 %v512
      %729 = vmatprep.subr.mxu0 0.0
      %730 = vmatpush1.msra.mxu0 %v513
      %731 = vmatprep.subr.mxu0 0.0
      %732 = vmatpush1.msra.mxu0 %v514
      %733 = vmatprep.subr.mxu0 0.0
      %734 = vmatpush1.msra.mxu0 %v515
      %735 = vmatprep.subr.mxu0 0.0
      %736 = vmatpush1.msra.mxu0 %v516
      %737 = vmatprep.subr.mxu0 0.0
      %738 = vmatpush1.msra.mxu0 %v517
      %739 = vmatprep.mubr.f32.mxu0 %v439
      %740 = vmatmul.mubr.f32.gmra.mrb[0].mxu0 %v438
      %v741 = vpop.f32.mrb[0].mxu0
      %v742 = vadd.f32 %v667, %v741
      %v743 = vpop.f32.mrb[0].mxu0
      %744 = vmatprep.mubr.f32.mxu0 %v448
      %745 = vmatmul.mubr.f32.gmra.mrb[0].mxu0 %v447
      %v746 = vpop.f32.mrb[0].mxu0
      %v747 = vadd.f32 %v672, %v746
      %v748 = vpop.f32.mrb[0].mxu0
      %749 = vdwg.mxu0
      %750 = vmatprep.subr.mxu0 0.0
      %751 = vmatpush1.msra.mxu0 %v518
      %752 = vmatprep.subr.mxu0 0.0
      %753 = vmatpush1.msra.mxu0 %v519
      %754 = vmatprep.subr.mxu0 0.0
      %755 = vmatpush1.msra.mxu0 %v520
      %756 = vmatprep.subr.mxu0 0.0
      %757 = vmatpush1.msra.mxu0 %v521
      %758 = vmatprep.subr.mxu0 0.0
      %759 = vmatpush1.msra.mxu0 %v522
      %760 = vmatprep.subr.mxu0 0.0
      %761 = vmatpush1.msra.mxu0 %v523
      %762 = vmatprep.subr.mxu0 0.0
      %763 = vmatpush1.msra.mxu0 %v524
      %764 = vmatprep.subr.mxu0 0.0
      %765 = vmatpush1.msra.mxu0 %v525
      %766 = vmatprep.subr.mxu0 0.0
      %767 = vmatpush1.msra.mxu0 %v526
      %768 = vmatprep.subr.mxu0 0.0
      %769 = vmatpush1.msra.mxu0 %v527
      %770 = vmatprep.subr.mxu0 0.0
      %771 = vmatpush1.msra.mxu0 %v528
      %772 = vmatprep.subr.mxu0 0.0
      %773 = vmatpush1.msra.mxu0 %v529
      %774 = vmatprep.subr.mxu0 0.0
      %775 = vmatpush1.msra.mxu0 %v530
      %776 = vmatprep.subr.mxu0 0.0
      %777 = vmatpush1.msra.mxu0 %v531
      %778 = vmatprep.subr.mxu0 0.0
      %779 = vmatpush1.msra.mxu0 %v532
      %780 = vmatprep.subr.mxu0 0.0
      %781 = vmatpush1.msra.mxu0 %v533
      %782 = vmatprep.subr.mxu0 0.0
      %783 = vmatpush1.msra.mxu0 %v534
      %784 = vmatprep.subr.mxu0 0.0
      %785 = vmatpush1.msra.mxu0 %v535
      %786 = vmatprep.subr.mxu0 0.0
      %787 = vmatpush1.msra.mxu0 %v536
      %788 = vmatprep.subr.mxu0 0.0
      %789 = vmatpush1.msra.mxu0 %v537
      %790 = vmatprep.subr.mxu0 0.0
      %791 = vmatpush1.msra.mxu0 %v538
      %792 = vmatprep.subr.mxu0 0.0
      %793 = vmatpush1.msra.mxu0 %v539
      %794 = vmatprep.subr.mxu0 0.0
      %795 = vmatpush1.msra.mxu0 %v540
      %796 = vmatprep.subr.mxu0 0.0
      %797 = vmatpush1.msra.mxu0 %v541
      %798 = vmatprep.subr.mxu0 0.0
      %799 = vmatpush1.msra.mxu0 %v542
      %800 = vmatprep.subr.mxu0 0.0
      %801 = vmatpush1.msra.mxu0 %v543
      %802 = vmatprep.subr.mxu0 0.0
      %803 = vmatpush1.msra.mxu0 %v544
      %804 = vmatprep.subr.mxu0 0.0
      %805 = vmatpush1.msra.mxu0 %v545
      %806 = vmatprep.subr.mxu0 0.0
      %807 = vmatpush1.msra.mxu0 %v546
      %808 = vmatprep.subr.mxu0 0.0
      %809 = vmatpush1.msra.mxu0 %v547
      %810 = vmatprep.subr.mxu0 0.0
      %811 = vmatpush1.msra.mxu0 %v548
      %812 = vmatprep.subr.mxu0 0.0
      %813 = vmatpush1.msra.mxu0 %v549
      %814 = vmatprep.mubr.f32.mxu0 %v441
      %815 = vmatmul.mubr.f32.gmra.mrb[0].mxu0 %v440
      %v816 = vpop.f32.mrb[0].mxu0
      %v817 = vadd.f32 %v742, %v816
      %v818 = vpop.f32.mrb[0].mxu0
      %819 = vmatprep.mubr.f32.mxu0 %v450
      %820 = vmatmul.mubr.f32.gmra.mrb[0].mxu0 %v449
      %v821 = vpop.f32.mrb[0].mxu0
      %v822 = vadd.f32 %v747, %v821
      %v823 = vpop.f32.mrb[0].mxu0
      %824 = vdwg.mxu0
      %825 = vmatprep.subr.mxu0 0.0
      %826 = vmatpush1.msra.mxu0 %v550
      %827 = vmatprep.subr.mxu0 0.0
      %828 = vmatpush1.msra.mxu0 %v551
      %829 = vmatprep.subr.mxu0 0.0
      %830 = vmatpush1.msra.mxu0 %v552
      %831 = vmatprep.subr.mxu0 0.0
      %832 = vmatpush1.msra.mxu0 %v553
      %833 = vmatprep.subr.mxu0 0.0
      %834 = vmatpush1.msra.mxu0 %v554
      %835 = vmatprep.subr.mxu0 0.0
      %836 = vmatpush1.msra.mxu0 %v555
      %837 = vmatprep.subr.mxu0 0.0
      %838 = vmatpush1.msra.mxu0 %v556
      %839 = vmatprep.subr.mxu0 0.0
      %840 = vmatpush1.msra.mxu0 %v557
      %841 = vmatprep.subr.mxu0 0.0
      %842 = vmatpush1.msra.mxu0 %v558
      %843 = vmatprep.subr.mxu0 0.0
      %844 = vmatpush1.msra.mxu0 %v559
      %845 = vmatprep.subr.mxu0 0.0
      %846 = vmatpush1.msra.mxu0 %v560
      %847 = vmatprep.subr.mxu0 0.0
      %848 = vmatpush1.msra.mxu0 %v561
      %849 = vmatprep.subr.mxu0 0.0
      %850 = vmatpush1.msra.mxu0 %v562
      %851 = vmatprep.subr.mxu0 0.0
      %852 = vmatpush1.msra.mxu0 %v563
      %853 = vmatprep.subr.mxu0 0.0
      %854 = vmatpush1.msra.mxu0 %v564
      %855 = vmatprep.subr.mxu0 0.0
      %856 = vmatpush1.msra.mxu0 %v565
      %857 = vmatprep.subr.mxu0 0.0
      %858 = vmatpush1.msra.mxu0 %v566
      %859 = vmatprep.subr.mxu0 0.0
      %860 = vmatpush1.msra.mxu0 %v567
      %861 = vmatprep.subr.mxu0 0.0
      %862 = vmatpush1.msra.mxu0 %v568
      %863 = vmatprep.subr.mxu0 0.0
      %864 = vmatpush1.msra.mxu0 %v569
      %865 = vmatprep.subr.mxu0 0.0
      %866 = vmatpush1.msra.mxu0 %v570
      %867 = vmatprep.subr.mxu0 0.0
      %868 = vmatpush1.msra.mxu0 %v571
      %869 = vmatprep.subr.mxu0 0.0
      %870 = vmatpush1.msra.mxu0 %v572
      %871 = vmatprep.subr.mxu0 0.0
      %872 = vmatpush1.msra.mxu0 %v573
      %873 = vmatprep.subr.mxu0 0.0
      %874 = vmatpush1.msra.mxu0 %v574
      %875 = vmatprep.subr.mxu0 0.0
      %876 = vmatpush1.msra.mxu0 %v575
      %877 = vmatprep.subr.mxu0 0.0
      %878 = vmatpush1.msra.mxu0 %v576
      %879 = vmatprep.subr.mxu0 0.0
      %880 = vmatpush1.msra.mxu0 %v577
      %881 = vmatprep.subr.mxu0 0.0
      %882 = vmatpush1.msra.mxu0 %v578
      %883 = vmatprep.subr.mxu0 0.0
      %884 = vmatpush1.msra.mxu0 %v579
      %885 = vmatprep.subr.mxu0 0.0
      %886 = vmatpush1.msra.mxu0 %v580
      %887 = vmatprep.subr.mxu0 0.0
      %888 = vmatpush1.msra.mxu0 %v581
      %889 = vmatprep.mubr.f32.mxu0 %v443
      %890 = vmatmul.mubr.f32.gmra.mrb[0].mxu0 %v442
      %v891 = vpop.f32.mrb[0].mxu0
      %v892 = vadd.f32 %v817, %v891
      %v893 = vpop.f32.mrb[0].mxu0
      %894 = vmatprep.mubr.f32.mxu0 %v452
      %895 = vmatmul.mubr.f32.gmra.mrb[0].mxu0 %v451
      %v896 = vpop.f32.mrb[0].mxu0
      %v897 = vadd.f32 %v822, %v896
      %v898 = vpop.f32.mrb[0].mxu0
      %899 = vdwg.mxu0
      %900 = vmatprep.subr.mxu0 0.0
      %901 = vmatpush1.msra.mxu0 %v582
      %902 = vmatprep.subr.mxu0 0.0
      %903 = vmatpush1.msra.mxu0 %v583
      %904 = vmatprep.subr.mxu0 0.0
      %905 = vmatpush1.msra.mxu0 %v584
      %906 = vmatprep.subr.mxu0 0.0
      %907 = vmatpush1.msra.mxu0 %v585
      %908 = vmatprep.subr.mxu0 0.0
      %909 = vmatpush1.msra.mxu0 %v586
      %910 = vmatprep.subr.mxu0 0.0
      %911 = vmatpush1.msra.mxu0 %v587
      %912 = vmatprep.subr.mxu0 0.0
      %913 = vmatpush1.msra.mxu0 %v588
      %914 = vmatprep.subr.mxu0 0.0
      %915 = vmatpush1.msra.mxu0 %v589
      %916 = vmatprep.subr.mxu0 0.0
      %917 = vmatpush1.msra.mxu0 %v590
      %918 = vmatprep.subr.mxu0 0.0
      %919 = vmatpush1.msra.mxu0 %v591
      %920 = vmatprep.subr.mxu0 0.0
      %921 = vmatpush1.msra.mxu0 %v592
      %922 = vmatprep.subr.mxu0 0.0
      %923 = vmatpush1.msra.mxu0 %v593
      %924 = vmatprep.subr.mxu0 0.0
      %925 = vmatpush1.msra.mxu0 %v594
      %926 = vmatprep.subr.mxu0 0.0
      %927 = vmatpush1.msra.mxu0 %v595
      %928 = vmatprep.subr.mxu0 0.0
      %929 = vmatpush1.msra.mxu0 %v596
      %930 = vmatprep.subr.mxu0 0.0
      %931 = vmatpush1.msra.mxu0 %v597
      %932 = vmatprep.subr.mxu0 0.0
      %933 = vmatpush1.msra.mxu0 0.0
      %934 = vmatprep.subr.mxu0 0.0
      %935 = vmatpush1.msra.mxu0 0.0
      %936 = vmatprep.subr.mxu0 0.0
      %937 = vmatpush1.msra.mxu0 0.0
      %938 = vmatprep.subr.mxu0 0.0
      %939 = vmatpush1.msra.mxu0 0.0
      %940 = vmatprep.subr.mxu0 0.0
      %941 = vmatpush1.msra.mxu0 0.0
      %942 = vmatprep.subr.mxu0 0.0
      %943 = vmatpush1.msra.mxu0 0.0
      %944 = vmatprep.subr.mxu0 0.0
      %945 = vmatpush1.msra.mxu0 0.0
      %946 = vmatprep.subr.mxu0 0.0
      %947 = vmatpush1.msra.mxu0 0.0
      %948 = vmatprep.subr.mxu0 0.0
      %949 = vmatpush1.msra.mxu0 0.0
      %950 = vmatprep.subr.mxu0 0.0
      %951 = vmatpush1.msra.mxu0 0.0
      %952 = vmatprep.subr.mxu0 0.0
      %953 = vmatpush1.msra.mxu0 0.0
      %954 = vmatprep.subr.mxu0 0.0
      %955 = vmatpush1.msra.mxu0 0.0
      %956 = vmatprep.subr.mxu0 0.0
      %957 = vmatpush1.msra.mxu0 0.0
      %958 = vmatprep.subr.mxu0 0.0
      %959 = vmatpush1.msra.mxu0 0.0
      %960 = vmatprep.subr.mxu0 0.0
      %961 = vmatpush1.msra.mxu0 0.0
      %962 = vmatprep.subr.mxu0 0.0
      %963 = vmatpush1.msra.mxu0 0.0
      %964 = vmatprep.mubr.f32.mxu0 0.0
      %965 = vmatmul.mubr.f32.gmra.mrb[0].mxu0 %v444
      %v966 = vpop.f32.mrb[0].mxu0
      %v967 = vadd.f32 %v892, %v966
      %v968 = vpop.f32.mrb[0].mxu0
      %969 = vmatprep.mubr.f32.mxu0 0.0
      %970 = vmatmul.mubr.f32.gmra.mrb[0].mxu0 %v453
      %v971 = vpop.f32.mrb[0].mxu0
      %v972 = vadd.f32 %v897, %v971
      %v973 = vpop.f32.mrb[0].mxu0
      %974 = vdwg.mxu0
      %v975 = vmul.f32 %v967, %v434
      %v976 = vmul.f32 %v972, %v435
      %977 = vst [vmem:[#allocation2] sm:$0xff] 0.0
      %978 = vst [vmem:[#allocation2 + $0x18] sm:$0xff] 0.0
      %979 = vst [vmem:[#allocation2 + $0x8] sm:$0xff] %v434
      %980 = vst [vmem:[#allocation2 + $0x10] sm:$0xff] %v435
      %v981 = vld [vmem:[#allocation2 + $0x1] sm:$0xff]
      %v982 = vld [vmem:[#allocation2 + $0x9] sm:$0xff]
      %v983 = vld [vmem:[%s4] sm:$0xff]
      %v984 = vld [vmem:[%s4 + $0x8] sm:$0xff]
      %v985 = vld [vmem:[%s4 + $0x10] sm:$0xff]
      %v986 = vld [vmem:[%s4 + $0x18] sm:$0xff]
      %v987 = vld [vmem:[%s4 + $0x20] sm:$0xff]
      %v988 = vld [vmem:[%s4 + $0x28] sm:$0xff]
      %v989 = vld [vmem:[%s4 + $0x30] sm:$0xff]
      %v990 = vld [vmem:[%s4 + $0x38] sm:$0xff]
      %v991 = vld [vmem:[%s4 + $0x40] sm:$0xff]
      %v992 = vld [vmem:[%s4 + $0x48] sm:$0xff]
      %v993 = vld [vmem:[%s4 + $0x50] sm:$0xff]
      %v994 = vld [vmem:[%s4 + $0x58] sm:$0xff]
      %v995 = vld [vmem:[%s4 + $0x60] sm:$0xff]
      %v996 = vld [vmem:[%s4 + $0x68] sm:$0xff]
      %v997 = vld [vmem:[%s4 + $0x70] sm:$0xff]
      %v998 = vld [vmem:[%s4 + $0x78] sm:$0xff]
      %v999 = vld [vmem:[#allocation2 + $0x2] sm:$0xff]
      %v1000 = vld [vmem:[#allocation2 + $0xa] sm:$0xff]
      %s1001 = scalar_lea.vmem %s4, 128
      %v1002 = vld [vmem:[%s1001] sm:$0xff]
      %v1003 = vld [vmem:[%s1001 + $0x8] sm:$0xff]
      %v1004 = vld [vmem:[%s1001 + $0x10] sm:$0xff]
      %v1005 = vld [vmem:[%s1001 + $0x18] sm:$0xff]
      %v1006 = vld [vmem:[%s1001 + $0x20] sm:$0xff]
      %v1007 = vld [vmem:[%s1001 + $0x28] sm:$0xff]
      %v1008 = vld [vmem:[%s1001 + $0x30] sm:$0xff]
      %v1009 = vld [vmem:[%s1001 + $0x38] sm:$0xff]
      %v1010 = vld [vmem:[%s1001 + $0x40] sm:$0xff]
      %v1011 = vld [vmem:[%s1001 + $0x48] sm:$0xff]
      %v1012 = vld [vmem:[%s1001 + $0x50] sm:$0xff]
      %v1013 = vld [vmem:[%s1001 + $0x58] sm:$0xff]
      %v1014 = vld [vmem:[%s1001 + $0x60] sm:$0xff]
      %v1015 = vld [vmem:[%s1001 + $0x68] sm:$0xff]
      %v1016 = vld [vmem:[%s1001 + $0x70] sm:$0xff]
      %v1017 = vld [vmem:[%s1001 + $0x78] sm:$0xff]
      %v1018 = vld [vmem:[#allocation2 + $0x3] sm:$0xff]
      %v1019 = vld [vmem:[#allocation2 + $0xb] sm:$0xff]
      %s1020 = scalar_lea.vmem %s4, 256
      %v1021 = vld [vmem:[%s1020] sm:$0xff]
      %v1022 = vld [vmem:[%s1020 + $0x8] sm:$0xff]
      %v1023 = vld [vmem:[%s1020 + $0x10] sm:$0xff]
      %v1024 = vld [vmem:[%s1020 + $0x18] sm:$0xff]
      %v1025 = vld [vmem:[%s1020 + $0x20] sm:$0xff]
      %v1026 = vld [vmem:[%s1020 + $0x28] sm:$0xff]
      %v1027 = vld [vmem:[%s1020 + $0x30] sm:$0xff]
      %v1028 = vld [vmem:[%s1020 + $0x38] sm:$0xff]
      %v1029 = vld [vmem:[%s1020 + $0x40] sm:$0xff]
      %v1030 = vld [vmem:[%s1020 + $0x48] sm:$0xff]
      %v1031 = vld [vmem:[%s1020 + $0x50] sm:$0xff]
      %v1032 = vld [vmem:[%s1020 + $0x58] sm:$0xff]
      %v1033 = vld [vmem:[%s1020 + $0x60] sm:$0xff]
      %v1034 = vld [vmem:[%s1020 + $0x68] sm:$0xff]
      %v1035 = vld [vmem:[%s1020 + $0x70] sm:$0xff]
      %v1036 = vld [vmem:[%s1020 + $0x78] sm:$0xff]
      %1037 = vmatprep.subr.mxu0 0.0
      %1038 = vmatpush1.msra.mxu0 %v1021
      %1039 = vmatprep.subr.mxu0 0.0
      %1040 = vmatpush1.msra.mxu0 %v1022
      %1041 = vmatprep.subr.mxu0 0.0
      %1042 = vmatpush1.msra.mxu0 %v1023
      %1043 = vmatprep.subr.mxu0 0.0
      %1044 = vmatpush1.msra.mxu0 %v1024
      %1045 = vmatprep.subr.mxu0 0.0
      %1046 = vmatpush1.msra.mxu0 %v1025
      %1047 = vmatprep.subr.mxu0 0.0
      %1048 = vmatpush1.msra.mxu0 %v1026
      %1049 = vmatprep.subr.mxu0 0.0
      %1050 = vmatpush1.msra.mxu0 %v1027
      %1051 = vmatprep.subr.mxu0 0.0
      %1052 = vmatpush1.msra.mxu0 %v1028
      %1053 = vmatprep.subr.mxu0 0.0
      %1054 = vmatpush1.msra.mxu0 %v1029
      %1055 = vmatprep.subr.mxu0 0.0
      %1056 = vmatpush1.msra.mxu0 %v1030
      %1057 = vmatprep.subr.mxu0 0.0
      %1058 = vmatpush1.msra.mxu0 %v1031
      %1059 = vmatprep.subr.mxu0 0.0
      %1060 = vmatpush1.msra.mxu0 %v1032
      %1061 = vmatprep.subr.mxu0 0.0
      %1062 = vmatpush1.msra.mxu0 %v1033
      %1063 = vmatprep.subr.mxu0 0.0
      %1064 = vmatpush1.msra.mxu0 %v1034
      %1065 = vmatprep.subr.mxu0 0.0
      %1066 = vmatpush1.msra.mxu0 %v1035
      %1067 = vmatprep.subr.mxu0 0.0
      %1068 = vmatpush1.msra.mxu0 %v1036
      %1069 = vmatprep.subr.mxu0 0.0
      %1070 = vmatpush1.msra.mxu0 0.0
      %1071 = vmatprep.subr.mxu0 0.0
      %1072 = vmatpush1.msra.mxu0 0.0
      %1073 = vmatprep.subr.mxu0 0.0
      %1074 = vmatpush1.msra.mxu0 0.0
      %1075 = vmatprep.subr.mxu0 0.0
      %1076 = vmatpush1.msra.mxu0 0.0
      %1077 = vmatprep.subr.mxu0 0.0
      %1078 = vmatpush1.msra.mxu0 0.0
      %1079 = vmatprep.subr.mxu0 0.0
      %1080 = vmatpush1.msra.mxu0 0.0
      %1081 = vmatprep.subr.mxu0 0.0
      %1082 = vmatpush1.msra.mxu0 0.0
      %1083 = vmatprep.subr.mxu0 0.0
      %1084 = vmatpush1.msra.mxu0 0.0
      %1085 = vmatprep.subr.mxu0 0.0
      %1086 = vmatpush1.msra.mxu0 0.0
      %1087 = vmatprep.subr.mxu0 0.0
      %1088 = vmatpush1.msra.mxu0 0.0
      %1089 = vmatprep.subr.mxu0 0.0
      %1090 = vmatpush1.msra.mxu0 0.0
      %1091 = vmatprep.subr.mxu0 0.0
      %1092 = vmatpush1.msra.mxu0 0.0
      %1093 = vmatprep.subr.mxu0 0.0
      %1094 = vmatpush1.msra.mxu0 0.0
      %1095 = vmatprep.subr.mxu0 0.0
      %1096 = vmatpush1.msra.mxu0 0.0
      %1097 = vmatprep.subr.mxu0 0.0
      %1098 = vmatpush1.msra.mxu0 0.0
      %1099 = vmatprep.subr.mxu0 0.0
      %1100 = vmatpush1.msra.mxu0 0.0
      %1101 = vmatprep.mubr.f32.mxu0 0.0
      %1102 = vmatmul.mubr.f32.gmra.mrb[0].mxu0 %v1018
      %v1103 = vpop.f32.mrb[0].mxu0
      %v1104 = vadd.f32 0.0, %v1103
      %v1105 = vpop.f32.mrb[0].mxu0
      %1106 = vmatprep.mubr.f32.mxu0 0.0
      %1107 = vmatmul.mubr.f32.gmra.mrb[0].mxu0 %v1019
      %v1108 = vpop.f32.mrb[0].mxu0
      %v1109 = vadd.f32 0.0, %v1108
      %v1110 = vpop.f32.mrb[0].mxu0
      %1111 = vdwg.mxu0
      %1112 = vmatprep.subr.mxu0 0.0
      %1113 = vmatpush1.msra.mxu0 %v983
      %1114 = vmatprep.subr.mxu0 0.0
      %1115 = vmatpush1.msra.mxu0 %v984
      %1116 = vmatprep.subr.mxu0 0.0
      %1117 = vmatpush1.msra.mxu0 %v985
      %1118 = vmatprep.subr.mxu0 0.0
      %1119 = vmatpush1.msra.mxu0 %v986
      %1120 = vmatprep.subr.mxu0 0.0
      %1121 = vmatpush1.msra.mxu0 %v987
      %1122 = vmatprep.subr.mxu0 0.0
      %1123 = vmatpush1.msra.mxu0 %v988
      %1124 = vmatprep.subr.mxu0 0.0
      %1125 = vmatpush1.msra.mxu0 %v989
      %1126 = vmatprep.subr.mxu0 0.0
      %1127 = vmatpush1.msra.mxu0 %v990
      %1128 = vmatprep.subr.mxu0 0.0
      %1129 = vmatpush1.msra.mxu0 %v991
      %1130 = vmatprep.subr.mxu0 0.0
      %1131 = vmatpush1.msra.mxu0 %v992
      %1132 = vmatprep.subr.mxu0 0.0
      %1133 = vmatpush1.msra.mxu0 %v993
      %1134 = vmatprep.subr.mxu0 0.0
      %1135 = vmatpush1.msra.mxu0 %v994
      %1136 = vmatprep.subr.mxu0 0.0
      %1137 = vmatpush1.msra.mxu0 %v995
      %1138 = vmatprep.subr.mxu0 0.0
      %1139 = vmatpush1.msra.mxu0 %v996
      %1140 = vmatprep.subr.mxu0 0.0
      %1141 = vmatpush1.msra.mxu0 %v997
      %1142 = vmatprep.subr.mxu0 0.0
      %1143 = vmatpush1.msra.mxu0 %v998
      %1144 = vmatprep.subr.mxu0 0.0
      %1145 = vmatpush1.msra.mxu0 0.0
      %1146 = vmatprep.subr.mxu0 0.0
      %1147 = vmatpush1.msra.mxu0 0.0
      %1148 = vmatprep.subr.mxu0 0.0
      %1149 = vmatpush1.msra.mxu0 0.0
      %1150 = vmatprep.subr.mxu0 0.0
      %1151 = vmatpush1.msra.mxu0 0.0
      %1152 = vmatprep.subr.mxu0 0.0
      %1153 = vmatpush1.msra.mxu0 0.0
      %1154 = vmatprep.subr.mxu0 0.0
      %1155 = vmatpush1.msra.mxu0 0.0
      %1156 = vmatprep.subr.mxu0 0.0
      %1157 = vmatpush1.msra.mxu0 0.0
      %1158 = vmatprep.subr.mxu0 0.0
      %1159 = vmatpush1.msra.mxu0 0.0
      %1160 = vmatprep.subr.mxu0 0.0
      %1161 = vmatpush1.msra.mxu0 0.0
      %1162 = vmatprep.subr.mxu0 0.0
      %1163 = vmatpush1.msra.mxu0 0.0
      %1164 = vmatprep.subr.mxu0 0.0
      %1165 = vmatpush1.msra.mxu0 0.0
      %1166 = vmatprep.subr.mxu0 0.0
      %1167 = vmatpush1.msra.mxu0 0.0
      %1168 = vmatprep.subr.mxu0 0.0
      %1169 = vmatpush1.msra.mxu0 0.0
      %1170 = vmatprep.subr.mxu0 0.0
      %1171 = vmatpush1.msra.mxu0 0.0
      %1172 = vmatprep.subr.mxu0 0.0
      %1173 = vmatpush1.msra.mxu0 0.0
      %1174 = vmatprep.subr.mxu0 0.0
      %1175 = vmatpush1.msra.mxu0 0.0
      %1176 = vmatprep.mubr.f32.mxu0 0.0
      %1177 = vmatmul.mubr.f32.gmra.mrb[0].mxu0 %v981
      %v1178 = vpop.f32.mrb[0].mxu0
      %v1179 = vadd.f32 %v1104, %v1178
      %v1180 = vpop.f32.mrb[0].mxu0
      %1181 = vmatprep.mubr.f32.mxu0 0.0
      %1182 = vmatmul.mubr.f32.gmra.mrb[0].mxu0 %v982
      %v1183 = vpop.f32.mrb[0].mxu0
      %v1184 = vadd.f32 %v1109, %v1183
      %v1185 = vpop.f32.mrb[0].mxu0
      %1186 = vdwg.mxu0
      %v1187 = vld [vmem:[#allocation2 + $0x4] sm:$0xff]
      %v1188 = vld [vmem:[#allocation2 + $0xc] sm:$0xff]
      %s1189 = scalar_lea.vmem %s4, 384
      %v1190 = vld [vmem:[%s1189] sm:$0xff]
      %v1191 = vld [vmem:[%s1189 + $0x8] sm:$0xff]
      %v1192 = vld [vmem:[%s1189 + $0x10] sm:$0xff]
      %v1193 = vld [vmem:[%s1189 + $0x18] sm:$0xff]
      %v1194 = vld [vmem:[%s1189 + $0x20] sm:$0xff]
      %v1195 = vld [vmem:[%s1189 + $0x28] sm:$0xff]
      %v1196 = vld [vmem:[%s1189 + $0x30] sm:$0xff]
      %v1197 = vld [vmem:[%s1189 + $0x38] sm:$0xff]
      %v1198 = vld [vmem:[%s1189 + $0x40] sm:$0xff]
      %v1199 = vld [vmem:[%s1189 + $0x48] sm:$0xff]
      %v1200 = vld [vmem:[%s1189 + $0x50] sm:$0xff]
      %v1201 = vld [vmem:[%s1189 + $0x58] sm:$0xff]
      %v1202 = vld [vmem:[%s1189 + $0x60] sm:$0xff]
      %v1203 = vld [vmem:[%s1189 + $0x68] sm:$0xff]
      %v1204 = vld [vmem:[%s1189 + $0x70] sm:$0xff]
      %v1205 = vld [vmem:[%s1189 + $0x78] sm:$0xff]
      %1206 = vmatprep.subr.mxu0 0.0
      %1207 = vmatpush1.msra.mxu0 %v1190
      %1208 = vmatprep.subr.mxu0 0.0
      %1209 = vmatpush1.msra.mxu0 %v1191
      %1210 = vmatprep.subr.mxu0 0.0
      %1211 = vmatpush1.msra.mxu0 %v1192
      %1212 = vmatprep.subr.mxu0 0.0
      %1213 = vmatpush1.msra.mxu0 %v1193
      %1214 = vmatprep.subr.mxu0 0.0
      %1215 = vmatpush1.msra.mxu0 %v1194
      %1216 = vmatprep.subr.mxu0 0.0
      %1217 = vmatpush1.msra.mxu0 %v1195
      %1218 = vmatprep.subr.mxu0 0.0
      %1219 = vmatpush1.msra.mxu0 %v1196
      %1220 = vmatprep.subr.mxu0 0.0
      %1221 = vmatpush1.msra.mxu0 %v1197
      %1222 = vmatprep.subr.mxu0 0.0
      %1223 = vmatpush1.msra.mxu0 %v1198
      %1224 = vmatprep.subr.mxu0 0.0
      %1225 = vmatpush1.msra.mxu0 %v1199
      %1226 = vmatprep.subr.mxu0 0.0
      %1227 = vmatpush1.msra.mxu0 %v1200
      %1228 = vmatprep.subr.mxu0 0.0
      %1229 = vmatpush1.msra.mxu0 %v1201
      %1230 = vmatprep.subr.mxu0 0.0
      %1231 = vmatpush1.msra.mxu0 %v1202
      %1232 = vmatprep.subr.mxu0 0.0
      %1233 = vmatpush1.msra.mxu0 %v1203
      %1234 = vmatprep.subr.mxu0 0.0
      %1235 = vmatpush1.msra.mxu0 %v1204
      %1236 = vmatprep.subr.mxu0 0.0
      %1237 = vmatpush1.msra.mxu0 %v1205
      %1238 = vmatprep.subr.mxu0 0.0
      %1239 = vmatpush1.msra.mxu0 0.0
      %1240 = vmatprep.subr.mxu0 0.0
      %1241 = vmatpush1.msra.mxu0 0.0
      %1242 = vmatprep.subr.mxu0 0.0
      %1243 = vmatpush1.msra.mxu0 0.0
      %1244 = vmatprep.subr.mxu0 0.0
      %1245 = vmatpush1.msra.mxu0 0.0
      %1246 = vmatprep.subr.mxu0 0.0
      %1247 = vmatpush1.msra.mxu0 0.0
      %1248 = vmatprep.subr.mxu0 0.0
      %1249 = vmatpush1.msra.mxu0 0.0
      %1250 = vmatprep.subr.mxu0 0.0
      %1251 = vmatpush1.msra.mxu0 0.0
      %1252 = vmatprep.subr.mxu0 0.0
      %1253 = vmatpush1.msra.mxu0 0.0
      %1254 = vmatprep.subr.mxu0 0.0
      %1255 = vmatpush1.msra.mxu0 0.0
      %1256 = vmatprep.subr.mxu0 0.0
      %1257 = vmatpush1.msra.mxu0 0.0
      %1258 = vmatprep.subr.mxu0 0.0
      %1259 = vmatpush1.msra.mxu0 0.0
      %1260 = vmatprep.subr.mxu0 0.0
      %1261 = vmatpush1.msra.mxu0 0.0
      %1262 = vmatprep.subr.mxu0 0.0
      %1263 = vmatpush1.msra.mxu0 0.0
      %1264 = vmatprep.subr.mxu0 0.0
      %1265 = vmatpush1.msra.mxu0 0.0
      %1266 = vmatprep.subr.mxu0 0.0
      %1267 = vmatpush1.msra.mxu0 0.0
      %1268 = vmatprep.subr.mxu0 0.0
      %1269 = vmatpush1.msra.mxu0 0.0
      %1270 = vmatprep.mubr.f32.mxu0 0.0
      %1271 = vmatmul.mubr.f32.gmra.mrb[0].mxu0 %v1187
      %v1272 = vpop.f32.mrb[0].mxu0
      %v1273 = vadd.f32 0.0, %v1272
      %v1274 = vpop.f32.mrb[0].mxu0
      %1275 = vmatprep.mubr.f32.mxu0 0.0
      %1276 = vmatmul.mubr.f32.gmra.mrb[0].mxu0 %v1188
      %v1277 = vpop.f32.mrb[0].mxu0
      %v1278 = vadd.f32 0.0, %v1277
      %v1279 = vpop.f32.mrb[0].mxu0
      %1280 = vdwg.mxu0
      %1281 = vmatprep.subr.mxu0 0.0
      %1282 = vmatpush1.msra.mxu0 %v1002
      %1283 = vmatprep.subr.mxu0 0.0
      %1284 = vmatpush1.msra.mxu0 %v1003
      %1285 = vmatprep.subr.mxu0 0.0
      %1286 = vmatpush1.msra.mxu0 %v1004
      %1287 = vmatprep.subr.mxu0 0.0
      %1288 = vmatpush1.msra.mxu0 %v1005
      %1289 = vmatprep.subr.mxu0 0.0
      %1290 = vmatpush1.msra.mxu0 %v1006
      %1291 = vmatprep.subr.mxu0 0.0
      %1292 = vmatpush1.msra.mxu0 %v1007
      %1293 = vmatprep.subr.mxu0 0.0
      %1294 = vmatpush1.msra.mxu0 %v1008
      %1295 = vmatprep.subr.mxu0 0.0
      %1296 = vmatpush1.msra.mxu0 %v1009
      %1297 = vmatprep.subr.mxu0 0.0
      %1298 = vmatpush1.msra.mxu0 %v1010
      %1299 = vmatprep.subr.mxu0 0.0
      %1300 = vmatpush1.msra.mxu0 %v1011
      %1301 = vmatprep.subr.mxu0 0.0
      %1302 = vmatpush1.msra.mxu0 %v1012
      %1303 = vmatprep.subr.mxu0 0.0
      %1304 = vmatpush1.msra.mxu0 %v1013
      %1305 = vmatprep.subr.mxu0 0.0
      %1306 = vmatpush1.msra.mxu0 %v1014
      %1307 = vmatprep.subr.mxu0 0.0
      %1308 = vmatpush1.msra.mxu0 %v1015
      %1309 = vmatprep.subr.mxu0 0.0
      %1310 = vmatpush1.msra.mxu0 %v1016
      %1311 = vmatprep.subr.mxu0 0.0
      %1312 = vmatpush1.msra.mxu0 %v1017
      %1313 = vmatprep.subr.mxu0 0.0
      %1314 = vmatpush1.msra.mxu0 0.0
      %1315 = vmatprep.subr.mxu0 0.0
      %1316 = vmatpush1.msra.mxu0 0.0
      %1317 = vmatprep.subr.mxu0 0.0
      %1318 = vmatpush1.msra.mxu0 0.0
      %1319 = vmatprep.subr.mxu0 0.0
      %1320 = vmatpush1.msra.mxu0 0.0
      %1321 = vmatprep.subr.mxu0 0.0
      %1322 = vmatpush1.msra.mxu0 0.0
      %1323 = vmatprep.subr.mxu0 0.0
      %1324 = vmatpush1.msra.mxu0 0.0
      %1325 = vmatprep.subr.mxu0 0.0
      %1326 = vmatpush1.msra.mxu0 0.0
      %1327 = vmatprep.subr.mxu0 0.0
      %1328 = vmatpush1.msra.mxu0 0.0
      %1329 = vmatprep.subr.mxu0 0.0
      %1330 = vmatpush1.msra.mxu0 0.0
      %1331 = vmatprep.subr.mxu0 0.0
      %1332 = vmatpush1.msra.mxu0 0.0
      %1333 = vmatprep.subr.mxu0 0.0
      %1334 = vmatpush1.msra.mxu0 0.0
      %1335 = vmatprep.subr.mxu0 0.0
      %1336 = vmatpush1.msra.mxu0 0.0
      %1337 = vmatprep.subr.mxu0 0.0
      %1338 = vmatpush1.msra.mxu0 0.0
      %1339 = vmatprep.subr.mxu0 0.0
      %1340 = vmatpush1.msra.mxu0 0.0
      %1341 = vmatprep.subr.mxu0 0.0
      %1342 = vmatpush1.msra.mxu0 0.0
      %1343 = vmatprep.subr.mxu0 0.0
      %1344 = vmatpush1.msra.mxu0 0.0
      %1345 = vmatprep.mubr.f32.mxu0 0.0
      %1346 = vmatmul.mubr.f32.gmra.mrb[0].mxu0 %v999
      %v1347 = vpop.f32.mrb[0].mxu0
      %v1348 = vadd.f32 %v1273, %v1347
      %v1349 = vpop.f32.mrb[0].mxu0
      %1350 = vmatprep.mubr.f32.mxu0 0.0
      %1351 = vmatmul.mubr.f32.gmra.mrb[0].mxu0 %v1000
      %v1352 = vpop.f32.mrb[0].mxu0
      %v1353 = vadd.f32 %v1278, %v1352
      %v1354 = vpop.f32.mrb[0].mxu0
      %1355 = vdwg.mxu0
      %v1356 = vld [vmem:[#allocation2 + $0x5] sm:$0xff]
      %v1357 = vld [vmem:[#allocation2 + $0xd] sm:$0xff]
      %s1358 = scalar_lea.vmem %s4, 512
      %v1359 = vld [vmem:[%s1358] sm:$0xff]
      %v1360 = vld [vmem:[%s1358 + $0x8] sm:$0xff]
      %v1361 = vld [vmem:[%s1358 + $0x10] sm:$0xff]
      %v1362 = vld [vmem:[%s1358 + $0x18] sm:$0xff]
      %v1363 = vld [vmem:[%s1358 + $0x20] sm:$0xff]
      %v1364 = vld [vmem:[%s1358 + $0x28] sm:$0xff]
      %v1365 = vld [vmem:[%s1358 + $0x30] sm:$0xff]
      %v1366 = vld [vmem:[%s1358 + $0x38] sm:$0xff]
      %v1367 = vld [vmem:[%s1358 + $0x40] sm:$0xff]
      %v1368 = vld [vmem:[%s1358 + $0x48] sm:$0xff]
      %v1369 = vld [vmem:[%s1358 + $0x50] sm:$0xff]
      %v1370 = vld [vmem:[%s1358 + $0x58] sm:$0xff]
      %v1371 = vld [vmem:[%s1358 + $0x60] sm:$0xff]
      %v1372 = vld [vmem:[%s1358 + $0x68] sm:$0xff]
      %v1373 = vld [vmem:[%s1358 + $0x70] sm:$0xff]
      %v1374 = vld [vmem:[%s1358 + $0x78] sm:$0xff]
      %1375 = vmatprep.subr.mxu0 0.0
      %1376 = vmatpush1.msra.mxu0 %v1359
      %1377 = vmatprep.subr.mxu0 0.0
      %1378 = vmatpush1.msra.mxu0 %v1360
      %1379 = vmatprep.subr.mxu0 0.0
      %1380 = vmatpush1.msra.mxu0 %v1361
      %1381 = vmatprep.subr.mxu0 0.0
      %1382 = vmatpush1.msra.mxu0 %v1362
      %1383 = vmatprep.subr.mxu0 0.0
      %1384 = vmatpush1.msra.mxu0 %v1363
      %1385 = vmatprep.subr.mxu0 0.0
      %1386 = vmatpush1.msra.mxu0 %v1364
      %1387 = vmatprep.subr.mxu0 0.0
      %1388 = vmatpush1.msra.mxu0 %v1365
      %1389 = vmatprep.subr.mxu0 0.0
      %1390 = vmatpush1.msra.mxu0 %v1366
      %1391 = vmatprep.subr.mxu0 0.0
      %1392 = vmatpush1.msra.mxu0 %v1367
      %1393 = vmatprep.subr.mxu0 0.0
      %1394 = vmatpush1.msra.mxu0 %v1368
      %1395 = vmatprep.subr.mxu0 0.0
      %1396 = vmatpush1.msra.mxu0 %v1369
      %1397 = vmatprep.subr.mxu0 0.0
      %1398 = vmatpush1.msra.mxu0 %v1370
      %1399 = vmatprep.subr.mxu0 0.0
      %1400 = vmatpush1.msra.mxu0 %v1371
      %1401 = vmatprep.subr.mxu0 0.0
      %1402 = vmatpush1.msra.mxu0 %v1372
      %1403 = vmatprep.subr.mxu0 0.0
      %1404 = vmatpush1.msra.mxu0 %v1373
      %1405 = vmatprep.subr.mxu0 0.0
      %1406 = vmatpush1.msra.mxu0 %v1374
      %1407 = vmatprep.subr.mxu0 0.0
      %1408 = vmatpush1.msra.mxu0 0.0
      %1409 = vmatprep.subr.mxu0 0.0
      %1410 = vmatpush1.msra.mxu0 0.0
      %1411 = vmatprep.subr.mxu0 0.0
      %1412 = vmatpush1.msra.mxu0 0.0
      %1413 = vmatprep.subr.mxu0 0.0
      %1414 = vmatpush1.msra.mxu0 0.0
      %1415 = vmatprep.subr.mxu0 0.0
      %1416 = vmatpush1.msra.mxu0 0.0
      %1417 = vmatprep.subr.mxu0 0.0
      %1418 = vmatpush1.msra.mxu0 0.0
      %1419 = vmatprep.subr.mxu0 0.0
      %1420 = vmatpush1.msra.mxu0 0.0
      %1421 = vmatprep.subr.mxu0 0.0
      %1422 = vmatpush1.msra.mxu0 0.0
      %1423 = vmatprep.subr.mxu0 0.0
      %1424 = vmatpush1.msra.mxu0 0.0
      %1425 = vmatprep.subr.mxu0 0.0
      %1426 = vmatpush1.msra.mxu0 0.0
      %1427 = vmatprep.subr.mxu0 0.0
      %1428 = vmatpush1.msra.mxu0 0.0
      %1429 = vmatprep.subr.mxu0 0.0
      %1430 = vmatpush1.msra.mxu0 0.0
      %1431 = vmatprep.subr.mxu0 0.0
      %1432 = vmatpush1.msra.mxu0 0.0
      %1433 = vmatprep.subr.mxu0 0.0
      %1434 = vmatpush1.msra.mxu0 0.0
      %1435 = vmatprep.subr.mxu0 0.0
      %1436 = vmatpush1.msra.mxu0 0.0
      %1437 = vmatprep.subr.mxu0 0.0
      %1438 = vmatpush1.msra.mxu0 0.0
      %1439 = vmatprep.mubr.f32.mxu0 0.0
      %1440 = vmatmul.mubr.f32.gmra.mrb[0].mxu0 %v1356
      %v1441 = vpop.f32.mrb[0].mxu0
      %v1442 = vadd.f32 0.0, %v1441
      %v1443 = vpop.f32.mrb[0].mxu0
      %1444 = vmatprep.mubr.f32.mxu0 0.0
      %1445 = vmatmul.mubr.f32.gmra.mrb[0].mxu0 %v1357
      %v1446 = vpop.f32.mrb[0].mxu0
      %v1447 = vadd.f32 0.0, %v1446
      %v1448 = vpop.f32.mrb[0].mxu0
      %1449 = vdwg.mxu0
      %v1450 = vadd.f32 %v1179, %v1442
      %v1451 = vadd.f32 %v1184, %v1447
      %v1452 = vld [vmem:[#allocation2 + $0x6] sm:$0xff]
      %v1453 = vld [vmem:[#allocation2 + $0xe] sm:$0xff]
      %s1454 = scalar_lea.vmem %s4, 640
      %v1455 = vld [vmem:[%s1454] sm:$0xff]
      %v1456 = vld [vmem:[%s1454 + $0x8] sm:$0xff]
      %v1457 = vld [vmem:[%s1454 + $0x10] sm:$0xff]
      %v1458 = vld [vmem:[%s1454 + $0x18] sm:$0xff]
      %v1459 = vld [vmem:[%s1454 + $0x20] sm:$0xff]
      %v1460 = vld [vmem:[%s1454 + $0x28] sm:$0xff]
      %v1461 = vld [vmem:[%s1454 + $0x30] sm:$0xff]
      %v1462 = vld [vmem:[%s1454 + $0x38] sm:$0xff]
      %v1463 = vld [vmem:[%s1454 + $0x40] sm:$0xff]
      %v1464 = vld [vmem:[%s1454 + $0x48] sm:$0xff]
      %v1465 = vld [vmem:[%s1454 + $0x50] sm:$0xff]
      %v1466 = vld [vmem:[%s1454 + $0x58] sm:$0xff]
      %v1467 = vld [vmem:[%s1454 + $0x60] sm:$0xff]
      %v1468 = vld [vmem:[%s1454 + $0x68] sm:$0xff]
      %v1469 = vld [vmem:[%s1454 + $0x70] sm:$0xff]
      %v1470 = vld [vmem:[%s1454 + $0x78] sm:$0xff]
      %1471 = vmatprep.subr.mxu0 0.0
      %1472 = vmatpush1.msra.mxu0 %v1455
      %1473 = vmatprep.subr.mxu0 0.0
      %1474 = vmatpush1.msra.mxu0 %v1456
      %1475 = vmatprep.subr.mxu0 0.0
      %1476 = vmatpush1.msra.mxu0 %v1457
      %1477 = vmatprep.subr.mxu0 0.0
      %1478 = vmatpush1.msra.mxu0 %v1458
      %1479 = vmatprep.subr.mxu0 0.0
      %1480 = vmatpush1.msra.mxu0 %v1459
      %1481 = vmatprep.subr.mxu0 0.0
      %1482 = vmatpush1.msra.mxu0 %v1460
      %1483 = vmatprep.subr.mxu0 0.0
      %1484 = vmatpush1.msra.mxu0 %v1461
      %1485 = vmatprep.subr.mxu0 0.0
      %1486 = vmatpush1.msra.mxu0 %v1462
      %1487 = vmatprep.subr.mxu0 0.0
      %1488 = vmatpush1.msra.mxu0 %v1463
      %1489 = vmatprep.subr.mxu0 0.0
      %1490 = vmatpush1.msra.mxu0 %v1464
      %1491 = vmatprep.subr.mxu0 0.0
      %1492 = vmatpush1.msra.mxu0 %v1465
      %1493 = vmatprep.subr.mxu0 0.0
      %1494 = vmatpush1.msra.mxu0 %v1466
      %1495 = vmatprep.subr.mxu0 0.0
      %1496 = vmatpush1.msra.mxu0 %v1467
      %1497 = vmatprep.subr.mxu0 0.0
      %1498 = vmatpush1.msra.mxu0 %v1468
      %1499 = vmatprep.subr.mxu0 0.0
      %1500 = vmatpush1.msra.mxu0 %v1469
      %1501 = vmatprep.subr.mxu0 0.0
      %1502 = vmatpush1.msra.mxu0 %v1470
      %1503 = vmatprep.subr.mxu0 0.0
      %1504 = vmatpush1.msra.mxu0 0.0
      %1505 = vmatprep.subr.mxu0 0.0
      %1506 = vmatpush1.msra.mxu0 0.0
      %1507 = vmatprep.subr.mxu0 0.0
      %1508 = vmatpush1.msra.mxu0 0.0
      %1509 = vmatprep.subr.mxu0 0.0
      %1510 = vmatpush1.msra.mxu0 0.0
      %1511 = vmatprep.subr.mxu0 0.0
      %1512 = vmatpush1.msra.mxu0 0.0
      %1513 = vmatprep.subr.mxu0 0.0
      %1514 = vmatpush1.msra.mxu0 0.0
      %1515 = vmatprep.subr.mxu0 0.0
      %1516 = vmatpush1.msra.mxu0 0.0
      %1517 = vmatprep.subr.mxu0 0.0
      %1518 = vmatpush1.msra.mxu0 0.0
      %1519 = vmatprep.subr.mxu0 0.0
      %1520 = vmatpush1.msra.mxu0 0.0
      %1521 = vmatprep.subr.mxu0 0.0
      %1522 = vmatpush1.msra.mxu0 0.0
      %1523 = vmatprep.subr.mxu0 0.0
      %1524 = vmatpush1.msra.mxu0 0.0
      %1525 = vmatprep.subr.mxu0 0.0
      %1526 = vmatpush1.msra.mxu0 0.0
      %1527 = vmatprep.subr.mxu0 0.0
      %1528 = vmatpush1.msra.mxu0 0.0
      %1529 = vmatprep.subr.mxu0 0.0
      %1530 = vmatpush1.msra.mxu0 0.0
      %1531 = vmatprep.subr.mxu0 0.0
      %1532 = vmatpush1.msra.mxu0 0.0
      %1533 = vmatprep.subr.mxu0 0.0
      %1534 = vmatpush1.msra.mxu0 0.0
      %1535 = vmatprep.mubr.f32.mxu0 0.0
      %1536 = vmatmul.mubr.f32.gmra.mrb[0].mxu0 %v1452
      %v1537 = vpop.f32.mrb[0].mxu0
      %v1538 = vadd.f32 0.0, %v1537
      %v1539 = vpop.f32.mrb[0].mxu0
      %1540 = vmatprep.mubr.f32.mxu0 0.0
      %1541 = vmatmul.mubr.f32.gmra.mrb[0].mxu0 %v1453
      %v1542 = vpop.f32.mrb[0].mxu0
      %v1543 = vadd.f32 0.0, %v1542
      %v1544 = vpop.f32.mrb[0].mxu0
      %1545 = vdwg.mxu0
      %v1546 = vadd.f32 %v1348, %v1538
      %v1547 = vadd.f32 %v1353, %v1543
      %v1548 = vld [vmem:[#allocation2 + $0x7] sm:$0xff]
      %v1549 = vld [vmem:[#allocation2 + $0xf] sm:$0xff]
      %s1550 = scalar_lea.vmem %s4, 768
      %v1551 = vld [vmem:[%s1550] sm:$0xff]
      %v1552 = vld [vmem:[%s1550 + $0x8] sm:$0xff]
      %v1553 = vld [vmem:[%s1550 + $0x10] sm:$0xff]
      %v1554 = vld [vmem:[%s1550 + $0x18] sm:$0xff]
      %v1555 = vld [vmem:[%s1550 + $0x20] sm:$0xff]
      %v1556 = vld [vmem:[%s1550 + $0x28] sm:$0xff]
      %v1557 = vld [vmem:[%s1550 + $0x30] sm:$0xff]
      %v1558 = vld [vmem:[%s1550 + $0x38] sm:$0xff]
      %v1559 = vld [vmem:[%s1550 + $0x40] sm:$0xff]
      %v1560 = vld [vmem:[%s1550 + $0x48] sm:$0xff]
      %v1561 = vld [vmem:[%s1550 + $0x50] sm:$0xff]
      %v1562 = vld [vmem:[%s1550 + $0x58] sm:$0xff]
      %v1563 = vld [vmem:[%s1550 + $0x60] sm:$0xff]
      %v1564 = vld [vmem:[%s1550 + $0x68] sm:$0xff]
      %v1565 = vld [vmem:[%s1550 + $0x70] sm:$0xff]
      %v1566 = vld [vmem:[%s1550 + $0x78] sm:$0xff]
      %1567 = vmatprep.subr.mxu0 0.0
      %1568 = vmatpush1.msra.mxu0 %v1551
      %1569 = vmatprep.subr.mxu0 0.0
      %1570 = vmatpush1.msra.mxu0 %v1552
      %1571 = vmatprep.subr.mxu0 0.0
      %1572 = vmatpush1.msra.mxu0 %v1553
      %1573 = vmatprep.subr.mxu0 0.0
      %1574 = vmatpush1.msra.mxu0 %v1554
      %1575 = vmatprep.subr.mxu0 0.0
      %1576 = vmatpush1.msra.mxu0 %v1555
      %1577 = vmatprep.subr.mxu0 0.0
      %1578 = vmatpush1.msra.mxu0 %v1556
      %1579 = vmatprep.subr.mxu0 0.0
      %1580 = vmatpush1.msra.mxu0 %v1557
      %1581 = vmatprep.subr.mxu0 0.0
      %1582 = vmatpush1.msra.mxu0 %v1558
      %1583 = vmatprep.subr.mxu0 0.0
      %1584 = vmatpush1.msra.mxu0 %v1559
      %1585 = vmatprep.subr.mxu0 0.0
      %1586 = vmatpush1.msra.mxu0 %v1560
      %1587 = vmatprep.subr.mxu0 0.0
      %1588 = vmatpush1.msra.mxu0 %v1561
      %1589 = vmatprep.subr.mxu0 0.0
      %1590 = vmatpush1.msra.mxu0 %v1562
      %1591 = vmatprep.subr.mxu0 0.0
      %1592 = vmatpush1.msra.mxu0 %v1563
      %1593 = vmatprep.subr.mxu0 0.0
      %1594 = vmatpush1.msra.mxu0 %v1564
      %1595 = vmatprep.subr.mxu0 0.0
      %1596 = vmatpush1.msra.mxu0 %v1565
      %1597 = vmatprep.subr.mxu0 0.0
      %1598 = vmatpush1.msra.mxu0 %v1566
      %1599 = vmatprep.subr.mxu0 0.0
      %1600 = vmatpush1.msra.mxu0 0.0
      %1601 = vmatprep.subr.mxu0 0.0
      %1602 = vmatpush1.msra.mxu0 0.0
      %1603 = vmatprep.subr.mxu0 0.0
      %1604 = vmatpush1.msra.mxu0 0.0
      %1605 = vmatprep.subr.mxu0 0.0
      %1606 = vmatpush1.msra.mxu0 0.0
      %1607 = vmatprep.subr.mxu0 0.0
      %1608 = vmatpush1.msra.mxu0 0.0
      %1609 = vmatprep.subr.mxu0 0.0
      %1610 = vmatpush1.msra.mxu0 0.0
      %1611 = vmatprep.subr.mxu0 0.0
      %1612 = vmatpush1.msra.mxu0 0.0
      %1613 = vmatprep.subr.mxu0 0.0
      %1614 = vmatpush1.msra.mxu0 0.0
      %1615 = vmatprep.subr.mxu0 0.0
      %1616 = vmatpush1.msra.mxu0 0.0
      %1617 = vmatprep.subr.mxu0 0.0
      %1618 = vmatpush1.msra.mxu0 0.0
      %1619 = vmatprep.subr.mxu0 0.0
      %1620 = vmatpush1.msra.mxu0 0.0
      %1621 = vmatprep.subr.mxu0 0.0
      %1622 = vmatpush1.msra.mxu0 0.0
      %1623 = vmatprep.subr.mxu0 0.0
      %1624 = vmatpush1.msra.mxu0 0.0
      %1625 = vmatprep.subr.mxu0 0.0
      %1626 = vmatpush1.msra.mxu0 0.0
      %1627 = vmatprep.subr.mxu0 0.0
      %1628 = vmatpush1.msra.mxu0 0.0
      %1629 = vmatprep.subr.mxu0 0.0
      %1630 = vmatpush1.msra.mxu0 0.0
      %1631 = vmatprep.mubr.f32.mxu0 0.0
      %1632 = vmatmul.mubr.f32.gmra.mrb[0].mxu0 %v1548
      %v1633 = vpop.f32.mrb[0].mxu0
      %v1634 = vadd.f32 0.0, %v1633
      %v1635 = vpop.f32.mrb[0].mxu0
      %1636 = vmatprep.mubr.f32.mxu0 0.0
      %1637 = vmatmul.mubr.f32.gmra.mrb[0].mxu0 %v1549
      %v1638 = vpop.f32.mrb[0].mxu0
      %v1639 = vadd.f32 0.0, %v1638
      %v1640 = vpop.f32.mrb[0].mxu0
      %1641 = vdwg.mxu0
      %v1642 = vadd.f32 %v1450, %v1634
      %v1643 = vadd.f32 %v1451, %v1639
      %v1644 = vld [vmem:[#allocation2 + $0x8] sm:$0xff]
      %v1645 = vld [vmem:[#allocation2 + $0x10] sm:$0xff]
      %s1646 = scalar_lea.vmem %s4, 896
      %v1647 = vld [vmem:[%s1646] sm:$0xff]
      %v1648 = vld [vmem:[%s1646 + $0x8] sm:$0xff]
      %v1649 = vld [vmem:[%s1646 + $0x10] sm:$0xff]
      %v1650 = vld [vmem:[%s1646 + $0x18] sm:$0xff]
      %v1651 = vld [vmem:[%s1646 + $0x20] sm:$0xff]
      %v1652 = vld [vmem:[%s1646 + $0x28] sm:$0xff]
      %v1653 = vld [vmem:[%s1646 + $0x30] sm:$0xff]
      %v1654 = vld [vmem:[%s1646 + $0x38] sm:$0xff]
      %v1655 = vld [vmem:[%s1646 + $0x40] sm:$0xff]
      %v1656 = vld [vmem:[%s1646 + $0x48] sm:$0xff]
      %v1657 = vld [vmem:[%s1646 + $0x50] sm:$0xff]
      %v1658 = vld [vmem:[%s1646 + $0x58] sm:$0xff]
      %v1659 = vld [vmem:[%s1646 + $0x60] sm:$0xff]
      %v1660 = vld [vmem:[%s1646 + $0x68] sm:$0xff]
      %v1661 = vld [vmem:[%s1646 + $0x70] sm:$0xff]
      %v1662 = vld [vmem:[%s1646 + $0x78] sm:$0xff]
      %1663 = vmatprep.subr.mxu0 0.0
      %1664 = vmatpush1.msra.mxu0 %v1647
      %1665 = vmatprep.subr.mxu0 0.0
      %1666 = vmatpush1.msra.mxu0 %v1648
      %1667 = vmatprep.subr.mxu0 0.0
      %1668 = vmatpush1.msra.mxu0 %v1649
      %1669 = vmatprep.subr.mxu0 0.0
      %1670 = vmatpush1.msra.mxu0 %v1650
      %1671 = vmatprep.subr.mxu0 0.0
      %1672 = vmatpush1.msra.mxu0 %v1651
      %1673 = vmatprep.subr.mxu0 0.0
      %1674 = vmatpush1.msra.mxu0 %v1652
      %1675 = vmatprep.subr.mxu0 0.0
      %1676 = vmatpush1.msra.mxu0 %v1653
      %1677 = vmatprep.subr.mxu0 0.0
      %1678 = vmatpush1.msra.mxu0 %v1654
      %1679 = vmatprep.subr.mxu0 0.0
      %1680 = vmatpush1.msra.mxu0 %v1655
      %1681 = vmatprep.subr.mxu0 0.0
      %1682 = vmatpush1.msra.mxu0 %v1656
      %1683 = vmatprep.subr.mxu0 0.0
      %1684 = vmatpush1.msra.mxu0 %v1657
      %1685 = vmatprep.subr.mxu0 0.0
      %1686 = vmatpush1.msra.mxu0 %v1658
      %1687 = vmatprep.subr.mxu0 0.0
      %1688 = vmatpush1.msra.mxu0 %v1659
      %1689 = vmatprep.subr.mxu0 0.0
      %1690 = vmatpush1.msra.mxu0 %v1660
      %1691 = vmatprep.subr.mxu0 0.0
      %1692 = vmatpush1.msra.mxu0 %v1661
      %1693 = vmatprep.subr.mxu0 0.0
      %1694 = vmatpush1.msra.mxu0 %v1662
      %1695 = vmatprep.subr.mxu0 0.0
      %1696 = vmatpush1.msra.mxu0 0.0
      %1697 = vmatprep.subr.mxu0 0.0
      %1698 = vmatpush1.msra.mxu0 0.0
      %1699 = vmatprep.subr.mxu0 0.0
      %1700 = vmatpush1.msra.mxu0 0.0
      %1701 = vmatprep.subr.mxu0 0.0
      %1702 = vmatpush1.msra.mxu0 0.0
      %1703 = vmatprep.subr.mxu0 0.0
      %1704 = vmatpush1.msra.mxu0 0.0
      %1705 = vmatprep.subr.mxu0 0.0
      %1706 = vmatpush1.msra.mxu0 0.0
      %1707 = vmatprep.subr.mxu0 0.0
      %1708 = vmatpush1.msra.mxu0 0.0
      %1709 = vmatprep.subr.mxu0 0.0
      %1710 = vmatpush1.msra.mxu0 0.0
      %1711 = vmatprep.subr.mxu0 0.0
      %1712 = vmatpush1.msra.mxu0 0.0
      %1713 = vmatprep.subr.mxu0 0.0
      %1714 = vmatpush1.msra.mxu0 0.0
      %1715 = vmatprep.subr.mxu0 0.0
      %1716 = vmatpush1.msra.mxu0 0.0
      %1717 = vmatprep.subr.mxu0 0.0
      %1718 = vmatpush1.msra.mxu0 0.0
      %1719 = vmatprep.subr.mxu0 0.0
      %1720 = vmatpush1.msra.mxu0 0.0
      %1721 = vmatprep.subr.mxu0 0.0
      %1722 = vmatpush1.msra.mxu0 0.0
      %1723 = vmatprep.subr.mxu0 0.0
      %1724 = vmatpush1.msra.mxu0 0.0
      %1725 = vmatprep.subr.mxu0 0.0
      %1726 = vmatpush1.msra.mxu0 0.0
      %1727 = vmatprep.mubr.f32.mxu0 0.0
      %1728 = vmatmul.mubr.f32.gmra.mrb[0].mxu0 %v1644
      %v1729 = vpop.f32.mrb[0].mxu0
      %v1730 = vadd.f32 0.0, %v1729
      %v1731 = vpop.f32.mrb[0].mxu0
      %1732 = vmatprep.mubr.f32.mxu0 0.0
      %1733 = vmatmul.mubr.f32.gmra.mrb[0].mxu0 %v1645
      %v1734 = vpop.f32.mrb[0].mxu0
      %v1735 = vadd.f32 0.0, %v1734
      %v1736 = vpop.f32.mrb[0].mxu0
      %1737 = vdwg.mxu0
      %v1738 = vadd.f32 %v1546, %v1730
      %v1739 = vadd.f32 %v1547, %v1735
      %v1740 = vld [vmem:[#allocation2 + $0x9] sm:$0xff]
      %v1741 = vld [vmem:[#allocation2 + $0x11] sm:$0xff]
      %s1742 = scalar_lea.vmem %s4, 1024
      %v1743 = vld [vmem:[%s1742] sm:$0xff]
      %v1744 = vld [vmem:[%s1742 + $0x8] sm:$0xff]
      %v1745 = vld [vmem:[%s1742 + $0x10] sm:$0xff]
      %v1746 = vld [vmem:[%s1742 + $0x18] sm:$0xff]
      %v1747 = vld [vmem:[%s1742 + $0x20] sm:$0xff]
      %v1748 = vld [vmem:[%s1742 + $0x28] sm:$0xff]
      %v1749 = vld [vmem:[%s1742 + $0x30] sm:$0xff]
      %v1750 = vld [vmem:[%s1742 + $0x38] sm:$0xff]
      %v1751 = vld [vmem:[%s1742 + $0x40] sm:$0xff]
      %v1752 = vld [vmem:[%s1742 + $0x48] sm:$0xff]
      %v1753 = vld [vmem:[%s1742 + $0x50] sm:$0xff]
      %v1754 = vld [vmem:[%s1742 + $0x58] sm:$0xff]
      %v1755 = vld [vmem:[%s1742 + $0x60] sm:$0xff]
      %v1756 = vld [vmem:[%s1742 + $0x68] sm:$0xff]
      %v1757 = vld [vmem:[%s1742 + $0x70] sm:$0xff]
      %v1758 = vld [vmem:[%s1742 + $0x78] sm:$0xff]
      %1759 = vmatprep.subr.mxu0 0.0
      %1760 = vmatpush1.msra.mxu0 %v1743
      %1761 = vmatprep.subr.mxu0 0.0
      %1762 = vmatpush1.msra.mxu0 %v1744
      %1763 = vmatprep.subr.mxu0 0.0
      %1764 = vmatpush1.msra.mxu0 %v1745
      %1765 = vmatprep.subr.mxu0 0.0
      %1766 = vmatpush1.msra.mxu0 %v1746
      %1767 = vmatprep.subr.mxu0 0.0
      %1768 = vmatpush1.msra.mxu0 %v1747
      %1769 = vmatprep.subr.mxu0 0.0
      %1770 = vmatpush1.msra.mxu0 %v1748
      %1771 = vmatprep.subr.mxu0 0.0
      %1772 = vmatpush1.msra.mxu0 %v1749
      %1773 = vmatprep.subr.mxu0 0.0
      %1774 = vmatpush1.msra.mxu0 %v1750
      %1775 = vmatprep.subr.mxu0 0.0
      %1776 = vmatpush1.msra.mxu0 %v1751
      %1777 = vmatprep.subr.mxu0 0.0
      %1778 = vmatpush1.msra.mxu0 %v1752
      %1779 = vmatprep.subr.mxu0 0.0
      %1780 = vmatpush1.msra.mxu0 %v1753
      %1781 = vmatprep.subr.mxu0 0.0
      %1782 = vmatpush1.msra.mxu0 %v1754
      %1783 = vmatprep.subr.mxu0 0.0
      %1784 = vmatpush1.msra.mxu0 %v1755
      %1785 = vmatprep.subr.mxu0 0.0
      %1786 = vmatpush1.msra.mxu0 %v1756
      %1787 = vmatprep.subr.mxu0 0.0
      %1788 = vmatpush1.msra.mxu0 %v1757
      %1789 = vmatprep.subr.mxu0 0.0
      %1790 = vmatpush1.msra.mxu0 %v1758
      %1791 = vmatprep.subr.mxu0 0.0
      %1792 = vmatpush1.msra.mxu0 0.0
      %1793 = vmatprep.subr.mxu0 0.0
      %1794 = vmatpush1.msra.mxu0 0.0
      %1795 = vmatprep.subr.mxu0 0.0
      %1796 = vmatpush1.msra.mxu0 0.0
      %1797 = vmatprep.subr.mxu0 0.0
      %1798 = vmatpush1.msra.mxu0 0.0
      %1799 = vmatprep.subr.mxu0 0.0
      %1800 = vmatpush1.msra.mxu0 0.0
      %1801 = vmatprep.subr.mxu0 0.0
      %1802 = vmatpush1.msra.mxu0 0.0
      %1803 = vmatprep.subr.mxu0 0.0
      %1804 = vmatpush1.msra.mxu0 0.0
      %1805 = vmatprep.subr.mxu0 0.0
      %1806 = vmatpush1.msra.mxu0 0.0
      %1807 = vmatprep.subr.mxu0 0.0
      %1808 = vmatpush1.msra.mxu0 0.0
      %1809 = vmatprep.subr.mxu0 0.0
      %1810 = vmatpush1.msra.mxu0 0.0
      %1811 = vmatprep.subr.mxu0 0.0
      %1812 = vmatpush1.msra.mxu0 0.0
      %1813 = vmatprep.subr.mxu0 0.0
      %1814 = vmatpush1.msra.mxu0 0.0
      %1815 = vmatprep.subr.mxu0 0.0
      %1816 = vmatpush1.msra.mxu0 0.0
      %1817 = vmatprep.subr.mxu0 0.0
      %1818 = vmatpush1.msra.mxu0 0.0
      %1819 = vmatprep.subr.mxu0 0.0
      %1820 = vmatpush1.msra.mxu0 0.0
      %1821 = vmatprep.subr.mxu0 0.0
      %1822 = vmatpush1.msra.mxu0 0.0
      %1823 = vmatprep.mubr.f32.mxu0 0.0
      %1824 = vmatmul.mubr.f32.gmra.mrb[0].mxu0 %v1740
      %v1825 = vpop.f32.mrb[0].mxu0
      %v1826 = vadd.f32 0.0, %v1825
      %v1827 = vpop.f32.mrb[0].mxu0
      %1828 = vmatprep.mubr.f32.mxu0 0.0
      %1829 = vmatmul.mubr.f32.gmra.mrb[0].mxu0 %v1741
      %v1830 = vpop.f32.mrb[0].mxu0
      %v1831 = vadd.f32 0.0, %v1830
      %v1832 = vpop.f32.mrb[0].mxu0
      %1833 = vdwg.mxu0
      %v1834 = vadd.f32 %v1642, %v1826
      %v1835 = vadd.f32 %v1643, %v1831
      %v1836 = vld [vmem:[#allocation2 + $0xa] sm:$0xff]
      %v1837 = vld [vmem:[#allocation2 + $0x12] sm:$0xff]
      %s1838 = scalar_lea.vmem %s4, 1152
      %v1839 = vld [vmem:[%s1838] sm:$0xff]
      %v1840 = vld [vmem:[%s1838 + $0x8] sm:$0xff]
      %v1841 = vld [vmem:[%s1838 + $0x10] sm:$0xff]
      %v1842 = vld [vmem:[%s1838 + $0x18] sm:$0xff]
      %v1843 = vld [vmem:[%s1838 + $0x20] sm:$0xff]
      %v1844 = vld [vmem:[%s1838 + $0x28] sm:$0xff]
      %v1845 = vld [vmem:[%s1838 + $0x30] sm:$0xff]
      %v1846 = vld [vmem:[%s1838 + $0x38] sm:$0xff]
      %v1847 = vld [vmem:[%s1838 + $0x40] sm:$0xff]
      %v1848 = vld [vmem:[%s1838 + $0x48] sm:$0xff]
      %v1849 = vld [vmem:[%s1838 + $0x50] sm:$0xff]
      %v1850 = vld [vmem:[%s1838 + $0x58] sm:$0xff]
      %v1851 = vld [vmem:[%s1838 + $0x60] sm:$0xff]
      %v1852 = vld [vmem:[%s1838 + $0x68] sm:$0xff]
      %v1853 = vld [vmem:[%s1838 + $0x70] sm:$0xff]
      %v1854 = vld [vmem:[%s1838 + $0x78] sm:$0xff]
      %1855 = vmatprep.subr.mxu0 0.0
      %1856 = vmatpush1.msra.mxu0 %v1839
      %1857 = vmatprep.subr.mxu0 0.0
      %1858 = vmatpush1.msra.mxu0 %v1840
      %1859 = vmatprep.subr.mxu0 0.0
      %1860 = vmatpush1.msra.mxu0 %v1841
      %1861 = vmatprep.subr.mxu0 0.0
      %1862 = vmatpush1.msra.mxu0 %v1842
      %1863 = vmatprep.subr.mxu0 0.0
      %1864 = vmatpush1.msra.mxu0 %v1843
      %1865 = vmatprep.subr.mxu0 0.0
      %1866 = vmatpush1.msra.mxu0 %v1844
      %1867 = vmatprep.subr.mxu0 0.0
      %1868 = vmatpush1.msra.mxu0 %v1845
      %1869 = vmatprep.subr.mxu0 0.0
      %1870 = vmatpush1.msra.mxu0 %v1846
      %1871 = vmatprep.subr.mxu0 0.0
      %1872 = vmatpush1.msra.mxu0 %v1847
      %1873 = vmatprep.subr.mxu0 0.0
      %1874 = vmatpush1.msra.mxu0 %v1848
      %1875 = vmatprep.subr.mxu0 0.0
      %1876 = vmatpush1.msra.mxu0 %v1849
      %1877 = vmatprep.subr.mxu0 0.0
      %1878 = vmatpush1.msra.mxu0 %v1850
      %1879 = vmatprep.subr.mxu0 0.0
      %1880 = vmatpush1.msra.mxu0 %v1851
      %1881 = vmatprep.subr.mxu0 0.0
      %1882 = vmatpush1.msra.mxu0 %v1852
      %1883 = vmatprep.subr.mxu0 0.0
      %1884 = vmatpush1.msra.mxu0 %v1853
      %1885 = vmatprep.subr.mxu0 0.0
      %1886 = vmatpush1.msra.mxu0 %v1854
      %1887 = vmatprep.subr.mxu0 0.0
      %1888 = vmatpush1.msra.mxu0 0.0
      %1889 = vmatprep.subr.mxu0 0.0
      %1890 = vmatpush1.msra.mxu0 0.0
      %1891 = vmatprep.subr.mxu0 0.0
      %1892 = vmatpush1.msra.mxu0 0.0
      %1893 = vmatprep.subr.mxu0 0.0
      %1894 = vmatpush1.msra.mxu0 0.0
      %1895 = vmatprep.subr.mxu0 0.0
      %1896 = vmatpush1.msra.mxu0 0.0
      %1897 = vmatprep.subr.mxu0 0.0
      %1898 = vmatpush1.msra.mxu0 0.0
      %1899 = vmatprep.subr.mxu0 0.0
      %1900 = vmatpush1.msra.mxu0 0.0
      %1901 = vmatprep.subr.mxu0 0.0
      %1902 = vmatpush1.msra.mxu0 0.0
      %1903 = vmatprep.subr.mxu0 0.0
      %1904 = vmatpush1.msra.mxu0 0.0
      %1905 = vmatprep.subr.mxu0 0.0
      %1906 = vmatpush1.msra.mxu0 0.0
      %1907 = vmatprep.subr.mxu0 0.0
      %1908 = vmatpush1.msra.mxu0 0.0
      %1909 = vmatprep.subr.mxu0 0.0
      %1910 = vmatpush1.msra.mxu0 0.0
      %1911 = vmatprep.subr.mxu0 0.0
      %1912 = vmatpush1.msra.mxu0 0.0
      %1913 = vmatprep.subr.mxu0 0.0
      %1914 = vmatpush1.msra.mxu0 0.0
      %1915 = vmatprep.subr.mxu0 0.0
      %1916 = vmatpush1.msra.mxu0 0.0
      %1917 = vmatprep.subr.mxu0 0.0
      %1918 = vmatpush1.msra.mxu0 0.0
      %1919 = vmatprep.mubr.f32.mxu0 0.0
      %1920 = vmatmul.mubr.f32.gmra.mrb[0].mxu0 %v1836
      %v1921 = vpop.f32.mrb[0].mxu0
      %v1922 = vadd.f32 0.0, %v1921
      %v1923 = vpop.f32.mrb[0].mxu0
      %1924 = vmatprep.mubr.f32.mxu0 0.0
      %1925 = vmatmul.mubr.f32.gmra.mrb[0].mxu0 %v1837
      %v1926 = vpop.f32.mrb[0].mxu0
      %v1927 = vadd.f32 0.0, %v1926
      %v1928 = vpop.f32.mrb[0].mxu0
      %1929 = vdwg.mxu0
      %v1930 = vadd.f32 %v1738, %v1922
      %v1931 = vadd.f32 %v1739, %v1927
      %v1932 = vld [vmem:[#allocation2 + $0xb] sm:$0xff]
      %v1933 = vld [vmem:[#allocation2 + $0x13] sm:$0xff]
      %s1934 = scalar_lea.vmem %s4, 1280
      %v1935 = vld [vmem:[%s1934] sm:$0xff]
      %v1936 = vld [vmem:[%s1934 + $0x8] sm:$0xff]
      %v1937 = vld [vmem:[%s1934 + $0x10] sm:$0xff]
      %v1938 = vld [vmem:[%s1934 + $0x18] sm:$0xff]
      %v1939 = vld [vmem:[%s1934 + $0x20] sm:$0xff]
      %v1940 = vld [vmem:[%s1934 + $0x28] sm:$0xff]
      %v1941 = vld [vmem:[%s1934 + $0x30] sm:$0xff]
      %v1942 = vld [vmem:[%s1934 + $0x38] sm:$0xff]
      %v1943 = vld [vmem:[%s1934 + $0x40] sm:$0xff]
      %v1944 = vld [vmem:[%s1934 + $0x48] sm:$0xff]
      %v1945 = vld [vmem:[%s1934 + $0x50] sm:$0xff]
      %v1946 = vld [vmem:[%s1934 + $0x58] sm:$0xff]
      %v1947 = vld [vmem:[%s1934 + $0x60] sm:$0xff]
      %v1948 = vld [vmem:[%s1934 + $0x68] sm:$0xff]
      %v1949 = vld [vmem:[%s1934 + $0x70] sm:$0xff]
      %v1950 = vld [vmem:[%s1934 + $0x78] sm:$0xff]
      %1951 = vmatprep.subr.mxu0 0.0
      %1952 = vmatpush1.msra.mxu0 %v1935
      %1953 = vmatprep.subr.mxu0 0.0
      %1954 = vmatpush1.msra.mxu0 %v1936
      %1955 = vmatprep.subr.mxu0 0.0
      %1956 = vmatpush1.msra.mxu0 %v1937
      %1957 = vmatprep.subr.mxu0 0.0
      %1958 = vmatpush1.msra.mxu0 %v1938
      %1959 = vmatprep.subr.mxu0 0.0
      %1960 = vmatpush1.msra.mxu0 %v1939
      %1961 = vmatprep.subr.mxu0 0.0
      %1962 = vmatpush1.msra.mxu0 %v1940
      %1963 = vmatprep.subr.mxu0 0.0
      %1964 = vmatpush1.msra.mxu0 %v1941
      %1965 = vmatprep.subr.mxu0 0.0
      %1966 = vmatpush1.msra.mxu0 %v1942
      %1967 = vmatprep.subr.mxu0 0.0
      %1968 = vmatpush1.msra.mxu0 %v1943
      %1969 = vmatprep.subr.mxu0 0.0
      %1970 = vmatpush1.msra.mxu0 %v1944
      %1971 = vmatprep.subr.mxu0 0.0
      %1972 = vmatpush1.msra.mxu0 %v1945
      %1973 = vmatprep.subr.mxu0 0.0
      %1974 = vmatpush1.msra.mxu0 %v1946
      %1975 = vmatprep.subr.mxu0 0.0
      %1976 = vmatpush1.msra.mxu0 %v1947
      %1977 = vmatprep.subr.mxu0 0.0
      %1978 = vmatpush1.msra.mxu0 %v1948
      %1979 = vmatprep.subr.mxu0 0.0
      %1980 = vmatpush1.msra.mxu0 %v1949
      %1981 = vmatprep.subr.mxu0 0.0
      %1982 = vmatpush1.msra.mxu0 %v1950
      %1983 = vmatprep.subr.mxu0 0.0
      %1984 = vmatpush1.msra.mxu0 0.0
      %1985 = vmatprep.subr.mxu0 0.0
      %1986 = vmatpush1.msra.mxu0 0.0
      %1987 = vmatprep.subr.mxu0 0.0
      %1988 = vmatpush1.msra.mxu0 0.0
      %1989 = vmatprep.subr.mxu0 0.0
      %1990 = vmatpush1.msra.mxu0 0.0
      %1991 = vmatprep.subr.mxu0 0.0
      %1992 = vmatpush1.msra.mxu0 0.0
      %1993 = vmatprep.subr.mxu0 0.0
      %1994 = vmatpush1.msra.mxu0 0.0
      %1995 = vmatprep.subr.mxu0 0.0
      %1996 = vmatpush1.msra.mxu0 0.0
      %1997 = vmatprep.subr.mxu0 0.0
      %1998 = vmatpush1.msra.mxu0 0.0
      %1999 = vmatprep.subr.mxu0 0.0
      %2000 = vmatpush1.msra.mxu0 0.0
      %2001 = vmatprep.subr.mxu0 0.0
      %2002 = vmatpush1.msra.mxu0 0.0
      %2003 = vmatprep.subr.mxu0 0.0
      %2004 = vmatpush1.msra.mxu0 0.0
      %2005 = vmatprep.subr.mxu0 0.0
      %2006 = vmatpush1.msra.mxu0 0.0
      %2007 = vmatprep.subr.mxu0 0.0
      %2008 = vmatpush1.msra.mxu0 0.0
      %2009 = vmatprep.subr.mxu0 0.0
      %2010 = vmatpush1.msra.mxu0 0.0
      %2011 = vmatprep.subr.mxu0 0.0
      %2012 = vmatpush1.msra.mxu0 0.0
      %2013 = vmatprep.subr.mxu0 0.0
      %2014 = vmatpush1.msra.mxu0 0.0
      %2015 = vmatprep.mubr.f32.mxu0 0.0
      %2016 = vmatmul.mubr.f32.gmra.mrb[0].mxu0 %v1932
      %v2017 = vpop.f32.mrb[0].mxu0
      %v2018 = vadd.f32 0.0, %v2017
      %v2019 = vpop.f32.mrb[0].mxu0
      %2020 = vmatprep.mubr.f32.mxu0 0.0
      %2021 = vmatmul.mubr.f32.gmra.mrb[0].mxu0 %v1933
      %v2022 = vpop.f32.mrb[0].mxu0
      %v2023 = vadd.f32 0.0, %v2022
      %v2024 = vpop.f32.mrb[0].mxu0
      %2025 = vdwg.mxu0
      %v2026 = vadd.f32 %v1834, %v2018
      %v2027 = vadd.f32 %v1835, %v2023
      %v2028 = vld [vmem:[#allocation2 + $0xc] sm:$0xff]
      %v2029 = vld [vmem:[#allocation2 + $0x14] sm:$0xff]
      %s2030 = scalar_lea.vmem %s4, 1408
      %v2031 = vld [vmem:[%s2030] sm:$0xff]
      %v2032 = vld [vmem:[%s2030 + $0x8] sm:$0xff]
      %v2033 = vld [vmem:[%s2030 + $0x10] sm:$0xff]
      %v2034 = vld [vmem:[%s2030 + $0x18] sm:$0xff]
      %v2035 = vld [vmem:[%s2030 + $0x20] sm:$0xff]
      %v2036 = vld [vmem:[%s2030 + $0x28] sm:$0xff]
      %v2037 = vld [vmem:[%s2030 + $0x30] sm:$0xff]
      %v2038 = vld [vmem:[%s2030 + $0x38] sm:$0xff]
      %v2039 = vld [vmem:[%s2030 + $0x40] sm:$0xff]
      %v2040 = vld [vmem:[%s2030 + $0x48] sm:$0xff]
      %v2041 = vld [vmem:[%s2030 + $0x50] sm:$0xff]
      %v2042 = vld [vmem:[%s2030 + $0x58] sm:$0xff]
      %v2043 = vld [vmem:[%s2030 + $0x60] sm:$0xff]
      %v2044 = vld [vmem:[%s2030 + $0x68] sm:$0xff]
      %v2045 = vld [vmem:[%s2030 + $0x70] sm:$0xff]
      %v2046 = vld [vmem:[%s2030 + $0x78] sm:$0xff]
      %2047 = vmatprep.subr.mxu0 0.0
      %2048 = vmatpush1.msra.mxu0 %v2031
      %2049 = vmatprep.subr.mxu0 0.0
      %2050 = vmatpush1.msra.mxu0 %v2032
      %2051 = vmatprep.subr.mxu0 0.0
      %2052 = vmatpush1.msra.mxu0 %v2033
      %2053 = vmatprep.subr.mxu0 0.0
      %2054 = vmatpush1.msra.mxu0 %v2034
      %2055 = vmatprep.subr.mxu0 0.0
      %2056 = vmatpush1.msra.mxu0 %v2035
      %2057 = vmatprep.subr.mxu0 0.0
      %2058 = vmatpush1.msra.mxu0 %v2036
      %2059 = vmatprep.subr.mxu0 0.0
      %2060 = vmatpush1.msra.mxu0 %v2037
      %2061 = vmatprep.subr.mxu0 0.0
      %2062 = vmatpush1.msra.mxu0 %v2038
      %2063 = vmatprep.subr.mxu0 0.0
      %2064 = vmatpush1.msra.mxu0 %v2039
      %2065 = vmatprep.subr.mxu0 0.0
      %2066 = vmatpush1.msra.mxu0 %v2040
      %2067 = vmatprep.subr.mxu0 0.0
      %2068 = vmatpush1.msra.mxu0 %v2041
      %2069 = vmatprep.subr.mxu0 0.0
      %2070 = vmatpush1.msra.mxu0 %v2042
      %2071 = vmatprep.subr.mxu0 0.0
      %2072 = vmatpush1.msra.mxu0 %v2043
      %2073 = vmatprep.subr.mxu0 0.0
      %2074 = vmatpush1.msra.mxu0 %v2044
      %2075 = vmatprep.subr.mxu0 0.0
      %2076 = vmatpush1.msra.mxu0 %v2045
      %2077 = vmatprep.subr.mxu0 0.0
      %2078 = vmatpush1.msra.mxu0 %v2046
      %2079 = vmatprep.subr.mxu0 0.0
      %2080 = vmatpush1.msra.mxu0 0.0
      %2081 = vmatprep.subr.mxu0 0.0
      %2082 = vmatpush1.msra.mxu0 0.0
      %2083 = vmatprep.subr.mxu0 0.0
      %2084 = vmatpush1.msra.mxu0 0.0
      %2085 = vmatprep.subr.mxu0 0.0
      %2086 = vmatpush1.msra.mxu0 0.0
      %2087 = vmatprep.subr.mxu0 0.0
      %2088 = vmatpush1.msra.mxu0 0.0
      %2089 = vmatprep.subr.mxu0 0.0
      %2090 = vmatpush1.msra.mxu0 0.0
      %2091 = vmatprep.subr.mxu0 0.0
      %2092 = vmatpush1.msra.mxu0 0.0
      %2093 = vmatprep.subr.mxu0 0.0
      %2094 = vmatpush1.msra.mxu0 0.0
      %2095 = vmatprep.subr.mxu0 0.0
      %2096 = vmatpush1.msra.mxu0 0.0
      %2097 = vmatprep.subr.mxu0 0.0
      %2098 = vmatpush1.msra.mxu0 0.0
      %2099 = vmatprep.subr.mxu0 0.0
      %2100 = vmatpush1.msra.mxu0 0.0
      %2101 = vmatprep.subr.mxu0 0.0
      %2102 = vmatpush1.msra.mxu0 0.0
      %2103 = vmatprep.subr.mxu0 0.0
      %2104 = vmatpush1.msra.mxu0 0.0
      %2105 = vmatprep.subr.mxu0 0.0
      %2106 = vmatpush1.msra.mxu0 0.0
      %2107 = vmatprep.subr.mxu0 0.0
      %2108 = vmatpush1.msra.mxu0 0.0
      %2109 = vmatprep.subr.mxu0 0.0
      %2110 = vmatpush1.msra.mxu0 0.0
      %2111 = vmatprep.mubr.f32.mxu0 0.0
      %2112 = vmatmul.mubr.f32.gmra.mrb[0].mxu0 %v2028
      %v2113 = vpop.f32.mrb[0].mxu0
      %v2114 = vadd.f32 0.0, %v2113
      %v2115 = vpop.f32.mrb[0].mxu0
      %2116 = vmatprep.mubr.f32.mxu0 0.0
      %2117 = vmatmul.mubr.f32.gmra.mrb[0].mxu0 %v2029
      %v2118 = vpop.f32.mrb[0].mxu0
      %v2119 = vadd.f32 0.0, %v2118
      %v2120 = vpop.f32.mrb[0].mxu0
      %2121 = vdwg.mxu0
      %v2122 = vadd.f32 %v1930, %v2114
      %v2123 = vadd.f32 %v1931, %v2119
      %v2124 = vld [vmem:[#allocation2 + $0xd] sm:$0xff]
      %v2125 = vld [vmem:[#allocation2 + $0x15] sm:$0xff]
      %s2126 = scalar_lea.vmem %s4, 1536
      %v2127 = vld [vmem:[%s2126] sm:$0xff]
      %v2128 = vld [vmem:[%s2126 + $0x8] sm:$0xff]
      %v2129 = vld [vmem:[%s2126 + $0x10] sm:$0xff]
      %v2130 = vld [vmem:[%s2126 + $0x18] sm:$0xff]
      %v2131 = vld [vmem:[%s2126 + $0x20] sm:$0xff]
      %v2132 = vld [vmem:[%s2126 + $0x28] sm:$0xff]
      %v2133 = vld [vmem:[%s2126 + $0x30] sm:$0xff]
      %v2134 = vld [vmem:[%s2126 + $0x38] sm:$0xff]
      %v2135 = vld [vmem:[%s2126 + $0x40] sm:$0xff]
      %v2136 = vld [vmem:[%s2126 + $0x48] sm:$0xff]
      %v2137 = vld [vmem:[%s2126 + $0x50] sm:$0xff]
      %v2138 = vld [vmem:[%s2126 + $0x58] sm:$0xff]
      %v2139 = vld [vmem:[%s2126 + $0x60] sm:$0xff]
      %v2140 = vld [vmem:[%s2126 + $0x68] sm:$0xff]
      %v2141 = vld [vmem:[%s2126 + $0x70] sm:$0xff]
      %v2142 = vld [vmem:[%s2126 + $0x78] sm:$0xff]
      %2143 = vmatprep.subr.mxu0 0.0
      %2144 = vmatpush1.msra.mxu0 %v2127
      %2145 = vmatprep.subr.mxu0 0.0
      %2146 = vmatpush1.msra.mxu0 %v2128
      %2147 = vmatprep.subr.mxu0 0.0
      %2148 = vmatpush1.msra.mxu0 %v2129
      %2149 = vmatprep.subr.mxu0 0.0
      %2150 = vmatpush1.msra.mxu0 %v2130
      %2151 = vmatprep.subr.mxu0 0.0
      %2152 = vmatpush1.msra.mxu0 %v2131
      %2153 = vmatprep.subr.mxu0 0.0
      %2154 = vmatpush1.msra.mxu0 %v2132
      %2155 = vmatprep.subr.mxu0 0.0
      %2156 = vmatpush1.msra.mxu0 %v2133
      %2157 = vmatprep.subr.mxu0 0.0
      %2158 = vmatpush1.msra.mxu0 %v2134
      %2159 = vmatprep.subr.mxu0 0.0
      %2160 = vmatpush1.msra.mxu0 %v2135
      %2161 = vmatprep.subr.mxu0 0.0
      %2162 = vmatpush1.msra.mxu0 %v2136
      %2163 = vmatprep.subr.mxu0 0.0
      %2164 = vmatpush1.msra.mxu0 %v2137
      %2165 = vmatprep.subr.mxu0 0.0
      %2166 = vmatpush1.msra.mxu0 %v2138
      %2167 = vmatprep.subr.mxu0 0.0
      %2168 = vmatpush1.msra.mxu0 %v2139
      %2169 = vmatprep.subr.mxu0 0.0
      %2170 = vmatpush1.msra.mxu0 %v2140
      %2171 = vmatprep.subr.mxu0 0.0
      %2172 = vmatpush1.msra.mxu0 %v2141
      %2173 = vmatprep.subr.mxu0 0.0
      %2174 = vmatpush1.msra.mxu0 %v2142
      %2175 = vmatprep.subr.mxu0 0.0
      %2176 = vmatpush1.msra.mxu0 0.0
      %2177 = vmatprep.subr.mxu0 0.0
      %2178 = vmatpush1.msra.mxu0 0.0
      %2179 = vmatprep.subr.mxu0 0.0
      %2180 = vmatpush1.msra.mxu0 0.0
      %2181 = vmatprep.subr.mxu0 0.0
      %2182 = vmatpush1.msra.mxu0 0.0
      %2183 = vmatprep.subr.mxu0 0.0
      %2184 = vmatpush1.msra.mxu0 0.0
      %2185 = vmatprep.subr.mxu0 0.0
      %2186 = vmatpush1.msra.mxu0 0.0
      %2187 = vmatprep.subr.mxu0 0.0
      %2188 = vmatpush1.msra.mxu0 0.0
      %2189 = vmatprep.subr.mxu0 0.0
      %2190 = vmatpush1.msra.mxu0 0.0
      %2191 = vmatprep.subr.mxu0 0.0
      %2192 = vmatpush1.msra.mxu0 0.0
      %2193 = vmatprep.subr.mxu0 0.0
      %2194 = vmatpush1.msra.mxu0 0.0
      %2195 = vmatprep.subr.mxu0 0.0
      %2196 = vmatpush1.msra.mxu0 0.0
      %2197 = vmatprep.subr.mxu0 0.0
      %2198 = vmatpush1.msra.mxu0 0.0
      %2199 = vmatprep.subr.mxu0 0.0
      %2200 = vmatpush1.msra.mxu0 0.0
      %2201 = vmatprep.subr.mxu0 0.0
      %2202 = vmatpush1.msra.mxu0 0.0
      %2203 = vmatprep.subr.mxu0 0.0
      %2204 = vmatpush1.msra.mxu0 0.0
      %2205 = vmatprep.subr.mxu0 0.0
      %2206 = vmatpush1.msra.mxu0 0.0
      %2207 = vmatprep.mubr.f32.mxu0 0.0
      %2208 = vmatmul.mubr.f32.gmra.mrb[0].mxu0 %v2124
      %v2209 = vpop.f32.mrb[0].mxu0
      %v2210 = vadd.f32 0.0, %v2209
      %v2211 = vpop.f32.mrb[0].mxu0
      %2212 = vmatprep.mubr.f32.mxu0 0.0
      %2213 = vmatmul.mubr.f32.gmra.mrb[0].mxu0 %v2125
      %v2214 = vpop.f32.mrb[0].mxu0
      %v2215 = vadd.f32 0.0, %v2214
      %v2216 = vpop.f32.mrb[0].mxu0
      %2217 = vdwg.mxu0
      %v2218 = vadd.f32 %v2026, %v2210
      %v2219 = vadd.f32 %v2027, %v2215
      %v2220 = vld [vmem:[#allocation2 + $0xe] sm:$0xff]
      %v2221 = vld [vmem:[#allocation2 + $0x16] sm:$0xff]
      %s2222 = scalar_lea.vmem %s4, 1664
      %v2223 = vld [vmem:[%s2222] sm:$0xff]
      %v2224 = vld [vmem:[%s2222 + $0x8] sm:$0xff]
      %v2225 = vld [vmem:[%s2222 + $0x10] sm:$0xff]
      %v2226 = vld [vmem:[%s2222 + $0x18] sm:$0xff]
      %v2227 = vld [vmem:[%s2222 + $0x20] sm:$0xff]
      %v2228 = vld [vmem:[%s2222 + $0x28] sm:$0xff]
      %v2229 = vld [vmem:[%s2222 + $0x30] sm:$0xff]
      %v2230 = vld [vmem:[%s2222 + $0x38] sm:$0xff]
      %v2231 = vld [vmem:[%s2222 + $0x40] sm:$0xff]
      %v2232 = vld [vmem:[%s2222 + $0x48] sm:$0xff]
      %v2233 = vld [vmem:[%s2222 + $0x50] sm:$0xff]
      %v2234 = vld [vmem:[%s2222 + $0x58] sm:$0xff]
      %v2235 = vld [vmem:[%s2222 + $0x60] sm:$0xff]
      %v2236 = vld [vmem:[%s2222 + $0x68] sm:$0xff]
      %v2237 = vld [vmem:[%s2222 + $0x70] sm:$0xff]
      %v2238 = vld [vmem:[%s2222 + $0x78] sm:$0xff]
      %2239 = vmatprep.subr.mxu0 0.0
      %2240 = vmatpush1.msra.mxu0 %v2223
      %2241 = vmatprep.subr.mxu0 0.0
      %2242 = vmatpush1.msra.mxu0 %v2224
      %2243 = vmatprep.subr.mxu0 0.0
      %2244 = vmatpush1.msra.mxu0 %v2225
      %2245 = vmatprep.subr.mxu0 0.0
      %2246 = vmatpush1.msra.mxu0 %v2226
      %2247 = vmatprep.subr.mxu0 0.0
      %2248 = vmatpush1.msra.mxu0 %v2227
      %2249 = vmatprep.subr.mxu0 0.0
      %2250 = vmatpush1.msra.mxu0 %v2228
      %2251 = vmatprep.subr.mxu0 0.0
      %2252 = vmatpush1.msra.mxu0 %v2229
      %2253 = vmatprep.subr.mxu0 0.0
      %2254 = vmatpush1.msra.mxu0 %v2230
      %2255 = vmatprep.subr.mxu0 0.0
      %2256 = vmatpush1.msra.mxu0 %v2231
      %2257 = vmatprep.subr.mxu0 0.0
      %2258 = vmatpush1.msra.mxu0 %v2232
      %2259 = vmatprep.subr.mxu0 0.0
      %2260 = vmatpush1.msra.mxu0 %v2233
      %2261 = vmatprep.subr.mxu0 0.0
      %2262 = vmatpush1.msra.mxu0 %v2234
      %2263 = vmatprep.subr.mxu0 0.0
      %2264 = vmatpush1.msra.mxu0 %v2235
      %2265 = vmatprep.subr.mxu0 0.0
      %2266 = vmatpush1.msra.mxu0 %v2236
      %2267 = vmatprep.subr.mxu0 0.0
      %2268 = vmatpush1.msra.mxu0 %v2237
      %2269 = vmatprep.subr.mxu0 0.0
      %2270 = vmatpush1.msra.mxu0 %v2238
      %2271 = vmatprep.subr.mxu0 0.0
      %2272 = vmatpush1.msra.mxu0 0.0
      %2273 = vmatprep.subr.mxu0 0.0
      %2274 = vmatpush1.msra.mxu0 0.0
      %2275 = vmatprep.subr.mxu0 0.0
      %2276 = vmatpush1.msra.mxu0 0.0
      %2277 = vmatprep.subr.mxu0 0.0
      %2278 = vmatpush1.msra.mxu0 0.0
      %2279 = vmatprep.subr.mxu0 0.0
      %2280 = vmatpush1.msra.mxu0 0.0
      %2281 = vmatprep.subr.mxu0 0.0
      %2282 = vmatpush1.msra.mxu0 0.0
      %2283 = vmatprep.subr.mxu0 0.0
      %2284 = vmatpush1.msra.mxu0 0.0
      %2285 = vmatprep.subr.mxu0 0.0
      %2286 = vmatpush1.msra.mxu0 0.0
      %2287 = vmatprep.subr.mxu0 0.0
      %2288 = vmatpush1.msra.mxu0 0.0
      %2289 = vmatprep.subr.mxu0 0.0
      %2290 = vmatpush1.msra.mxu0 0.0
      %2291 = vmatprep.subr.mxu0 0.0
      %2292 = vmatpush1.msra.mxu0 0.0
      %2293 = vmatprep.subr.mxu0 0.0
      %2294 = vmatpush1.msra.mxu0 0.0
      %2295 = vmatprep.subr.mxu0 0.0
      %2296 = vmatpush1.msra.mxu0 0.0
      %2297 = vmatprep.subr.mxu0 0.0
      %2298 = vmatpush1.msra.mxu0 0.0
      %2299 = vmatprep.subr.mxu0 0.0
      %2300 = vmatpush1.msra.mxu0 0.0
      %2301 = vmatprep.subr.mxu0 0.0
      %2302 = vmatpush1.msra.mxu0 0.0
      %2303 = vmatprep.mubr.f32.mxu0 0.0
      %2304 = vmatmul.mubr.f32.gmra.mrb[0].mxu0 %v2220
      %v2305 = vpop.f32.mrb[0].mxu0
      %v2306 = vadd.f32 0.0, %v2305
      %v2307 = vpop.f32.mrb[0].mxu0
      %2308 = vmatprep.mubr.f32.mxu0 0.0
      %2309 = vmatmul.mubr.f32.gmra.mrb[0].mxu0 %v2221
      %v2310 = vpop.f32.mrb[0].mxu0
      %v2311 = vadd.f32 0.0, %v2310
      %v2312 = vpop.f32.mrb[0].mxu0
      %2313 = vdwg.mxu0
      %v2314 = vadd.f32 %v2122, %v2306
      %v2315 = vadd.f32 %v2123, %v2311
      %v2316 = vld [vmem:[#allocation2 + $0xf] sm:$0xff]
      %v2317 = vld [vmem:[#allocation2 + $0x17] sm:$0xff]
      %s2318 = scalar_lea.vmem %s4, 1792
      %v2319 = vld [vmem:[%s2318] sm:$0xff]
      %v2320 = vld [vmem:[%s2318 + $0x8] sm:$0xff]
      %v2321 = vld [vmem:[%s2318 + $0x10] sm:$0xff]
      %v2322 = vld [vmem:[%s2318 + $0x18] sm:$0xff]
      %v2323 = vld [vmem:[%s2318 + $0x20] sm:$0xff]
      %v2324 = vld [vmem:[%s2318 + $0x28] sm:$0xff]
      %v2325 = vld [vmem:[%s2318 + $0x30] sm:$0xff]
      %v2326 = vld [vmem:[%s2318 + $0x38] sm:$0xff]
      %v2327 = vld [vmem:[%s2318 + $0x40] sm:$0xff]
      %v2328 = vld [vmem:[%s2318 + $0x48] sm:$0xff]
      %v2329 = vld [vmem:[%s2318 + $0x50] sm:$0xff]
      %v2330 = vld [vmem:[%s2318 + $0x58] sm:$0xff]
      %v2331 = vld [vmem:[%s2318 + $0x60] sm:$0xff]
      %v2332 = vld [vmem:[%s2318 + $0x68] sm:$0xff]
      %v2333 = vld [vmem:[%s2318 + $0x70] sm:$0xff]
      %v2334 = vld [vmem:[%s2318 + $0x78] sm:$0xff]
      %2335 = vmatprep.subr.mxu0 0.0
      %2336 = vmatpush1.msra.mxu0 %v2319
      %2337 = vmatprep.subr.mxu0 0.0
      %2338 = vmatpush1.msra.mxu0 %v2320
      %2339 = vmatprep.subr.mxu0 0.0
      %2340 = vmatpush1.msra.mxu0 %v2321
      %2341 = vmatprep.subr.mxu0 0.0
      %2342 = vmatpush1.msra.mxu0 %v2322
      %2343 = vmatprep.subr.mxu0 0.0
      %2344 = vmatpush1.msra.mxu0 %v2323
      %2345 = vmatprep.subr.mxu0 0.0
      %2346 = vmatpush1.msra.mxu0 %v2324
      %2347 = vmatprep.subr.mxu0 0.0
      %2348 = vmatpush1.msra.mxu0 %v2325
      %2349 = vmatprep.subr.mxu0 0.0
      %2350 = vmatpush1.msra.mxu0 %v2326
      %2351 = vmatprep.subr.mxu0 0.0
      %2352 = vmatpush1.msra.mxu0 %v2327
      %2353 = vmatprep.subr.mxu0 0.0
      %2354 = vmatpush1.msra.mxu0 %v2328
      %2355 = vmatprep.subr.mxu0 0.0
      %2356 = vmatpush1.msra.mxu0 %v2329
      %2357 = vmatprep.subr.mxu0 0.0
      %2358 = vmatpush1.msra.mxu0 %v2330
      %2359 = vmatprep.subr.mxu0 0.0
      %2360 = vmatpush1.msra.mxu0 %v2331
      %2361 = vmatprep.subr.mxu0 0.0
      %2362 = vmatpush1.msra.mxu0 %v2332
      %2363 = vmatprep.subr.mxu0 0.0
      %2364 = vmatpush1.msra.mxu0 %v2333
      %2365 = vmatprep.subr.mxu0 0.0
      %2366 = vmatpush1.msra.mxu0 %v2334
      %2367 = vmatprep.subr.mxu0 0.0
      %2368 = vmatpush1.msra.mxu0 0.0
      %2369 = vmatprep.subr.mxu0 0.0
      %2370 = vmatpush1.msra.mxu0 0.0
      %2371 = vmatprep.subr.mxu0 0.0
      %2372 = vmatpush1.msra.mxu0 0.0
      %2373 = vmatprep.subr.mxu0 0.0
      %2374 = vmatpush1.msra.mxu0 0.0
      %2375 = vmatprep.subr.mxu0 0.0
      %2376 = vmatpush1.msra.mxu0 0.0
      %2377 = vmatprep.subr.mxu0 0.0
      %2378 = vmatpush1.msra.mxu0 0.0
      %2379 = vmatprep.subr.mxu0 0.0
      %2380 = vmatpush1.msra.mxu0 0.0
      %2381 = vmatprep.subr.mxu0 0.0
      %2382 = vmatpush1.msra.mxu0 0.0
      %2383 = vmatprep.subr.mxu0 0.0
      %2384 = vmatpush1.msra.mxu0 0.0
      %2385 = vmatprep.subr.mxu0 0.0
      %2386 = vmatpush1.msra.mxu0 0.0
      %2387 = vmatprep.subr.mxu0 0.0
      %2388 = vmatpush1.msra.mxu0 0.0
      %2389 = vmatprep.subr.mxu0 0.0
      %2390 = vmatpush1.msra.mxu0 0.0
      %2391 = vmatprep.subr.mxu0 0.0
      %2392 = vmatpush1.msra.mxu0 0.0
      %2393 = vmatprep.subr.mxu0 0.0
      %2394 = vmatpush1.msra.mxu0 0.0
      %2395 = vmatprep.subr.mxu0 0.0
      %2396 = vmatpush1.msra.mxu0 0.0
      %2397 = vmatprep.subr.mxu0 0.0
      %2398 = vmatpush1.msra.mxu0 0.0
      %2399 = vmatprep.mubr.f32.mxu0 0.0
      %2400 = vmatmul.mubr.f32.gmra.mrb[0].mxu0 %v2316
      %v2401 = vpop.f32.mrb[0].mxu0
      %v2402 = vadd.f32 0.0, %v2401
      %v2403 = vpop.f32.mrb[0].mxu0
      %2404 = vmatprep.mubr.f32.mxu0 0.0
      %2405 = vmatmul.mubr.f32.gmra.mrb[0].mxu0 %v2317
      %v2406 = vpop.f32.mrb[0].mxu0
      %v2407 = vadd.f32 0.0, %v2406
      %v2408 = vpop.f32.mrb[0].mxu0
      %2409 = vdwg.mxu0
      %v2410 = vadd.f32 %v2218, %v2402
      %v2411 = vadd.f32 %v2219, %v2407
      %v2412 = vadd.f32 %v2410, %v2314
      %v2413 = vadd.f32 %v2411, %v2315
      %v2414 = vld [vmem:[%s5] sm:$0xff]
      %v2415 = vld [vmem:[%s5 + $0x8] sm:$0xff]
      %v2416 = vadd.f32 %v2412, %v2414
      %v2417 = vadd.f32 %v2413, %v2415
      %2418 = vst [vmem:[#allocation2 + $0x8] sm:$0xff] %v2416
      %2419 = vst [vmem:[#allocation2 + $0x10] sm:$0xff] %v2417
      %v2420 = vld [vmem:[#allocation2 + $0x7] sm:$0xff]
      %v2421 = vld [vmem:[#allocation2 + $0xf] sm:$0xff]
      %v2422 = vld [vmem:[%s6] sm:$0xff]
      %v2423 = vld [vmem:[%s6 + $0x8] sm:$0xff]
      %v2424 = vld [vmem:[%s6 + $0x10] sm:$0xff]
      %v2425 = vld [vmem:[%s6 + $0x18] sm:$0xff]
      %v2426 = vld [vmem:[%s6 + $0x20] sm:$0xff]
      %v2427 = vld [vmem:[%s6 + $0x28] sm:$0xff]
      %v2428 = vld [vmem:[%s6 + $0x30] sm:$0xff]
      %v2429 = vld [vmem:[%s6 + $0x38] sm:$0xff]
      %v2430 = vld [vmem:[%s6 + $0x40] sm:$0xff]
      %v2431 = vld [vmem:[%s6 + $0x48] sm:$0xff]
      %v2432 = vld [vmem:[%s6 + $0x50] sm:$0xff]
      %v2433 = vld [vmem:[%s6 + $0x58] sm:$0xff]
      %v2434 = vld [vmem:[%s6 + $0x60] sm:$0xff]
      %v2435 = vld [vmem:[%s6 + $0x68] sm:$0xff]
      %v2436 = vld [vmem:[%s6 + $0x70] sm:$0xff]
      %v2437 = vld [vmem:[%s6 + $0x78] sm:$0xff]
      %v2438 = vld [vmem:[#allocation2 + $0x8] sm:$0xff]
      %v2439 = vld [vmem:[#allocation2 + $0x10] sm:$0xff]
      %s2440 = scalar_lea.vmem %s6, 128
      %v2441 = vld [vmem:[%s2440] sm:$0xff]
      %v2442 = vld [vmem:[%s2440 + $0x8] sm:$0xff]
      %v2443 = vld [vmem:[%s2440 + $0x10] sm:$0xff]
      %v2444 = vld [vmem:[%s2440 + $0x18] sm:$0xff]
      %v2445 = vld [vmem:[%s2440 + $0x20] sm:$0xff]
      %v2446 = vld [vmem:[%s2440 + $0x28] sm:$0xff]
      %v2447 = vld [vmem:[%s2440 + $0x30] sm:$0xff]
      %v2448 = vld [vmem:[%s2440 + $0x38] sm:$0xff]
      %v2449 = vld [vmem:[%s2440 + $0x40] sm:$0xff]
      %v2450 = vld [vmem:[%s2440 + $0x48] sm:$0xff]
      %v2451 = vld [vmem:[%s2440 + $0x50] sm:$0xff]
      %v2452 = vld [vmem:[%s2440 + $0x58] sm:$0xff]
      %v2453 = vld [vmem:[%s2440 + $0x60] sm:$0xff]
      %v2454 = vld [vmem:[%s2440 + $0x68] sm:$0xff]
      %v2455 = vld [vmem:[%s2440 + $0x70] sm:$0xff]
      %v2456 = vld [vmem:[%s2440 + $0x78] sm:$0xff]
      %2457 = vmatprep.subr.mxu0 0.0
      %2458 = vmatpush1.msra.mxu0 %v2441
      %2459 = vmatprep.subr.mxu0 0.0
      %2460 = vmatpush1.msra.mxu0 %v2442
      %2461 = vmatprep.subr.mxu0 0.0
      %2462 = vmatpush1.msra.mxu0 %v2443
      %2463 = vmatprep.subr.mxu0 0.0
      %2464 = vmatpush1.msra.mxu0 %v2444
      %2465 = vmatprep.subr.mxu0 0.0
      %2466 = vmatpush1.msra.mxu0 %v2445
      %2467 = vmatprep.subr.mxu0 0.0
      %2468 = vmatpush1.msra.mxu0 %v2446
      %2469 = vmatprep.subr.mxu0 0.0
      %2470 = vmatpush1.msra.mxu0 %v2447
      %2471 = vmatprep.subr.mxu0 0.0
      %2472 = vmatpush1.msra.mxu0 %v2448
      %2473 = vmatprep.subr.mxu0 0.0
      %2474 = vmatpush1.msra.mxu0 %v2449
      %2475 = vmatprep.subr.mxu0 0.0
      %2476 = vmatpush1.msra.mxu0 %v2450
      %2477 = vmatprep.subr.mxu0 0.0
      %2478 = vmatpush1.msra.mxu0 %v2451
      %2479 = vmatprep.subr.mxu0 0.0
      %2480 = vmatpush1.msra.mxu0 %v2452
      %2481 = vmatprep.subr.mxu0 0.0
      %2482 = vmatpush1.msra.mxu0 %v2453
      %2483 = vmatprep.subr.mxu0 0.0
      %2484 = vmatpush1.msra.mxu0 %v2454
      %2485 = vmatprep.subr.mxu0 0.0
      %2486 = vmatpush1.msra.mxu0 %v2455
      %2487 = vmatprep.subr.mxu0 0.0
      %2488 = vmatpush1.msra.mxu0 %v2456
      %2489 = vmatprep.subr.mxu0 0.0
      %2490 = vmatpush1.msra.mxu0 0.0
      %2491 = vmatprep.subr.mxu0 0.0
      %2492 = vmatpush1.msra.mxu0 0.0
      %2493 = vmatprep.subr.mxu0 0.0
      %2494 = vmatpush1.msra.mxu0 0.0
      %2495 = vmatprep.subr.mxu0 0.0
      %2496 = vmatpush1.msra.mxu0 0.0
      %2497 = vmatprep.subr.mxu0 0.0
      %2498 = vmatpush1.msra.mxu0 0.0
      %2499 = vmatprep.subr.mxu0 0.0
      %2500 = vmatpush1.msra.mxu0 0.0
      %2501 = vmatprep.subr.mxu0 0.0
      %2502 = vmatpush1.msra.mxu0 0.0
      %2503 = vmatprep.subr.mxu0 0.0
      %2504 = vmatpush1.msra.mxu0 0.0
      %2505 = vmatprep.subr.mxu0 0.0
      %2506 = vmatpush1.msra.mxu0 0.0
      %2507 = vmatprep.subr.mxu0 0.0
      %2508 = vmatpush1.msra.mxu0 0.0
      %2509 = vmatprep.subr.mxu0 0.0
      %2510 = vmatpush1.msra.mxu0 0.0
      %2511 = vmatprep.subr.mxu0 0.0
      %2512 = vmatpush1.msra.mxu0 0.0
      %2513 = vmatprep.subr.mxu0 0.0
      %2514 = vmatpush1.msra.mxu0 0.0
      %2515 = vmatprep.subr.mxu0 0.0
      %2516 = vmatpush1.msra.mxu0 0.0
      %2517 = vmatprep.subr.mxu0 0.0
      %2518 = vmatpush1.msra.mxu0 0.0
      %2519 = vmatprep.subr.mxu0 0.0
      %2520 = vmatpush1.msra.mxu0 0.0
      %2521 = vmatprep.mubr.f32.mxu0 0.0
      %2522 = vmatmul.mubr.f32.gmra.mrb[0].mxu0 %v2438
      %v2523 = vpop.f32.mrb[0].mxu0
      %v2524 = vadd.f32 0.0, %v2523
      %v2525 = vpop.f32.mrb[0].mxu0
      %2526 = vmatprep.mubr.f32.mxu0 0.0
      %2527 = vmatmul.mubr.f32.gmra.mrb[0].mxu0 %v2439
      %v2528 = vpop.f32.mrb[0].mxu0
      %v2529 = vadd.f32 0.0, %v2528
      %v2530 = vpop.f32.mrb[0].mxu0
      %2531 = vdwg.mxu0
      %2532 = vmatprep.subr.mxu0 0.0
      %2533 = vmatpush1.msra.mxu0 %v2422
      %2534 = vmatprep.subr.mxu0 0.0
      %2535 = vmatpush1.msra.mxu0 %v2423
      %2536 = vmatprep.subr.mxu0 0.0
      %2537 = vmatpush1.msra.mxu0 %v2424
      %2538 = vmatprep.subr.mxu0 0.0
      %2539 = vmatpush1.msra.mxu0 %v2425
      %2540 = vmatprep.subr.mxu0 0.0
      %2541 = vmatpush1.msra.mxu0 %v2426
      %2542 = vmatprep.subr.mxu0 0.0
      %2543 = vmatpush1.msra.mxu0 %v2427
      %2544 = vmatprep.subr.mxu0 0.0
      %2545 = vmatpush1.msra.mxu0 %v2428
      %2546 = vmatprep.subr.mxu0 0.0
      %2547 = vmatpush1.msra.mxu0 %v2429
      %2548 = vmatprep.subr.mxu0 0.0
      %2549 = vmatpush1.msra.mxu0 %v2430
      %2550 = vmatprep.subr.mxu0 0.0
      %2551 = vmatpush1.msra.mxu0 %v2431
      %2552 = vmatprep.subr.mxu0 0.0
      %2553 = vmatpush1.msra.mxu0 %v2432
      %2554 = vmatprep.subr.mxu0 0.0
      %2555 = vmatpush1.msra.mxu0 %v2433
      %2556 = vmatprep.subr.mxu0 0.0
      %2557 = vmatpush1.msra.mxu0 %v2434
      %2558 = vmatprep.subr.mxu0 0.0
      %2559 = vmatpush1.msra.mxu0 %v2435
      %2560 = vmatprep.subr.mxu0 0.0
      %2561 = vmatpush1.msra.mxu0 %v2436
      %2562 = vmatprep.subr.mxu0 0.0
      %2563 = vmatpush1.msra.mxu0 %v2437
      %2564 = vmatprep.subr.mxu0 0.0
      %2565 = vmatpush1.msra.mxu0 0.0
      %2566 = vmatprep.subr.mxu0 0.0
      %2567 = vmatpush1.msra.mxu0 0.0
      %2568 = vmatprep.subr.mxu0 0.0
      %2569 = vmatpush1.msra.mxu0 0.0
      %2570 = vmatprep.subr.mxu0 0.0
      %2571 = vmatpush1.msra.mxu0 0.0
      %2572 = vmatprep.subr.mxu0 0.0
      %2573 = vmatpush1.msra.mxu0 0.0
      %2574 = vmatprep.subr.mxu0 0.0
      %2575 = vmatpush1.msra.mxu0 0.0
      %2576 = vmatprep.subr.mxu0 0.0
      %2577 = vmatpush1.msra.mxu0 0.0
      %2578 = vmatprep.subr.mxu0 0.0
      %2579 = vmatpush1.msra.mxu0 0.0
      %2580 = vmatprep.subr.mxu0 0.0
      %2581 = vmatpush1.msra.mxu0 0.0
      %2582 = vmatprep.subr.mxu0 0.0
      %2583 = vmatpush1.msra.mxu0 0.0
      %2584 = vmatprep.subr.mxu0 0.0
      %2585 = vmatpush1.msra.mxu0 0.0
      %2586 = vmatprep.subr.mxu0 0.0
      %2587 = vmatpush1.msra.mxu0 0.0
      %2588 = vmatprep.subr.mxu0 0.0
      %2589 = vmatpush1.msra.mxu0 0.0
      %2590 = vmatprep.subr.mxu0 0.0
      %2591 = vmatpush1.msra.mxu0 0.0
      %2592 = vmatprep.subr.mxu0 0.0
      %2593 = vmatpush1.msra.mxu0 0.0
      %2594 = vmatprep.subr.mxu0 0.0
      %2595 = vmatpush1.msra.mxu0 0.0
      %2596 = vmatprep.mubr.f32.mxu0 0.0
      %2597 = vmatmul.mubr.f32.gmra.mrb[0].mxu0 %v2420
      %v2598 = vpop.f32.mrb[0].mxu0
      %v2599 = vadd.f32 %v2524, %v2598
      %v2600 = vpop.f32.mrb[0].mxu0
      %2601 = vmatprep.mubr.f32.mxu0 0.0
      %2602 = vmatmul.mubr.f32.gmra.mrb[0].mxu0 %v2421
      %v2603 = vpop.f32.mrb[0].mxu0
      %v2604 = vadd.f32 %v2529, %v2603
      %v2605 = vpop.f32.mrb[0].mxu0
      %2606 = vdwg.mxu0
      %v2607 = vld [vmem:[#allocation2 + $0x9] sm:$0xff]
      %v2608 = vld [vmem:[#allocation2 + $0x11] sm:$0xff]
      %s2609 = scalar_lea.vmem %s6, 256
      %v2610 = vld [vmem:[%s2609] sm:$0xff]
      %v2611 = vld [vmem:[%s2609 + $0x8] sm:$0xff]
      %v2612 = vld [vmem:[%s2609 + $0x10] sm:$0xff]
      %v2613 = vld [vmem:[%s2609 + $0x18] sm:$0xff]
      %v2614 = vld [vmem:[%s2609 + $0x20] sm:$0xff]
      %v2615 = vld [vmem:[%s2609 + $0x28] sm:$0xff]
      %v2616 = vld [vmem:[%s2609 + $0x30] sm:$0xff]
      %v2617 = vld [vmem:[%s2609 + $0x38] sm:$0xff]
      %v2618 = vld [vmem:[%s2609 + $0x40] sm:$0xff]
      %v2619 = vld [vmem:[%s2609 + $0x48] sm:$0xff]
      %v2620 = vld [vmem:[%s2609 + $0x50] sm:$0xff]
      %v2621 = vld [vmem:[%s2609 + $0x58] sm:$0xff]
      %v2622 = vld [vmem:[%s2609 + $0x60] sm:$0xff]
      %v2623 = vld [vmem:[%s2609 + $0x68] sm:$0xff]
      %v2624 = vld [vmem:[%s2609 + $0x70] sm:$0xff]
      %v2625 = vld [vmem:[%s2609 + $0x78] sm:$0xff]
      %2626 = vmatprep.subr.mxu0 0.0
      %2627 = vmatpush1.msra.mxu0 %v2610
      %2628 = vmatprep.subr.mxu0 0.0
      %2629 = vmatpush1.msra.mxu0 %v2611
      %2630 = vmatprep.subr.mxu0 0.0
      %2631 = vmatpush1.msra.mxu0 %v2612
      %2632 = vmatprep.subr.mxu0 0.0
      %2633 = vmatpush1.msra.mxu0 %v2613
      %2634 = vmatprep.subr.mxu0 0.0
      %2635 = vmatpush1.msra.mxu0 %v2614
      %2636 = vmatprep.subr.mxu0 0.0
      %2637 = vmatpush1.msra.mxu0 %v2615
      %2638 = vmatprep.subr.mxu0 0.0
      %2639 = vmatpush1.msra.mxu0 %v2616
      %2640 = vmatprep.subr.mxu0 0.0
      %2641 = vmatpush1.msra.mxu0 %v2617
      %2642 = vmatprep.subr.mxu0 0.0
      %2643 = vmatpush1.msra.mxu0 %v2618
      %2644 = vmatprep.subr.mxu0 0.0
      %2645 = vmatpush1.msra.mxu0 %v2619
      %2646 = vmatprep.subr.mxu0 0.0
      %2647 = vmatpush1.msra.mxu0 %v2620
      %2648 = vmatprep.subr.mxu0 0.0
      %2649 = vmatpush1.msra.mxu0 %v2621
      %2650 = vmatprep.subr.mxu0 0.0
      %2651 = vmatpush1.msra.mxu0 %v2622
      %2652 = vmatprep.subr.mxu0 0.0
      %2653 = vmatpush1.msra.mxu0 %v2623
      %2654 = vmatprep.subr.mxu0 0.0
      %2655 = vmatpush1.msra.mxu0 %v2624
      %2656 = vmatprep.subr.mxu0 0.0
      %2657 = vmatpush1.msra.mxu0 %v2625
      %2658 = vmatprep.subr.mxu0 0.0
      %2659 = vmatpush1.msra.mxu0 0.0
      %2660 = vmatprep.subr.mxu0 0.0
      %2661 = vmatpush1.msra.mxu0 0.0
      %2662 = vmatprep.subr.mxu0 0.0
      %2663 = vmatpush1.msra.mxu0 0.0
      %2664 = vmatprep.subr.mxu0 0.0
      %2665 = vmatpush1.msra.mxu0 0.0
      %2666 = vmatprep.subr.mxu0 0.0
      %2667 = vmatpush1.msra.mxu0 0.0
      %2668 = vmatprep.subr.mxu0 0.0
      %2669 = vmatpush1.msra.mxu0 0.0
      %2670 = vmatprep.subr.mxu0 0.0
      %2671 = vmatpush1.msra.mxu0 0.0
      %2672 = vmatprep.subr.mxu0 0.0
      %2673 = vmatpush1.msra.mxu0 0.0
      %2674 = vmatprep.subr.mxu0 0.0
      %2675 = vmatpush1.msra.mxu0 0.0
      %2676 = vmatprep.subr.mxu0 0.0
      %2677 = vmatpush1.msra.mxu0 0.0
      %2678 = vmatprep.subr.mxu0 0.0
      %2679 = vmatpush1.msra.mxu0 0.0
      %2680 = vmatprep.subr.mxu0 0.0
      %2681 = vmatpush1.msra.mxu0 0.0
      %2682 = vmatprep.subr.mxu0 0.0
      %2683 = vmatpush1.msra.mxu0 0.0
      %2684 = vmatprep.subr.mxu0 0.0
      %2685 = vmatpush1.msra.mxu0 0.0
      %2686 = vmatprep.subr.mxu0 0.0
      %2687 = vmatpush1.msra.mxu0 0.0
      %2688 = vmatprep.subr.mxu0 0.0
      %2689 = vmatpush1.msra.mxu0 0.0
      %2690 = vmatprep.mubr.f32.mxu0 0.0
      %2691 = vmatmul.mubr.f32.gmra.mrb[0].mxu0 %v2607
      %v2692 = vpop.f32.mrb[0].mxu0
      %v2693 = vadd.f32 0.0, %v2692
      %v2694 = vpop.f32.mrb[0].mxu0
      %2695 = vmatprep.mubr.f32.mxu0 0.0
      %2696 = vmatmul.mubr.f32.gmra.mrb[0].mxu0 %v2608
      %v2697 = vpop.f32.mrb[0].mxu0
      %v2698 = vadd.f32 0.0, %v2697
      %v2699 = vpop.f32.mrb[0].mxu0
      %2700 = vdwg.mxu0
      %v2701 = vadd.f32 %v2599, %v2693
      %v2702 = vadd.f32 %v2604, %v2698
      %v2703 = vsub.f32 %v2416, %v2701
      %v2704 = vsub.f32 %v2417, %v2702
      %v2705 = vld [vmem:[%s7] sm:$0xff]
      %v2706 = vld [vmem:[%s7 + $0x8] sm:$0xff]
      %v2707 = vld [vmem:[%s7 + $0x10] sm:$0xff]
      %v2708 = vld [vmem:[%s7 + $0x18] sm:$0xff]
      %v2709 = vld [vmem:[%s7 + $0x20] sm:$0xff]
      %v2710 = vld [vmem:[%s7 + $0x28] sm:$0xff]
      %v2711 = vld [vmem:[%s7 + $0x30] sm:$0xff]
      %v2712 = vld [vmem:[%s7 + $0x38] sm:$0xff]
      %v2713 = vld [vmem:[%s7 + $0x40] sm:$0xff]
      %v2714 = vld [vmem:[%s7 + $0x48] sm:$0xff]
      %v2715 = vld [vmem:[%s7 + $0x50] sm:$0xff]
      %v2716 = vld [vmem:[%s7 + $0x58] sm:$0xff]
      %v2717 = vld [vmem:[%s7 + $0x60] sm:$0xff]
      %v2718 = vld [vmem:[%s7 + $0x68] sm:$0xff]
      %v2719 = vld [vmem:[%s7 + $0x70] sm:$0xff]
      %v2720 = vld [vmem:[%s7 + $0x78] sm:$0xff]
      %v2721 = vld [vmem:[%s8] sm:$0xff]
      %v2722 = vld [vmem:[%s8 + $0x8] sm:$0xff]
      %2723 = vmatprep.subr.mxu0 0.0
      %2724 = vmatpush1.msra.mxu0 %v2705
      %2725 = vmatprep.subr.mxu0 0.0
      %2726 = vmatpush1.msra.mxu0 %v2706
      %2727 = vmatprep.subr.mxu0 0.0
      %2728 = vmatpush1.msra.mxu0 %v2707
      %2729 = vmatprep.subr.mxu0 0.0
      %2730 = vmatpush1.msra.mxu0 %v2708
      %2731 = vmatprep.subr.mxu0 0.0
      %2732 = vmatpush1.msra.mxu0 %v2709
      %2733 = vmatprep.subr.mxu0 0.0
      %2734 = vmatpush1.msra.mxu0 %v2710
      %2735 = vmatprep.subr.mxu0 0.0
      %2736 = vmatpush1.msra.mxu0 %v2711
      %2737 = vmatprep.subr.mxu0 0.0
      %2738 = vmatpush1.msra.mxu0 %v2712
      %2739 = vmatprep.subr.mxu0 0.0
      %2740 = vmatpush1.msra.mxu0 %v2713
      %2741 = vmatprep.subr.mxu0 0.0
      %2742 = vmatpush1.msra.mxu0 %v2714
      %2743 = vmatprep.subr.mxu0 0.0
      %2744 = vmatpush1.msra.mxu0 %v2715
      %2745 = vmatprep.subr.mxu0 0.0
      %2746 = vmatpush1.msra.mxu0 %v2716
      %2747 = vmatprep.subr.mxu0 0.0
      %2748 = vmatpush1.msra.mxu0 %v2717
      %2749 = vmatprep.subr.mxu0 0.0
      %2750 = vmatpush1.msra.mxu0 %v2718
      %2751 = vmatprep.subr.mxu0 0.0
      %2752 = vmatpush1.msra.mxu0 %v2719
      %2753 = vmatprep.subr.mxu0 0.0
      %2754 = vmatpush1.msra.mxu0 %v2720
      %2755 = vmatprep.subr.mxu0 0.0
      %2756 = vmatpush1.msra.mxu0 0.0
      %2757 = vmatprep.subr.mxu0 0.0
      %2758 = vmatpush1.msra.mxu0 0.0
      %2759 = vmatprep.subr.mxu0 0.0
      %2760 = vmatpush1.msra.mxu0 0.0
      %2761 = vmatprep.subr.mxu0 0.0
      %2762 = vmatpush1.msra.mxu0 0.0
      %2763 = vmatprep.subr.mxu0 0.0
      %2764 = vmatpush1.msra.mxu0 0.0
      %2765 = vmatprep.subr.mxu0 0.0
      %2766 = vmatpush1.msra.mxu0 0.0
      %2767 = vmatprep.subr.mxu0 0.0
      %2768 = vmatpush1.msra.mxu0 0.0
      %2769 = vmatprep.subr.mxu0 0.0
      %2770 = vmatpush1.msra.mxu0 0.0
      %2771 = vmatprep.subr.mxu0 0.0
      %2772 = vmatpush1.msra.mxu0 0.0
      %2773 = vmatprep.subr.mxu0 0.0
      %2774 = vmatpush1.msra.mxu0 0.0
      %2775 = vmatprep.subr.mxu0 0.0
      %2776 = vmatpush1.msra.mxu0 0.0
      %2777 = vmatprep.subr.mxu0 0.0
      %2778 = vmatpush1.msra.mxu0 0.0
      %2779 = vmatprep.subr.mxu0 0.0
      %2780 = vmatpush1.msra.mxu0 0.0
      %2781 = vmatprep.subr.mxu0 0.0
      %2782 = vmatpush1.msra.mxu0 0.0
      %2783 = vmatprep.subr.mxu0 0.0
      %2784 = vmatpush1.msra.mxu0 0.0
      %2785 = vmatprep.subr.mxu0 0.0
      %2786 = vmatpush1.msra.mxu0 0.0
      %2787 = vmatprep.mubr.f32.mxu0 0.0
      %2788 = vmatmul.mubr.f32.gmra.mrb[0].mxu0 %v2703
      %v2789 = vpop.f32.mrb[0].mxu0
      %v2790 = vadd.f32 %v2721, %v2789
      %v2791 = vpop.f32.mrb[0].mxu0
      %2792 = vmatprep.mubr.f32.mxu0 0.0
      %2793 = vmatmul.mubr.f32.gmra.mrb[0].mxu0 %v2704
      %v2794 = vpop.f32.mrb[0].mxu0
      %v2795 = vadd.f32 %v2722, %v2794
      %v2796 = vpop.f32.mrb[0].mxu0
      %2797 = vdwg.mxu0
      %v2798 = vxor.u32 %v2790, 2147483648
      %v2799 = vxor.u32 %v2795, 2147483648
      %v2800 = vmul.f32 %v2798, 1.442695
      %v2801 = vpow.pop %v2800
      %v2802 = vmul.f32 %v2799, 1.442695
      %v2803 = vpow.pop %v2802
      %v2804 = vadd.f32 %v2801, 1.0
      %v2805 = vadd.f32 %v2803, 1.0
      %v2806 = vrcp.pop %v2804
      %v2807 = vmul.f32 1.0, %v2806
      %v2808 = vrcp.pop %v2805
      %v2809 = vmul.f32 1.0, %v2808
      %v2810 = vmul.f32 %v2807, %v434
      %v2811 = vmul.f32 %v2809, %v435
      %v2812 = vld [vmem:[%s9] sm:$0xff]
      %v2813 = vld [vmem:[%s9 + $0x8] sm:$0xff]
      %v2814 = vld [vmem:[%s9 + $0x10] sm:$0xff]
      %v2815 = vld [vmem:[%s9 + $0x18] sm:$0xff]
      %v2816 = vld [vmem:[%s9 + $0x20] sm:$0xff]
      %v2817 = vld [vmem:[%s9 + $0x28] sm:$0xff]
      %v2818 = vld [vmem:[%s9 + $0x30] sm:$0xff]
      %v2819 = vld [vmem:[%s9 + $0x38] sm:$0xff]
      %v2820 = vld [vmem:[%s9 + $0x40] sm:$0xff]
      %v2821 = vld [vmem:[%s9 + $0x48] sm:$0xff]
      %v2822 = vld [vmem:[%s9 + $0x50] sm:$0xff]
      %v2823 = vld [vmem:[%s9 + $0x58] sm:$0xff]
      %v2824 = vld [vmem:[%s9 + $0x60] sm:$0xff]
      %v2825 = vld [vmem:[%s9 + $0x68] sm:$0xff]
      %v2826 = vld [vmem:[%s9 + $0x70] sm:$0xff]
      %v2827 = vld [vmem:[%s9 + $0x78] sm:$0xff]
      %v2828 = vld [vmem:[%s10] sm:$0xff]
      %v2829 = vld [vmem:[%s10 + $0x8] sm:$0xff]
      %v2830 = vld [vmem:[%s10 + $0x10] sm:$0xff]
      %v2831 = vld [vmem:[%s10 + $0x18] sm:$0xff]
      %v2832 = vld [vmem:[%s10 + $0x20] sm:$0xff]
      %v2833 = vld [vmem:[%s10 + $0x28] sm:$0xff]
      %v2834 = vld [vmem:[%s10 + $0x30] sm:$0xff]
      %v2835 = vld [vmem:[%s10 + $0x38] sm:$0xff]
      %v2836 = vld [vmem:[%s10 + $0x40] sm:$0xff]
      %v2837 = vld [vmem:[%s10 + $0x48] sm:$0xff]
      %v2838 = vld [vmem:[%s10 + $0x50] sm:$0xff]
      %v2839 = vld [vmem:[%s10 + $0x58] sm:$0xff]
      %v2840 = vld [vmem:[%s10 + $0x60] sm:$0xff]
      %v2841 = vld [vmem:[%s10 + $0x68] sm:$0xff]
      %v2842 = vld [vmem:[%s10 + $0x70] sm:$0xff]
      %v2843 = vld [vmem:[%s10 + $0x78] sm:$0xff]
      %2844 = vmatprep.subr.mxu0 0.0
      %2845 = vmatpush1.msra.mxu0 %v2828
      %2846 = vmatprep.subr.mxu0 0.0
      %2847 = vmatpush1.msra.mxu0 %v2829
      %2848 = vmatprep.subr.mxu0 0.0
      %2849 = vmatpush1.msra.mxu0 %v2830
      %2850 = vmatprep.subr.mxu0 0.0
      %2851 = vmatpush1.msra.mxu0 %v2831
      %2852 = vmatprep.subr.mxu0 0.0
      %2853 = vmatpush1.msra.mxu0 %v2832
      %2854 = vmatprep.subr.mxu0 0.0
      %2855 = vmatpush1.msra.mxu0 %v2833
      %2856 = vmatprep.subr.mxu0 0.0
      %2857 = vmatpush1.msra.mxu0 %v2834
      %2858 = vmatprep.subr.mxu0 0.0
      %2859 = vmatpush1.msra.mxu0 %v2835
      %2860 = vmatprep.subr.mxu0 0.0
      %2861 = vmatpush1.msra.mxu0 %v2836
      %2862 = vmatprep.subr.mxu0 0.0
      %2863 = vmatpush1.msra.mxu0 %v2837
      %2864 = vmatprep.subr.mxu0 0.0
      %2865 = vmatpush1.msra.mxu0 %v2838
      %2866 = vmatprep.subr.mxu0 0.0
      %2867 = vmatpush1.msra.mxu0 %v2839
      %2868 = vmatprep.subr.mxu0 0.0
      %2869 = vmatpush1.msra.mxu0 %v2840
      %2870 = vmatprep.subr.mxu0 0.0
      %2871 = vmatpush1.msra.mxu0 %v2841
      %2872 = vmatprep.subr.mxu0 0.0
      %2873 = vmatpush1.msra.mxu0 %v2842
      %2874 = vmatprep.subr.mxu0 0.0
      %2875 = vmatpush1.msra.mxu0 %v2843
      %2876 = vmatprep.subr.mxu0 0.0
      %2877 = vmatpush1.msra.mxu0 0.0
      %2878 = vmatprep.subr.mxu0 0.0
      %2879 = vmatpush1.msra.mxu0 0.0
      %2880 = vmatprep.subr.mxu0 0.0
      %2881 = vmatpush1.msra.mxu0 0.0
      %2882 = vmatprep.subr.mxu0 0.0
      %2883 = vmatpush1.msra.mxu0 0.0
      %2884 = vmatprep.subr.mxu0 0.0
      %2885 = vmatpush1.msra.mxu0 0.0
      %2886 = vmatprep.subr.mxu0 0.0
      %2887 = vmatpush1.msra.mxu0 0.0
      %2888 = vmatprep.subr.mxu0 0.0
      %2889 = vmatpush1.msra.mxu0 0.0
      %2890 = vmatprep.subr.mxu0 0.0
      %2891 = vmatpush1.msra.mxu0 0.0
      %2892 = vmatprep.subr.mxu0 0.0
      %2893 = vmatpush1.msra.mxu0 0.0
      %2894 = vmatprep.subr.mxu0 0.0
      %2895 = vmatpush1.msra.mxu0 0.0
      %2896 = vmatprep.subr.mxu0 0.0
      %2897 = vmatpush1.msra.mxu0 0.0
      %2898 = vmatprep.subr.mxu0 0.0
      %2899 = vmatpush1.msra.mxu0 0.0
      %2900 = vmatprep.subr.mxu0 0.0
      %2901 = vmatpush1.msra.mxu0 0.0
      %2902 = vmatprep.subr.mxu0 0.0
      %2903 = vmatpush1.msra.mxu0 0.0
      %2904 = vmatprep.subr.mxu0 0.0
      %2905 = vmatpush1.msra.mxu0 0.0
      %2906 = vmatprep.subr.mxu0 0.0
      %2907 = vmatpush1.msra.mxu0 0.0
      %2908 = vmatprep.mubr.f32.mxu0 0.0
      %2909 = vmatmul.mubr.f32.gmra.mrb[0].mxu0 %v2810
      %v2910 = vpop.f32.mrb[0].mxu0
      %v2911 = vadd.f32 0.0, %v2910
      %v2912 = vpop.f32.mrb[0].mxu0
      %2913 = vmatprep.mubr.f32.mxu0 0.0
      %2914 = vmatmul.mubr.f32.gmra.mrb[0].mxu0 %v2811
      %v2915 = vpop.f32.mrb[0].mxu0
      %v2916 = vadd.f32 0.0, %v2915
      %v2917 = vpop.f32.mrb[0].mxu0
      %2918 = vdwg.mxu0
      %2919 = vmatprep.subr.mxu0 0.0
      %2920 = vmatpush1.msra.mxu0 %v2812
      %2921 = vmatprep.subr.mxu0 0.0
      %2922 = vmatpush1.msra.mxu0 %v2813
      %2923 = vmatprep.subr.mxu0 0.0
      %2924 = vmatpush1.msra.mxu0 %v2814
      %2925 = vmatprep.subr.mxu0 0.0
      %2926 = vmatpush1.msra.mxu0 %v2815
      %2927 = vmatprep.subr.mxu0 0.0
      %2928 = vmatpush1.msra.mxu0 %v2816
      %2929 = vmatprep.subr.mxu0 0.0
      %2930 = vmatpush1.msra.mxu0 %v2817
      %2931 = vmatprep.subr.mxu0 0.0
      %2932 = vmatpush1.msra.mxu0 %v2818
      %2933 = vmatprep.subr.mxu0 0.0
      %2934 = vmatpush1.msra.mxu0 %v2819
      %2935 = vmatprep.subr.mxu0 0.0
      %2936 = vmatpush1.msra.mxu0 %v2820
      %2937 = vmatprep.subr.mxu0 0.0
      %2938 = vmatpush1.msra.mxu0 %v2821
      %2939 = vmatprep.subr.mxu0 0.0
      %2940 = vmatpush1.msra.mxu0 %v2822
      %2941 = vmatprep.subr.mxu0 0.0
      %2942 = vmatpush1.msra.mxu0 %v2823
      %2943 = vmatprep.subr.mxu0 0.0
      %2944 = vmatpush1.msra.mxu0 %v2824
      %2945 = vmatprep.subr.mxu0 0.0
      %2946 = vmatpush1.msra.mxu0 %v2825
      %2947 = vmatprep.subr.mxu0 0.0
      %2948 = vmatpush1.msra.mxu0 %v2826
      %2949 = vmatprep.subr.mxu0 0.0
      %2950 = vmatpush1.msra.mxu0 %v2827
      %2951 = vmatprep.subr.mxu0 0.0
      %2952 = vmatpush1.msra.mxu0 0.0
      %2953 = vmatprep.subr.mxu0 0.0
      %2954 = vmatpush1.msra.mxu0 0.0
      %2955 = vmatprep.subr.mxu0 0.0
      %2956 = vmatpush1.msra.mxu0 0.0
      %2957 = vmatprep.subr.mxu0 0.0
      %2958 = vmatpush1.msra.mxu0 0.0
      %2959 = vmatprep.subr.mxu0 0.0
      %2960 = vmatpush1.msra.mxu0 0.0
      %2961 = vmatprep.subr.mxu0 0.0
      %2962 = vmatpush1.msra.mxu0 0.0
      %2963 = vmatprep.subr.mxu0 0.0
      %2964 = vmatpush1.msra.mxu0 0.0
      %2965 = vmatprep.subr.mxu0 0.0
      %2966 = vmatpush1.msra.mxu0 0.0
      %2967 = vmatprep.subr.mxu0 0.0
      %2968 = vmatpush1.msra.mxu0 0.0
      %2969 = vmatprep.subr.mxu0 0.0
      %2970 = vmatpush1.msra.mxu0 0.0
      %2971 = vmatprep.subr.mxu0 0.0
      %2972 = vmatpush1.msra.mxu0 0.0
      %2973 = vmatprep.subr.mxu0 0.0
      %2974 = vmatpush1.msra.mxu0 0.0
      %2975 = vmatprep.subr.mxu0 0.0
      %2976 = vmatpush1.msra.mxu0 0.0
      %2977 = vmatprep.subr.mxu0 0.0
      %2978 = vmatpush1.msra.mxu0 0.0
      %2979 = vmatprep.subr.mxu0 0.0
      %2980 = vmatpush1.msra.mxu0 0.0
      %2981 = vmatprep.subr.mxu0 0.0
      %2982 = vmatpush1.msra.mxu0 0.0
      %2983 = vmatprep.mubr.f32.mxu0 0.0
      %2984 = vmatmul.mubr.f32.gmra.mrb[0].mxu0 %v975
      %v2985 = vpop.f32.mrb[0].mxu0
      %v2986 = vadd.f32 %v2911, %v2985
      %v2987 = vpop.f32.mrb[0].mxu0
      %2988 = vmatprep.mubr.f32.mxu0 0.0
      %2989 = vmatmul.mubr.f32.gmra.mrb[0].mxu0 %v976
      %v2990 = vpop.f32.mrb[0].mxu0
      %v2991 = vadd.f32 %v2916, %v2990
      %v2992 = vpop.f32.mrb[0].mxu0
      %2993 = vdwg.mxu0
      %v2994 = vld [vmem:[%s11] sm:$0xff]
      %v2995 = vld [vmem:[%s11 + $0x8] sm:$0xff]
      %v2996 = vadd.f32 %v2986, %v2994
      %v2997 = vadd.f32 %v2991, %v2995
      %2998 = vst [vmem:[%s433] sm:$0xff] %v2996
      %2999 = vst [vmem:[%s433 + $0x8] sm:$0xff] %v2997
      %p3000 = scmp.lt.s32.totalorder %s23, 1
      %s3001 = scalar_select %p3000, %s23, 1
      %s3002 = smul.addr %s3001, 2
      %s3003 = smul.addr %s3002, 8
      %s3004 = scalar_lea.vmem %s12, %s3003
      // Predicated region
      $region69: #{edge_enhancement_forward.3} parent=67 // pred_check
        %p3005 = pneg %p303
      $region70: #{edge_enhancement_forward.3} parent=67 // pred_check_branch
        %3007 = sbr.rel (%p3005) target = $region72
      $region71: #{edge_enhancement_forward.3} parent=67 // pred_region
        _
      $region72: #{edge_enhancement_forward.3} parent=67 // pred_fallthru
        _
    $region68: #{edge_enhancement_forward.3} parent=5 // pred_fallthru
      _
    %p3008 = scmp.le.s32.totalorder 2, %s18
    // Predicated region
    $region73: #{edge_enhancement_forward.3} parent=5 // pred_check
      %p3009 = pneg %p3008
    $region74: #{edge_enhancement_forward.3} parent=5 // pred_check_branch
      %3011 = sbr.rel (%p3009) target = $region76
    $region75: #{edge_enhancement_forward.3} parent=5 // pred_region
      %s3012 = ssub.s32 %s18, 2
      // Predicated region
      $region77: #{edge_enhancement_forward.3} parent=75 // pred_check
        %p3013 = pneg %p309
      $region78: #{edge_enhancement_forward.3} parent=75 // pred_check_branch
        %3015 = sbr.rel (%p3013) target = $region80
      $region79: #{edge_enhancement_forward.3} parent=75 // pred_region
        %p3016 = scmp.lt.s32.totalorder %s24, 1
        %s3017 = scalar_select %p3016, %s24, 1
        %s3018 = smul.addr %s3017, 2
        %s3019 = smul.addr %s3018, 8
        %s3020 = scalar_lea.vmem %s12, %s3019
      $region80: #{edge_enhancement_forward.3} parent=75 // pred_fallthru
        _
    $region76: #{edge_enhancement_forward.3} parent=5 // pred_fallthru
      _
  $region6: #{edge_enhancement_forward.3} parent=0 // loop_footer
    %s22 = sadd.s32 1, %s18
  $region7: #{edge_enhancement_forward.3} parent=0 // loop_footer_branch
    %17 = sbr.rel target = $region3
  $region8: #{edge_enhancement_forward.3} parent=0 // loop_exit
    _

</llo_original>
